<compile_context>
chip_gen: v7x
topology: tpu7x:2x2x1
jax: 0.10.0
libtpu: 0.0.40
codegen_flags: <defaults>
</compile_context>

<pallas_src>
import math
import functools

import numpy as np
import jax
import jax.numpy as jnp
from jax.experimental import pallas as pl
from jax.experimental.pallas import tpu as pltpu


def _layernorm(v, g, b, eps=1e-5):
    mu = jnp.mean(v, axis=-1, keepdims=True)
    var = jnp.mean((v - mu) ** 2, axis=-1, keepdims=True)
    return (v - mu) * jax.lax.rsqrt(var + eps) * g + b


# ----------------------------------------------------------------------------------
# Fused Pallas kernel: full decoder stack + final LayerNorm
# ----------------------------------------------------------------------------------
def stacked_decoder_kernel(
    embed_ref, mem_ref, mask_ref,
    sa_wqkv_ref, sa_wo_ref, ca_wq_ref, ca_wkv_ref, ca_wo_ref, w1_ref, w2_ref,
    slab_ref, b1_ref, fin_ref,
    out_ref, x_acc, *, nheads, block_b,
):
    bf16 = jnp.bfloat16
    M, C = x_acc.shape                 # M = block_b * K rows in the matmul M dim
    K = M // block_b
    dh = C // nheads
    Lp = mem_ref.shape[1]
    d = pl.program_id(1)

    # Initialize the resident residual stream from the keypoint embedding at layer 0.
    @pl.when(d == 0)
    def _init():
        e = embed_ref[...]                                   # (K, C) f32
        x_acc[...] = jnp.concatenate([e] * block_b, axis=0)  # (M, C)

    x = x_acc[...]                     # (M, C) f32 residual stream (VMEM-resident)
    slab = slab_ref[d]                 # (15, C) packed biases + LN params for layer d
    mask_full = mask_ref[...]          # (block_b, 1, Lp) f32 additive mask (0 / -1e30)

    def mm(a_bf, w_bf):                # bf16 MXU matmul, f32 accumulation
        return jnp.dot(a_bf, w_bf, preferred_element_type=jnp.float32)

    def softmax_rows(s):               # f32 numerically-stable softmax, EUP reciprocal
        m = jnp.max(s, axis=-1, keepdims=True)
        p = jnp.exp(s - m)
        return p * pl.reciprocal(jnp.sum(p, axis=-1, keepdims=True), approx=True)

    def mha(q_bf, k_bf, v_bf, wo_bf, bo_row, masked):
        # q_bf: (M, C) bf16; k_bf/v_bf: (block_b*nk, C) bf16.  Per-b / per-head
        # score + softmax + AV (static loops; heads/blocks are small), then ONE
        # full-C output projection for all rows.
        # TODO(synk): for nheads>=8 and long memories switch the head loop to
        # lax.fori_loop(unroll=...) and tile over Lp flash-style.
        nk = k_bf.shape[0] // block_b
        ctx_rows = []
        for b in range(block_b):
            qb = q_bf[b * K:(b + 1) * K, :]
            kb = k_bf[b * nk:(b + 1) * nk, :]
            vb = v_bf[b * nk:(b + 1) * nk, :]
            mb = mask_full[b] if masked else None            # (1, nk)
            heads = []
            for h in range(nheads):
                sl = slice(h * dh, (h + 1) * dh)
                s = jax.lax.dot_general(qb[:, sl], kb[:, sl],
                                        (((1,), (1,)), ((), ())),
                                        preferred_element_type=jnp.float32)
                if mb is not None:
                    s = s + mb                               # keep -1e30 finite (f32)
                a = softmax_rows(s).astype(bf16)
                heads.append(mm(a, vb[:, sl]))               # (K, dh) f32
            ctx_rows.append(jnp.concatenate(heads, axis=-1))  # (K, C)
        ctx = jnp.concatenate(ctx_rows, axis=0).astype(bf16)  # (M, C)
        return mm(ctx, wo_bf) + bo_row                        # single (M,C)@(C,C)

    # ---- self-attention block (post-norm; dropout = identity) ----
    qkv = mm(x.astype(bf16), sa_wqkv_ref[d])                  # (M, 3C) f32
    q_s = (qkv[:, :C] + slab[0:1]).astype(bf16)               # 1/sqrt(dh) pre-folded
    k_s = (qkv[:, C:2 * C] + slab[1:2]).astype(bf16)
    v_s = (qkv[:, 2 * C:] + slab[2:3]).astype(bf16)
    sa = mha(q_s, k_s, v_s, sa_wo_ref[d], slab[3:4], masked=False)
    x = _layernorm(x + sa, slab[9:10], slab[10:11])

    # ---- cross-attention with memory_key_padding_mask ----
    qc = (mm(x.astype(bf16), ca_wq_ref[d]) + slab[4:5]).astype(bf16)     # (M, C)
    mem2d = mem_ref[...].reshape(block_b * Lp, C)                        # bf16
    kv = mm(mem2d, ca_wkv_ref[d])                                        # (b*Lp, 2C) f32
    k_c = (kv[:, :C] + slab[5:6]).astype(bf16)                           # cast once
    v_c = (kv[:, C:] + slab[6:7]).astype(bf16)
    ca = mha(qc, k_c, v_c, ca_wo_ref[d], slab[7:8], masked=True)
    x = _layernorm(x + ca, slab[11:12], slab[12:13])

    # ---- feed-forward (ReLU) ----
    h1 = jnp.maximum(mm(x.astype(bf16), w1_ref[d]) + b1_ref[d], 0.0)     # (M, F)
    ff = mm(h1.astype(bf16), w2_ref[d]) + slab[8:9]
    x = _layernorm(x + ff, slab[13:14], slab[14:15])

    x_acc[...] = x

    # ---- final LayerNorm + single HBM writeback per batch group ----
    @pl.when(d == pl.num_programs(1) - 1)
    def _final():
        fin = fin_ref[...]
        out_ref[...] = _layernorm(x, fin[0:1], fin[1:2]).reshape(block_b, K, C)


# ----------------------------------------------------------------------------------
# pallas_call wrapper
# ----------------------------------------------------------------------------------
@functools.partial(jax.jit, static_argnames=("nheads", "block_b"))
def stacked_decoder_pallas(memory_bf16, mask_add, kparams, *, nheads, block_b):
    B, Lp, C = memory_bf16.shape
    K = kparams["embed"].shape[0]
    D = kparams["sa_wqkv"].shape[0]
    assert C % nheads == 0 and B % block_b == 0
    n_groups = B // block_b

    weight_names = ("sa_wqkv", "sa_wo", "ca_wq", "ca_wkv", "ca_wo", "w1", "w2")
    weights = [kparams[n] for n in weight_names]              # each (D, ., .) bf16

    in_specs = [
        pl.BlockSpec((K, C), lambda g, d: (0, 0)),            # keypoint embedding
        pl.BlockSpec((block_b, Lp, C), lambda g, d: (g, 0, 0)),   # memory (bf16)
        pl.BlockSpec((block_b, 1, Lp), lambda g, d: (g, 0, 0)),   # additive mask
    ]
    # Full-depth-resident weight stacks: constant block index -> fetched once for
    # the whole grid (no per-batch-group refetch of all D layers' weights).
    for w in weights:
        in_specs.append(pl.BlockSpec(w.shape, lambda g, d: (0, 0, 0)))
    in_specs.append(pl.BlockSpec(kparams["bias_ln"].shape, lambda g, d: (0, 0, 0)))
    in_specs.append(pl.BlockSpec(kparams["b1"].shape, lambda g, d: (0, 0, 0)))
    in_specs.append(pl.BlockSpec((2, C), lambda g, d: (0, 0)))   # final LN [g; b]

    return pl.pallas_call(
        functools.partial(stacked_decoder_kernel, nheads=nheads, block_b=block_b),
        grid=(n_groups, D),                                   # batch groups outer
        in_specs=in_specs,
        out_specs=pl.BlockSpec((block_b, K, C), lambda g, d: (g, 0, 0)),
        out_shape=jax.ShapeDtypeStruct((B, K, C), jnp.float32),
        scratch_shapes=[pltpu.VMEM((block_b * K, C), jnp.float32)],
        compiler_params=pltpu.CompilerParams(
            dimension_semantics=("parallel", "arbitrary"),
            vmem_limit_bytes=64 * 1024 * 1024),
    )(kparams["embed"], memory_bf16, mask_add, *weights,
      kparams["bias_ln"], kparams["b1"], kparams["final_gb"])


def _pick_block_b(B, K):
    # Aim for >= 128-256 matmul rows per grid step (MXU row occupancy).
    # TODO(synk): on v7x also keep B // block_b >= 2 so both TensorCores are busy.
    target = max(1, 256 // max(K, 1))
    bb = 1
    for cand in range(1, B + 1):
        if B % cand == 0 and cand <= target:
            bb = cand
    return bb


# ----------------------------------------------------------------------------------
# Parameter prep: fuse / pack / pre-scale master (f32) params for the kernel
# ----------------------------------------------------------------------------------
def prepare_kernel_params(params, nheads):
    bf16 = jnp.bfloat16
    C = params["embed"].shape[-1]
    dh = C // nheads
    scale = 1.0 / math.sqrt(dh)

    sa_wqkv = params["sa_wqkv"].at[:, :, :C].multiply(scale)   # fold softmax scale
    ca_wq = params["ca_wq"] * scale
    sa_bqkv = params["sa_bqkv"]

    rows = [
        sa_bqkv[:, :C] * scale,            # 0  self-attn q bias (scaled)
        sa_bqkv[:, C:2 * C],               # 1  self-attn k bias
        sa_bqkv[:, 2 * C:],                # 2  self-attn v bias
        params["sa_bo"],                   # 3  self-attn out bias
        params["ca_bq"] * scale,           # 4  cross-attn q bias (scaled)
        params["ca_bkv"][:, :C],           # 5  cross-attn k bias
        params["ca_bkv"][:, C:],           # 6  cross-attn v bias
        params["ca_bo"],                   # 7  cross-attn out bias
        params["b2"],                      # 8  FFN second bias
        params["ln1_g"], params["ln1_b"],  # 9,10
        params["ln2_g"], params["ln2_b"],  # 11,12
        params["ln3_g"], params["ln3_b"],  # 13,14
    ]
    bias_ln = jnp.stack(rows, axis=1).astype(jnp.float32)      # (D, 15, C)

    return {
        "embed": params["embed"].astype(jnp.float32),
        "sa_wqkv": sa_wqkv.astype(bf16),
        "sa_wo": params["sa_wo"].astype(bf16),
        "ca_wq": ca_wq.astype(bf16),
        "ca_wkv": params["ca_wkv"].astype(bf16),
        "ca_wo": params["ca_wo"].astype(bf16),
        "w1": params["w1"].astype(bf16),
        "w2": params["w2"].astype(bf16),
        "bias_ln": bias_ln,
        "b1": params["b1"][:, None, :].astype(jnp.float32),    # (D, 1, F)
        "final_gb": jnp.stack([params["final_g"], params["final_b"]]),  # (2, C)
    }


# ----------------------------------------------------------------------------------
# Host-side serialization glue (data-dependent gather / pad_sequence / mask)
# ----------------------------------------------------------------------------------
def neck_forward(point, params, n_layers, num_heads, block_b=None):
    # TODO(synk): the ragged gather + pad_sequence has no static-shape Pallas form;
    # kept as host glue (indices could be precomputed/cached in a real pipeline).
    cu_all = np.stack(
        [np.asarray(point[f"query_mem_{i}_cu_seqlens"]) for i in range(n_layers)])
    mem_all = np.concatenate(
        [np.asarray(point[f"query_mem_{i}"]) for i in range(n_layers)], axis=0)
    C = mem_all.shape[-1]
    cu_mem_len = np.concatenate([[0], cu_all[:, -1]]).cumsum()
    B = cu_all.shape[1] - 1
    idx = []
    for b in range(B):
        for n in range(n_layers):
            idx.append(np.arange(cu_all[n, b], cu_all[n, b + 1]) + cu_mem_len[n])
    idx = np.concatenate(idx).astype(np.int64)
    mem_all = mem_all[idx]
    cu_sum = cu_all.sum(0)
    mem_len = cu_sum[1:] - cu_sum[:-1]
    l_max = int(mem_len.max())
    l_pad = ((l_max + 127) // 128) * 128          # lane-multiple padding; masked out
    memory = np.zeros((B, l_pad, C), np.float32)
    pad = np.ones((B, l_pad), np.float32)
    off = 0
    for b in range(B):
        l = int(mem_len[b])
        memory[b, :l] = mem_all[off:off + l]
        pad[b, :l] = 0.0
        off += l
    memory_bf = jnp.asarray(memory, dtype=jnp.bfloat16)      # bf16 HBM storage
    mask_add = jnp.asarray((pad * -1e30).reshape(B, 1, l_pad), dtype=jnp.float32)

    kparams = prepare_kernel_params(params, num_heads)
    if block_b is None:
        block_b = _pick_block_b(B, kparams["embed"].shape[0])
    out = stacked_decoder_pallas(memory_bf, mask_add, kparams,
                                 nheads=num_heads, block_b=block_b)
    return out, memory_bf, mask_add


# ----------------------------------------------------------------------------------
# Deterministic master-parameter init (PyTorch-like layout, f32)
# ----------------------------------------------------------------------------------
def init_params(key, depth, C, F, num_keypoints):
    def nrm(k, shape, s=0.05):
        return (s * jax.random.normal(k, shape)).astype(jnp.float32)

    names_shapes = [
        ("sa_wqkv", (depth, C, 3 * C)), ("sa_bqkv", (depth, 3 * C)),
        ("sa_wo", (depth, C, C)), ("sa_bo", (depth, C)),
        ("ca_wq", (depth, C, C)), ("ca_bq", (depth, C)),
        ("ca_wkv", (depth, C, 2 * C)), ("ca_bkv", (depth, 2 * C)),
        ("ca_wo", (depth, C, C)), ("ca_bo", (depth, C)),
        ("w1", (depth, C, F)), ("b1", (depth, F)),
        ("w2", (depth, F, C)), ("b2", (depth, C)),
    ]
    keys = jax.random.split(key, len(names_shapes) + 1)
    params = {n: nrm(k, s) for (n, s), k in zip(names_shapes, keys[:-1])}
    ones = jnp.ones((depth, C), jnp.float32)
    zeros = jnp.zeros((depth, C), jnp.float32)
    params.update(ln1_g=ones, ln1_b=zeros, ln2_g=ones, ln2_b=zeros,
                  ln3_g=ones, ln3_b=zeros)
    params["final_g"] = jnp.ones((C,), jnp.float32)
    params["final_b"] = jnp.zeros((C,), jnp.float32)
    # torch inits keypoint_embedding to zeros; use random so the test is nontrivial.
    params["embed"] = nrm(keys[-1], (num_keypoints, C), s=0.1)
    return params


# ----------------------------------------------------------------------------------
# Pure-JAX reference (textbook formulation, same bf16-input/f32-accumulate recipe)
# ----------------------------------------------------------------------------------
def ref_forward(memory, mask_add, params, nheads):
    bf16 = jnp.bfloat16
    memory = memory.astype(jnp.float32)
    B, L, C = memory.shape
    K = params["embed"].shape[0]
    dh = C // nheads
    scale = 1.0 / math.sqrt(dh)

    def mm(a, w):
        return jnp.dot(a.astype(bf16), w.astype(bf16),
                       preferred_element_type=jnp.float32)

    def attn(q, k, v, wo, bo, am):
        Bq = q.shape[0]
        qh = q.reshape(Bq, -1, nheads, dh).transpose(0, 2, 1, 3).astype(bf16)
        kh = k.reshape(Bq, -1, nheads, dh).transpose(0, 2, 1, 3).astype(bf16)
        vh = v.reshape(Bq, -1, nheads, dh).transpose(0, 2, 1, 3).astype(bf16)
        s = jnp.einsum("bhqd,bhkd->bhqk", qh, kh,
                       preferred_element_type=jnp.float32) * scale
        if am is not None:
            s = s + am[:, None, :, :]
        a = jax.nn.softmax(s, axis=-1).astype(bf16)
        o = jnp.einsum("bhqk,bhkd->bhqd", a, vh,
                       preferred_element_type=jnp.float32)
        o = o.transpose(0, 2, 1, 3).reshape(Bq, -1, C)
        return jnp.einsum("bkc,cd->bkd", o.astype(bf16), wo.astype(bf16),
                          preferred_element_type=jnp.float32) + bo

    x = jnp.broadcast_to(params["embed"][None], (B, K, C)).astype(jnp.float32)
    depth = params["sa_wqkv"].shape[0]
    for d in range(depth):
        qkv = mm(x, params["sa_wqkv"][d]) + params["sa_bqkv"][d]
        sa = attn(qkv[..., :C], qkv[..., C:2 * C], qkv[..., 2 * C:],
                  params["sa_wo"][d], params["sa_bo"][d], None)
        x = _layernorm(x + sa, params["ln1_g"][d], params["ln1_b"][d])
        q = mm(x, params["ca_wq"][d]) + params["ca_bq"][d]
        kv = mm(memory, params["ca_wkv"][d]) + params["ca_bkv"][d]
        ca = attn(q, kv[..., :C], kv[..., C:], params["ca_wo"][d],
                  params["ca_bo"][d], mask_add)
        x = _layernorm(x + ca, params["ln2_g"][d], params["ln2_b"][d])
        h1 = jnp.maximum(mm(x, params["w1"][d]) + params["b1"][d], 0.0)
        x = _layernorm(x + mm(h1, params["w2"][d]) + params["b2"][d],
                       params["ln3_g"][d], params["ln3_b"][d])
    return _layernorm(x, params["final_g"], params["final_b"])


# ----------------------------------------------------------------------------------
if __name__ == "__main__":
    # small, module-consistent shapes
    n_layers, num_keypoints, channels = 2, 8, 32
    mlp_ratio, num_heads, depth = 4, 4, 2
    per_layer_lens = [[3, 5, 4, 2], [2, 4, 1, 6]]   # per feature-layer token counts
    B = len(per_layer_lens[0])

    key = jax.random.PRNGKey(0)
    params = init_params(jax.random.fold_in(key, 1), depth, channels,
                         mlp_ratio * channels, num_keypoints)

    point = {}
    for i, lens in enumerate(per_layer_lens):
        cu = np.concatenate([[0], np.cumsum(lens)]).astype(np.int32)
        key, sk = jax.random.split(key)
        point[f"query_mem_{i}"] = jax.random.normal(
            sk, (int(cu[-1]), channels), jnp.float32)
        point[f"query_mem_{i}_cu_seqlens"] = cu

    # block_b=2 -> grid (2, depth): exercises multi-group indexing and keeps the
    # "parallel" batch-group axis >= 2 (v7x dual-TensorCore occupancy).
    out, memory_bf, mask_add = neck_forward(point, params, n_layers, num_heads,
                                            block_b=2)
    out = jax.block_until_ready(out)
    assert out.shape == (B, num_keypoints, channels)

    # sanity check against the pure-JAX reference (tolerance covers the approximate
    # reciprocal softmax, the pre-folded softmax scale, and summation order)
    ref = ref_forward(memory_bf, mask_add, params, num_heads)
    np.testing.assert_allclose(np.asarray(out), np.asarray(ref),
                               rtol=2e-2, atol=2e-2)

    print("KERNEL_OK")
</pallas_src>

<mosaic_0001>
module attributes {stable_mosaic.version = 11 : i64} {
  func.func @stacked_decoder_kernel(%arg0: i32, %arg1: i32, %arg2: memref<8x32xf32, #tpu.memory_space<vmem>>, %arg3: memref<2x128x32xbf16, #tpu.memory_space<vmem>>, %arg4: memref<2x1x128xf32, #tpu.memory_space<vmem>>, %arg5: memref<2x32x96xbf16, #tpu.memory_space<vmem>>, %arg6: memref<2x32x32xbf16, #tpu.memory_space<vmem>>, %arg7: memref<2x32x32xbf16, #tpu.memory_space<vmem>>, %arg8: memref<2x32x64xbf16, #tpu.memory_space<vmem>>, %arg9: memref<2x32x32xbf16, #tpu.memory_space<vmem>>, %arg10: memref<2x32x128xbf16, #tpu.memory_space<vmem>>, %arg11: memref<2x128x32xbf16, #tpu.memory_space<vmem>>, %arg12: memref<2x15x32xf32, #tpu.memory_space<vmem>>, %arg13: memref<2x1x128xf32, #tpu.memory_space<vmem>>, %arg14: memref<2x32xf32, #tpu.memory_space<vmem>>, %arg15: memref<2x8x32xf32, #tpu.memory_space<vmem>>, %arg16: memref<16x32xf32, #tpu.memory_space<vmem>>) attributes {dimension_semantics = [#tpu.dimension_semantics<parallel>, #tpu.dimension_semantics<arbitrary>], iteration_bounds = array<i64: 2, 2>, scalar_prefetch = 0 : i64, scratch_operands = 1 : i64, tpu.core_type = #tpu.core_type<tc>, window_params = [{pipeline_mode = #tpu.pipeline_mode<synchronous>, transform_indices = @transform_0, window_bounds = array<i64: 8, 32>}, {transform_indices = @transform_1, window_bounds = array<i64: 2, 128, 32>}, {transform_indices = @transform_2, window_bounds = array<i64: 2, 1, 128>}, {pipeline_mode = #tpu.pipeline_mode<synchronous>, transform_indices = @transform_3, window_bounds = array<i64: 2, 32, 96>}, {pipeline_mode = #tpu.pipeline_mode<synchronous>, transform_indices = @transform_4, window_bounds = array<i64: 2, 32, 32>}, {pipeline_mode = #tpu.pipeline_mode<synchronous>, transform_indices = @transform_5, window_bounds = array<i64: 2, 32, 32>}, {pipeline_mode = #tpu.pipeline_mode<synchronous>, transform_indices = @transform_6, window_bounds = array<i64: 2, 32, 64>}, {pipeline_mode = #tpu.pipeline_mode<synchronous>, transform_indices = @transform_7, window_bounds = array<i64: 2, 32, 32>}, {pipeline_mode = #tpu.pipeline_mode<synchronous>, transform_indices = @transform_8, window_bounds = array<i64: 2, 32, 128>}, {pipeline_mode = #tpu.pipeline_mode<synchronous>, transform_indices = @transform_9, window_bounds = array<i64: 2, 128, 32>}, {pipeline_mode = #tpu.pipeline_mode<synchronous>, transform_indices = @transform_10, window_bounds = array<i64: 2, 15, 32>}, {pipeline_mode = #tpu.pipeline_mode<synchronous>, transform_indices = @transform_11, window_bounds = array<i64: 2, 1, 128>}, {pipeline_mode = #tpu.pipeline_mode<synchronous>, transform_indices = @transform_12, window_bounds = array<i64: 2, 32>}, {transform_indices = @transform_13, window_bounds = array<i64: 2, 8, 32>}]} {
    %c0_i32 = arith.constant 0 : i32
    %0 = arith.cmpi eq, %arg1, %c0_i32 : i32
    %1 = arith.extui %0 : i1 to i32
    %c0_i32_0 = arith.constant 0 : i32
    %2 = arith.cmpi ne, %1, %c0_i32_0 : i32
    scf.if %2 {
      %c0_115 = arith.constant 0 : index
      %c0_116 = arith.constant 0 : index
      %462 = vector.load %arg2[%c0_115, %c0_116] : memref<8x32xf32, #tpu.memory_space<vmem>>, vector<8x32xf32>
      %463 = tpu.concatenate %462, %462 in 0 : vector<8x32xf32>, vector<8x32xf32> -> vector<16x32xf32>
      %c0_117 = arith.constant 0 : index
      %c0_118 = arith.constant 0 : index
      %464 = vector.load %arg16[%c0_117, %c0_118] : memref<16x32xf32, #tpu.memory_space<vmem>>, vector<16x32xf32>
      tpu.vector_store %arg16[%c0_117, %c0_118], %463 {strides = array<i32>} : memref<16x32xf32, #tpu.memory_space<vmem>>, vector<16x32xf32>,
    } else {
    }
    %c0 = arith.constant 0 : index
    %c0_1 = arith.constant 0 : index
    %3 = vector.load %arg16[%c0, %c0_1] : memref<16x32xf32, #tpu.memory_space<vmem>>, vector<16x32xf32>
    %4 = arith.index_cast %arg1 : i32 to index
    %c0_2 = arith.constant 0 : index
    %c0_3 = arith.constant 0 : index
    %5 = vector.load %arg12[%4, %c0_2, %c0_3] : memref<2x15x32xf32, #tpu.memory_space<vmem>>, vector<1x15x32xf32>
    %6 = vector.shape_cast %5 : vector<1x15x32xf32> to vector<15x32xf32>
    %c0_4 = arith.constant 0 : index
    %c0_5 = arith.constant 0 : index
    %c0_6 = arith.constant 0 : index
    %7 = vector.load %arg4[%c0_4, %c0_5, %c0_6] : memref<2x1x128xf32, #tpu.memory_space<vmem>>, vector<2x1x128xf32>
    %8 = arith.truncf %3 : vector<16x32xf32> to vector<16x32xbf16>
    %9 = arith.index_cast %arg1 : i32 to index
    %c0_7 = arith.constant 0 : index
    %c0_8 = arith.constant 0 : index
    %10 = vector.load %arg5[%9, %c0_7, %c0_8] : memref<2x32x96xbf16, #tpu.memory_space<vmem>>, vector<1x32x96xbf16>
    %11 = vector.shape_cast %10 : vector<1x32x96xbf16> to vector<32x96xbf16>
    %cst = arith.constant dense<0.000000e+00> : vector<16x96xf32>
    %12 = tpu.matmul %8, %11, %cst {dimension_numbers = #tpu.dot_dimension_numbers<[1], [0], [0], [1], [0, 0, 1, 1], [], []>} : vector<16x32xbf16>, vector<32x96xbf16>, vector<16x96xf32> -> vector<16x96xf32>
    %13 = vector.extract_strided_slice %12 {offsets = [0, 0], sizes = [16, 32], strides = [1, 1]} : vector<16x96xf32> to vector<16x32xf32>
    %14 = vector.extract_strided_slice %6 {offsets = [0, 0], sizes = [1, 32], strides = [1, 1]} : vector<15x32xf32> to vector<1x32xf32>
    %15 = vector.broadcast %14 : vector<1x32xf32> to vector<16x32xf32>
    %16 = arith.addf %13, %15 : vector<16x32xf32>
    %17 = arith.truncf %16 : vector<16x32xf32> to vector<16x32xbf16>
    %18 = vector.extract_strided_slice %12 {offsets = [0, 32], sizes = [16, 32], strides = [1, 1]} : vector<16x96xf32> to vector<16x32xf32>
    %19 = vector.extract_strided_slice %6 {offsets = [1, 0], sizes = [1, 32], strides = [1, 1]} : vector<15x32xf32> to vector<1x32xf32>
    %20 = vector.broadcast %19 : vector<1x32xf32> to vector<16x32xf32>
    %21 = arith.addf %18, %20 : vector<16x32xf32>
    %22 = arith.truncf %21 : vector<16x32xf32> to vector<16x32xbf16>
    %23 = vector.extract_strided_slice %12 {offsets = [0, 64], sizes = [16, 32], strides = [1, 1]} : vector<16x96xf32> to vector<16x32xf32>
    %24 = vector.extract_strided_slice %6 {offsets = [2, 0], sizes = [1, 32], strides = [1, 1]} : vector<15x32xf32> to vector<1x32xf32>
    %25 = vector.broadcast %24 : vector<1x32xf32> to vector<16x32xf32>
    %26 = arith.addf %23, %25 : vector<16x32xf32>
    %27 = arith.truncf %26 : vector<16x32xf32> to vector<16x32xbf16>
    %28 = arith.index_cast %arg1 : i32 to index
    %c0_9 = arith.constant 0 : index
    %c0_10 = arith.constant 0 : index
    %29 = vector.load %arg6[%28, %c0_9, %c0_10] : memref<2x32x32xbf16, #tpu.memory_space<vmem>>, vector<1x32x32xbf16>
    %30 = vector.shape_cast %29 : vector<1x32x32xbf16> to vector<32x32xbf16>
    %31 = vector.extract_strided_slice %6 {offsets = [3, 0], sizes = [1, 32], strides = [1, 1]} : vector<15x32xf32> to vector<1x32xf32>
    %32 = vector.extract_strided_slice %17 {offsets = [0, 0], sizes = [8, 32], strides = [1, 1]} : vector<16x32xbf16> to vector<8x32xbf16>
    %33 = vector.extract_strided_slice %22 {offsets = [0, 0], sizes = [8, 32], strides = [1, 1]} : vector<16x32xbf16> to vector<8x32xbf16>
    %34 = vector.extract_strided_slice %27 {offsets = [0, 0], sizes = [8, 32], strides = [1, 1]} : vector<16x32xbf16> to vector<8x32xbf16>
    %35 = vector.extract_strided_slice %32 {offsets = [0, 0], sizes = [8, 8], strides = [1, 1]} : vector<8x32xbf16> to vector<8x8xbf16>
    %36 = vector.extract_strided_slice %33 {offsets = [0, 0], sizes = [8, 8], strides = [1, 1]} : vector<8x32xbf16> to vector<8x8xbf16>
    %cst_11 = arith.constant dense<0.000000e+00> : vector<8x8xf32>
    %37 = tpu.matmul %35, %36, %cst_11 {dimension_numbers = #tpu.dot_dimension_numbers<[1], [1], [0], [0], [0, 0, 1, 0], [], []>} : vector<8x8xbf16>, vector<8x8xbf16>, vector<8x8xf32> -> vector<8x8xf32>
    %cst_12 = arith.constant dense<0xFF800000> : vector<8xf32>
    %38 = vector.multi_reduction <maximumf>, %37, %cst_12 [1] : vector<8x8xf32> to vector<8xf32>
    %39 = vector.shape_cast %38 : vector<8xf32> to vector<8x1xf32>
    %40 = vector.broadcast %39 : vector<8x1xf32> to vector<8x8xf32>
    %41 = arith.subf %37, %40 : vector<8x8xf32>
    %42 = math.exp %41 : vector<8x8xf32>
    %cst_13 = arith.constant dense<0.000000e+00> : vector<8xf32>
    %43 = vector.multi_reduction <add>, %42, %cst_13 [1] : vector<8x8xf32> to vector<8xf32>
    %44 = vector.shape_cast %43 : vector<8xf32> to vector<8x1xf32>
    %45 = tpu.reciprocal %44 {approx = true} : vector<8x1xf32> -> vector<8x1xf32>
    %46 = vector.broadcast %45 : vector<8x1xf32> to vector<8x8xf32>
    %47 = arith.mulf %42, %46 : vector<8x8xf32>
    %48 = arith.truncf %47 : vector<8x8xf32> to vector<8x8xbf16>
    %49 = vector.extract_strided_slice %34 {offsets = [0, 0], sizes = [8, 8], strides = [1, 1]} : vector<8x32xbf16> to vector<8x8xbf16>
    %cst_14 = arith.constant dense<0.000000e+00> : vector<8x8xf32>
    %50 = tpu.matmul %48, %49, %cst_14 {dimension_numbers = #tpu.dot_dimension_numbers<[1], [0], [0], [1], [0, 0, 1, 1], [], []>} : vector<8x8xbf16>, vector<8x8xbf16>, vector<8x8xf32> -> vector<8x8xf32>
    %51 = vector.extract_strided_slice %32 {offsets = [0, 8], sizes = [8, 8], strides = [1, 1]} : vector<8x32xbf16> to vector<8x8xbf16>
    %52 = vector.extract_strided_slice %33 {offsets = [0, 8], sizes = [8, 8], strides = [1, 1]} : vector<8x32xbf16> to vector<8x8xbf16>
    %cst_15 = arith.constant dense<0.000000e+00> : vector<8x8xf32>
    %53 = tpu.matmul %51, %52, %cst_15 {dimension_numbers = #tpu.dot_dimension_numbers<[1], [1], [0], [0], [0, 0, 1, 0], [], []>} : vector<8x8xbf16>, vector<8x8xbf16>, vector<8x8xf32> -> vector<8x8xf32>
    %cst_16 = arith.constant dense<0xFF800000> : vector<8xf32>
    %54 = vector.multi_reduction <maximumf>, %53, %cst_16 [1] : vector<8x8xf32> to vector<8xf32>
    %55 = vector.shape_cast %54 : vector<8xf32> to vector<8x1xf32>
    %56 = vector.broadcast %55 : vector<8x1xf32> to vector<8x8xf32>
    %57 = arith.subf %53, %56 : vector<8x8xf32>
    %58 = math.exp %57 : vector<8x8xf32>
    %cst_17 = arith.constant dense<0.000000e+00> : vector<8xf32>
    %59 = vector.multi_reduction <add>, %58, %cst_17 [1] : vector<8x8xf32> to vector<8xf32>
    %60 = vector.shape_cast %59 : vector<8xf32> to vector<8x1xf32>
    %61 = tpu.reciprocal %60 {approx = true} : vector<8x1xf32> -> vector<8x1xf32>
    %62 = vector.broadcast %61 : vector<8x1xf32> to vector<8x8xf32>
    %63 = arith.mulf %58, %62 : vector<8x8xf32>
    %64 = arith.truncf %63 : vector<8x8xf32> to vector<8x8xbf16>
    %65 = vector.extract_strided_slice %34 {offsets = [0, 8], sizes = [8, 8], strides = [1, 1]} : vector<8x32xbf16> to vector<8x8xbf16>
    %cst_18 = arith.constant dense<0.000000e+00> : vector<8x8xf32>
    %66 = tpu.matmul %64, %65, %cst_18 {dimension_numbers = #tpu.dot_dimension_numbers<[1], [0], [0], [1], [0, 0, 1, 1], [], []>} : vector<8x8xbf16>, vector<8x8xbf16>, vector<8x8xf32> -> vector<8x8xf32>
    %67 = vector.extract_strided_slice %32 {offsets = [0, 16], sizes = [8, 8], strides = [1, 1]} : vector<8x32xbf16> to vector<8x8xbf16>
    %68 = vector.extract_strided_slice %33 {offsets = [0, 16], sizes = [8, 8], strides = [1, 1]} : vector<8x32xbf16> to vector<8x8xbf16>
    %cst_19 = arith.constant dense<0.000000e+00> : vector<8x8xf32>
    %69 = tpu.matmul %67, %68, %cst_19 {dimension_numbers = #tpu.dot_dimension_numbers<[1], [1], [0], [0], [0, 0, 1, 0], [], []>} : vector<8x8xbf16>, vector<8x8xbf16>, vector<8x8xf32> -> vector<8x8xf32>
    %cst_20 = arith.constant dense<0xFF800000> : vector<8xf32>
    %70 = vector.multi_reduction <maximumf>, %69, %cst_20 [1] : vector<8x8xf32> to vector<8xf32>
    %71 = vector.shape_cast %70 : vector<8xf32> to vector<8x1xf32>
    %72 = vector.broadcast %71 : vector<8x1xf32> to vector<8x8xf32>
    %73 = arith.subf %69, %72 : vector<8x8xf32>
    %74 = math.exp %73 : vector<8x8xf32>
    %cst_21 = arith.constant dense<0.000000e+00> : vector<8xf32>
    %75 = vector.multi_reduction <add>, %74, %cst_21 [1] : vector<8x8xf32> to vector<8xf32>
    %76 = vector.shape_cast %75 : vector<8xf32> to vector<8x1xf32>
    %77 = tpu.reciprocal %76 {approx = true} : vector<8x1xf32> -> vector<8x1xf32>
    %78 = vector.broadcast %77 : vector<8x1xf32> to vector<8x8xf32>
    %79 = arith.mulf %74, %78 : vector<8x8xf32>
    %80 = arith.truncf %79 : vector<8x8xf32> to vector<8x8xbf16>
    %81 = vector.extract_strided_slice %34 {offsets = [0, 16], sizes = [8, 8], strides = [1, 1]} : vector<8x32xbf16> to vector<8x8xbf16>
    %cst_22 = arith.constant dense<0.000000e+00> : vector<8x8xf32>
    %82 = tpu.matmul %80, %81, %cst_22 {dimension_numbers = #tpu.dot_dimension_numbers<[1], [0], [0], [1], [0, 0, 1, 1], [], []>} : vector<8x8xbf16>, vector<8x8xbf16>, vector<8x8xf32> -> vector<8x8xf32>
    %83 = vector.extract_strided_slice %32 {offsets = [0, 24], sizes = [8, 8], strides = [1, 1]} : vector<8x32xbf16> to vector<8x8xbf16>
    %84 = vector.extract_strided_slice %33 {offsets = [0, 24], sizes = [8, 8], strides = [1, 1]} : vector<8x32xbf16> to vector<8x8xbf16>
    %cst_23 = arith.constant dense<0.000000e+00> : vector<8x8xf32>
    %85 = tpu.matmul %83, %84, %cst_23 {dimension_numbers = #tpu.dot_dimension_numbers<[1], [1], [0], [0], [0, 0, 1, 0], [], []>} : vector<8x8xbf16>, vector<8x8xbf16>, vector<8x8xf32> -> vector<8x8xf32>
    %cst_24 = arith.constant dense<0xFF800000> : vector<8xf32>
    %86 = vector.multi_reduction <maximumf>, %85, %cst_24 [1] : vector<8x8xf32> to vector<8xf32>
    %87 = vector.shape_cast %86 : vector<8xf32> to vector<8x1xf32>
    %88 = vector.broadcast %87 : vector<8x1xf32> to vector<8x8xf32>
    %89 = arith.subf %85, %88 : vector<8x8xf32>
    %90 = math.exp %89 : vector<8x8xf32>
    %cst_25 = arith.constant dense<0.000000e+00> : vector<8xf32>
    %91 = vector.multi_reduction <add>, %90, %cst_25 [1] : vector<8x8xf32> to vector<8xf32>
    %92 = vector.shape_cast %91 : vector<8xf32> to vector<8x1xf32>
    %93 = tpu.reciprocal %92 {approx = true} : vector<8x1xf32> -> vector<8x1xf32>
    %94 = vector.broadcast %93 : vector<8x1xf32> to vector<8x8xf32>
    %95 = arith.mulf %90, %94 : vector<8x8xf32>
    %96 = arith.truncf %95 : vector<8x8xf32> to vector<8x8xbf16>
    %97 = vector.extract_strided_slice %34 {offsets = [0, 24], sizes = [8, 8], strides = [1, 1]} : vector<8x32xbf16> to vector<8x8xbf16>
    %cst_26 = arith.constant dense<0.000000e+00> : vector<8x8xf32>
    %98 = tpu.matmul %96, %97, %cst_26 {dimension_numbers = #tpu.dot_dimension_numbers<[1], [0], [0], [1], [0, 0, 1, 1], [], []>} : vector<8x8xbf16>, vector<8x8xbf16>, vector<8x8xf32> -> vector<8x8xf32>
    %99 = tpu.concatenate %50, %66, %82, %98 in 1 : vector<8x8xf32>, vector<8x8xf32>, vector<8x8xf32>, vector<8x8xf32> -> vector<8x32xf32>
    %100 = vector.extract_strided_slice %17 {offsets = [8, 0], sizes = [8, 32], strides = [1, 1]} : vector<16x32xbf16> to vector<8x32xbf16>
    %101 = vector.extract_strided_slice %22 {offsets = [8, 0], sizes = [8, 32], strides = [1, 1]} : vector<16x32xbf16> to vector<8x32xbf16>
    %102 = vector.extract_strided_slice %27 {offsets = [8, 0], sizes = [8, 32], strides = [1, 1]} : vector<16x32xbf16> to vector<8x32xbf16>
    %103 = vector.extract_strided_slice %100 {offsets = [0, 0], sizes = [8, 8], strides = [1, 1]} : vector<8x32xbf16> to vector<8x8xbf16>
    %104 = vector.extract_strided_slice %101 {offsets = [0, 0], sizes = [8, 8], strides = [1, 1]} : vector<8x32xbf16> to vector<8x8xbf16>
    %cst_27 = arith.constant dense<0.000000e+00> : vector<8x8xf32>
    %105 = tpu.matmul %103, %104, %cst_27 {dimension_numbers = #tpu.dot_dimension_numbers<[1], [1], [0], [0], [0, 0, 1, 0], [], []>} : vector<8x8xbf16>, vector<8x8xbf16>, vector<8x8xf32> -> vector<8x8xf32>
    %cst_28 = arith.constant dense<0xFF800000> : vector<8xf32>
    %106 = vector.multi_reduction <maximumf>, %105, %cst_28 [1] : vector<8x8xf32> to vector<8xf32>
    %107 = vector.shape_cast %106 : vector<8xf32> to vector<8x1xf32>
    %108 = vector.broadcast %107 : vector<8x1xf32> to vector<8x8xf32>
    %109 = arith.subf %105, %108 : vector<8x8xf32>
    %110 = math.exp %109 : vector<8x8xf32>
    %cst_29 = arith.constant dense<0.000000e+00> : vector<8xf32>
    %111 = vector.multi_reduction <add>, %110, %cst_29 [1] : vector<8x8xf32> to vector<8xf32>
    %112 = vector.shape_cast %111 : vector<8xf32> to vector<8x1xf32>
    %113 = tpu.reciprocal %112 {approx = true} : vector<8x1xf32> -> vector<8x1xf32>
    %114 = vector.broadcast %113 : vector<8x1xf32> to vector<8x8xf32>
    %115 = arith.mulf %110, %114 : vector<8x8xf32>
    %116 = arith.truncf %115 : vector<8x8xf32> to vector<8x8xbf16>
    %117 = vector.extract_strided_slice %102 {offsets = [0, 0], sizes = [8, 8], strides = [1, 1]} : vector<8x32xbf16> to vector<8x8xbf16>
    %cst_30 = arith.constant dense<0.000000e+00> : vector<8x8xf32>
    %118 = tpu.matmul %116, %117, %cst_30 {dimension_numbers = #tpu.dot_dimension_numbers<[1], [0], [0], [1], [0, 0, 1, 1], [], []>} : vector<8x8xbf16>, vector<8x8xbf16>, vector<8x8xf32> -> vector<8x8xf32>
    %119 = vector.extract_strided_slice %100 {offsets = [0, 8], sizes = [8, 8], strides = [1, 1]} : vector<8x32xbf16> to vector<8x8xbf16>
    %120 = vector.extract_strided_slice %101 {offsets = [0, 8], sizes = [8, 8], strides = [1, 1]} : vector<8x32xbf16> to vector<8x8xbf16>
    %cst_31 = arith.constant dense<0.000000e+00> : vector<8x8xf32>
    %121 = tpu.matmul %119, %120, %cst_31 {dimension_numbers = #tpu.dot_dimension_numbers<[1], [1], [0], [0], [0, 0, 1, 0], [], []>} : vector<8x8xbf16>, vector<8x8xbf16>, vector<8x8xf32> -> vector<8x8xf32>
    %cst_32 = arith.constant dense<0xFF800000> : vector<8xf32>
    %122 = vector.multi_reduction <maximumf>, %121, %cst_32 [1] : vector<8x8xf32> to vector<8xf32>
    %123 = vector.shape_cast %122 : vector<8xf32> to vector<8x1xf32>
    %124 = vector.broadcast %123 : vector<8x1xf32> to vector<8x8xf32>
    %125 = arith.subf %121, %124 : vector<8x8xf32>
    %126 = math.exp %125 : vector<8x8xf32>
    %cst_33 = arith.constant dense<0.000000e+00> : vector<8xf32>
    %127 = vector.multi_reduction <add>, %126, %cst_33 [1] : vector<8x8xf32> to vector<8xf32>
    %128 = vector.shape_cast %127 : vector<8xf32> to vector<8x1xf32>
    %129 = tpu.reciprocal %128 {approx = true} : vector<8x1xf32> -> vector<8x1xf32>
    %130 = vector.broadcast %129 : vector<8x1xf32> to vector<8x8xf32>
    %131 = arith.mulf %126, %130 : vector<8x8xf32>
    %132 = arith.truncf %131 : vector<8x8xf32> to vector<8x8xbf16>
    %133 = vector.extract_strided_slice %102 {offsets = [0, 8], sizes = [8, 8], strides = [1, 1]} : vector<8x32xbf16> to vector<8x8xbf16>
    %cst_34 = arith.constant dense<0.000000e+00> : vector<8x8xf32>
    %134 = tpu.matmul %132, %133, %cst_34 {dimension_numbers = #tpu.dot_dimension_numbers<[1], [0], [0], [1], [0, 0, 1, 1], [], []>} : vector<8x8xbf16>, vector<8x8xbf16>, vector<8x8xf32> -> vector<8x8xf32>
    %135 = vector.extract_strided_slice %100 {offsets = [0, 16], sizes = [8, 8], strides = [1, 1]} : vector<8x32xbf16> to vector<8x8xbf16>
    %136 = vector.extract_strided_slice %101 {offsets = [0, 16], sizes = [8, 8], strides = [1, 1]} : vector<8x32xbf16> to vector<8x8xbf16>
    %cst_35 = arith.constant dense<0.000000e+00> : vector<8x8xf32>
    %137 = tpu.matmul %135, %136, %cst_35 {dimension_numbers = #tpu.dot_dimension_numbers<[1], [1], [0], [0], [0, 0, 1, 0], [], []>} : vector<8x8xbf16>, vector<8x8xbf16>, vector<8x8xf32> -> vector<8x8xf32>
    %cst_36 = arith.constant dense<0xFF800000> : vector<8xf32>
    %138 = vector.multi_reduction <maximumf>, %137, %cst_36 [1] : vector<8x8xf32> to vector<8xf32>
    %139 = vector.shape_cast %138 : vector<8xf32> to vector<8x1xf32>
    %140 = vector.broadcast %139 : vector<8x1xf32> to vector<8x8xf32>
    %141 = arith.subf %137, %140 : vector<8x8xf32>
    %142 = math.exp %141 : vector<8x8xf32>
    %cst_37 = arith.constant dense<0.000000e+00> : vector<8xf32>
    %143 = vector.multi_reduction <add>, %142, %cst_37 [1] : vector<8x8xf32> to vector<8xf32>
    %144 = vector.shape_cast %143 : vector<8xf32> to vector<8x1xf32>
    %145 = tpu.reciprocal %144 {approx = true} : vector<8x1xf32> -> vector<8x1xf32>
    %146 = vector.broadcast %145 : vector<8x1xf32> to vector<8x8xf32>
    %147 = arith.mulf %142, %146 : vector<8x8xf32>
    %148 = arith.truncf %147 : vector<8x8xf32> to vector<8x8xbf16>
    %149 = vector.extract_strided_slice %102 {offsets = [0, 16], sizes = [8, 8], strides = [1, 1]} : vector<8x32xbf16> to vector<8x8xbf16>
    %cst_38 = arith.constant dense<0.000000e+00> : vector<8x8xf32>
    %150 = tpu.matmul %148, %149, %cst_38 {dimension_numbers = #tpu.dot_dimension_numbers<[1], [0], [0], [1], [0, 0, 1, 1], [], []>} : vector<8x8xbf16>, vector<8x8xbf16>, vector<8x8xf32> -> vector<8x8xf32>
    %151 = vector.extract_strided_slice %100 {offsets = [0, 24], sizes = [8, 8], strides = [1, 1]} : vector<8x32xbf16> to vector<8x8xbf16>
    %152 = vector.extract_strided_slice %101 {offsets = [0, 24], sizes = [8, 8], strides = [1, 1]} : vector<8x32xbf16> to vector<8x8xbf16>
    %cst_39 = arith.constant dense<0.000000e+00> : vector<8x8xf32>
    %153 = tpu.matmul %151, %152, %cst_39 {dimension_numbers = #tpu.dot_dimension_numbers<[1], [1], [0], [0], [0, 0, 1, 0], [], []>} : vector<8x8xbf16>, vector<8x8xbf16>, vector<8x8xf32> -> vector<8x8xf32>
    %cst_40 = arith.constant dense<0xFF800000> : vector<8xf32>
    %154 = vector.multi_reduction <maximumf>, %153, %cst_40 [1] : vector<8x8xf32> to vector<8xf32>
    %155 = vector.shape_cast %154 : vector<8xf32> to vector<8x1xf32>
    %156 = vector.broadcast %155 : vector<8x1xf32> to vector<8x8xf32>
    %157 = arith.subf %153, %156 : vector<8x8xf32>
    %158 = math.exp %157 : vector<8x8xf32>
    %cst_41 = arith.constant dense<0.000000e+00> : vector<8xf32>
    %159 = vector.multi_reduction <add>, %158, %cst_41 [1] : vector<8x8xf32> to vector<8xf32>
    %160 = vector.shape_cast %159 : vector<8xf32> to vector<8x1xf32>
    %161 = tpu.reciprocal %160 {approx = true} : vector<8x1xf32> -> vector<8x1xf32>
    %162 = vector.broadcast %161 : vector<8x1xf32> to vector<8x8xf32>
    %163 = arith.mulf %158, %162 : vector<8x8xf32>
    %164 = arith.truncf %163 : vector<8x8xf32> to vector<8x8xbf16>
    %165 = vector.extract_strided_slice %102 {offsets = [0, 24], sizes = [8, 8], strides = [1, 1]} : vector<8x32xbf16> to vector<8x8xbf16>
    %cst_42 = arith.constant dense<0.000000e+00> : vector<8x8xf32>
    %166 = tpu.matmul %164, %165, %cst_42 {dimension_numbers = #tpu.dot_dimension_numbers<[1], [0], [0], [1], [0, 0, 1, 1], [], []>} : vector<8x8xbf16>, vector<8x8xbf16>, vector<8x8xf32> -> vector<8x8xf32>
    %167 = tpu.concatenate %118, %134, %150, %166 in 1 : vector<8x8xf32>, vector<8x8xf32>, vector<8x8xf32>, vector<8x8xf32> -> vector<8x32xf32>
    %168 = tpu.concatenate %99, %167 in 0 : vector<8x32xf32>, vector<8x32xf32> -> vector<16x32xf32>
    %169 = arith.truncf %168 : vector<16x32xf32> to vector<16x32xbf16>
    %cst_43 = arith.constant dense<0.000000e+00> : vector<16x32xf32>
    %170 = tpu.matmul %169, %30, %cst_43 {dimension_numbers = #tpu.dot_dimension_numbers<[1], [0], [0], [1], [0, 0, 1, 1], [], []>} : vector<16x32xbf16>, vector<32x32xbf16>, vector<16x32xf32> -> vector<16x32xf32>
    %171 = vector.broadcast %31 : vector<1x32xf32> to vector<16x32xf32>
    %172 = arith.addf %170, %171 : vector<16x32xf32>
    %173 = arith.addf %3, %172 : vector<16x32xf32>
    %174 = vector.extract_strided_slice %6 {offsets = [9, 0], sizes = [1, 32], strides = [1, 1]} : vector<15x32xf32> to vector<1x32xf32>
    %175 = vector.extract_strided_slice %6 {offsets = [10, 0], sizes = [1, 32], strides = [1, 1]} : vector<15x32xf32> to vector<1x32xf32>
    %cst_44 = arith.constant dense<0.000000e+00> : vector<16xf32>
    %176 = vector.multi_reduction <add>, %173, %cst_44 [1] : vector<16x32xf32> to vector<16xf32>
    %177 = vector.shape_cast %176 : vector<16xf32> to vector<16x1xf32>
    %cst_45 = arith.constant 3.200000e+01 : f32
    %178 = vector.broadcast %cst_45 : f32 to vector<16x1xf32>
    %179 = arith.divf %177, %178 : vector<16x1xf32>
    %180 = vector.broadcast %179 : vector<16x1xf32> to vector<16x32xf32>
    %181 = arith.subf %173, %180 : vector<16x32xf32>
    %182 = arith.mulf %181, %181 : vector<16x32xf32>
    %cst_46 = arith.constant dense<0.000000e+00> : vector<16xf32>
    %183 = vector.multi_reduction <add>, %182, %cst_46 [1] : vector<16x32xf32> to vector<16xf32>
    %184 = vector.shape_cast %183 : vector<16xf32> to vector<16x1xf32>
    %cst_47 = arith.constant 3.200000e+01 : f32
    %185 = vector.broadcast %cst_47 : f32 to vector<16x1xf32>
    %186 = arith.divf %184, %185 : vector<16x1xf32>
    %187 = vector.broadcast %179 : vector<16x1xf32> to vector<16x32xf32>
    %188 = arith.subf %173, %187 : vector<16x32xf32>
    %cst_48 = arith.constant 9.99999974E-6 : f32
    %189 = vector.broadcast %cst_48 : f32 to vector<16x1xf32>
    %190 = arith.addf %186, %189 : vector<16x1xf32>
    %191 = math.rsqrt %190 : vector<16x1xf32>
    %192 = vector.broadcast %191 : vector<16x1xf32> to vector<16x32xf32>
    %193 = arith.mulf %188, %192 : vector<16x32xf32>
    %194 = vector.broadcast %174 : vector<1x32xf32> to vector<16x32xf32>
    %195 = arith.mulf %193, %194 : vector<16x32xf32>
    %196 = vector.broadcast %175 : vector<1x32xf32> to vector<16x32xf32>
    %197 = arith.addf %195, %196 : vector<16x32xf32>
    %198 = arith.truncf %197 : vector<16x32xf32> to vector<16x32xbf16>
    %199 = arith.index_cast %arg1 : i32 to index
    %c0_49 = arith.constant 0 : index
    %c0_50 = arith.constant 0 : index
    %200 = vector.load %arg7[%199, %c0_49, %c0_50] : memref<2x32x32xbf16, #tpu.memory_space<vmem>>, vector<1x32x32xbf16>
    %201 = vector.shape_cast %200 : vector<1x32x32xbf16> to vector<32x32xbf16>
    %cst_51 = arith.constant dense<0.000000e+00> : vector<16x32xf32>
    %202 = tpu.matmul %198, %201, %cst_51 {dimension_numbers = #tpu.dot_dimension_numbers<[1], [0], [0], [1], [0, 0, 1, 1], [], []>} : vector<16x32xbf16>, vector<32x32xbf16>, vector<16x32xf32> -> vector<16x32xf32>
    %203 = vector.extract_strided_slice %6 {offsets = [4, 0], sizes = [1, 32], strides = [1, 1]} : vector<15x32xf32> to vector<1x32xf32>
    %204 = vector.broadcast %203 : vector<1x32xf32> to vector<16x32xf32>
    %205 = arith.addf %202, %204 : vector<16x32xf32>
    %206 = arith.truncf %205 : vector<16x32xf32> to vector<16x32xbf16>
    %c0_52 = arith.constant 0 : index
    %c0_53 = arith.constant 0 : index
    %c0_54 = arith.constant 0 : index
    %207 = vector.load %arg3[%c0_52, %c0_53, %c0_54] : memref<2x128x32xbf16, #tpu.memory_space<vmem>>, vector<2x128x32xbf16>
    %208 = vector.shape_cast %207 : vector<2x128x32xbf16> to vector<256x32xbf16>
    %209 = arith.index_cast %arg1 : i32 to index
    %c0_55 = arith.constant 0 : index
    %c0_56 = arith.constant 0 : index
    %210 = vector.load %arg8[%209, %c0_55, %c0_56] : memref<2x32x64xbf16, #tpu.memory_space<vmem>>, vector<1x32x64xbf16>
    %211 = vector.shape_cast %210 : vector<1x32x64xbf16> to vector<32x64xbf16>
    %cst_57 = arith.constant dense<0.000000e+00> : vector<256x64xf32>
    %212 = tpu.matmul %208, %211, %cst_57 {dimension_numbers = #tpu.dot_dimension_numbers<[1], [0], [0], [1], [0, 0, 1, 1], [], []>} : vector<256x32xbf16>, vector<32x64xbf16>, vector<256x64xf32> -> vector<256x64xf32>
    %213 = vector.extract_strided_slice %212 {offsets = [0, 0], sizes = [256, 32], strides = [1, 1]} : vector<256x64xf32> to vector<256x32xf32>
    %214 = vector.extract_strided_slice %6 {offsets = [5, 0], sizes = [1, 32], strides = [1, 1]} : vector<15x32xf32> to vector<1x32xf32>
    %215 = vector.broadcast %214 : vector<1x32xf32> to vector<256x32xf32>
    %216 = arith.addf %213, %215 : vector<256x32xf32>
    %217 = arith.truncf %216 : vector<256x32xf32> to vector<256x32xbf16>
    %218 = vector.extract_strided_slice %212 {offsets = [0, 32], sizes = [256, 32], strides = [1, 1]} : vector<256x64xf32> to vector<256x32xf32>
    %219 = vector.extract_strided_slice %6 {offsets = [6, 0], sizes = [1, 32], strides = [1, 1]} : vector<15x32xf32> to vector<1x32xf32>
    %220 = vector.broadcast %219 : vector<1x32xf32> to vector<256x32xf32>
    %221 = arith.addf %218, %220 : vector<256x32xf32>
    %222 = arith.truncf %221 : vector<256x32xf32> to vector<256x32xbf16>
    %223 = arith.index_cast %arg1 : i32 to index
    %c0_58 = arith.constant 0 : index
    %c0_59 = arith.constant 0 : index
    %224 = vector.load %arg9[%223, %c0_58, %c0_59] : memref<2x32x32xbf16, #tpu.memory_space<vmem>>, vector<1x32x32xbf16>
    %225 = vector.shape_cast %224 : vector<1x32x32xbf16> to vector<32x32xbf16>
    %226 = vector.extract_strided_slice %6 {offsets = [7, 0], sizes = [1, 32], strides = [1, 1]} : vector<15x32xf32> to vector<1x32xf32>
    %227 = vector.extract_strided_slice %206 {offsets = [0, 0], sizes = [8, 32], strides = [1, 1]} : vector<16x32xbf16> to vector<8x32xbf16>
    %228 = vector.extract_strided_slice %217 {offsets = [0, 0], sizes = [128, 32], strides = [1, 1]} : vector<256x32xbf16> to vector<128x32xbf16>
    %229 = vector.extract_strided_slice %222 {offsets = [0, 0], sizes = [128, 32], strides = [1, 1]} : vector<256x32xbf16> to vector<128x32xbf16>
    %230 = vector.extract_strided_slice %7 {offsets = [0, 0, 0], sizes = [1, 1, 128], strides = [1, 1, 1]} : vector<2x1x128xf32> to vector<1x1x128xf32>
    %231 = vector.shape_cast %230 : vector<1x1x128xf32> to vector<1x128xf32>
    %232 = vector.extract_strided_slice %227 {offsets = [0, 0], sizes = [8, 8], strides = [1, 1]} : vector<8x32xbf16> to vector<8x8xbf16>
    %233 = vector.extract_strided_slice %228 {offsets = [0, 0], sizes = [128, 8], strides = [1, 1]} : vector<128x32xbf16> to vector<128x8xbf16>
    %cst_60 = arith.constant dense<0.000000e+00> : vector<8x128xf32>
    %234 = tpu.matmul %232, %233, %cst_60 {dimension_numbers = #tpu.dot_dimension_numbers<[1], [1], [0], [0], [0, 0, 1, 0], [], []>} : vector<8x8xbf16>, vector<128x8xbf16>, vector<8x128xf32> -> vector<8x128xf32>
    %235 = vector.broadcast %231 : vector<1x128xf32> to vector<8x128xf32>
    %236 = arith.addf %234, %235 : vector<8x128xf32>
    %cst_61 = arith.constant dense<0xFF800000> : vector<8xf32>
    %237 = vector.multi_reduction <maximumf>, %236, %cst_61 [1] : vector<8x128xf32> to vector<8xf32>
    %238 = vector.shape_cast %237 : vector<8xf32> to vector<8x1xf32>
    %239 = vector.broadcast %238 : vector<8x1xf32> to vector<8x128xf32>
    %240 = arith.subf %236, %239 : vector<8x128xf32>
    %241 = math.exp %240 : vector<8x128xf32>
    %cst_62 = arith.constant dense<0.000000e+00> : vector<8xf32>
    %242 = vector.multi_reduction <add>, %241, %cst_62 [1] : vector<8x128xf32> to vector<8xf32>
    %243 = vector.shape_cast %242 : vector<8xf32> to vector<8x1xf32>
    %244 = tpu.reciprocal %243 {approx = true} : vector<8x1xf32> -> vector<8x1xf32>
    %245 = vector.broadcast %244 : vector<8x1xf32> to vector<8x128xf32>
    %246 = arith.mulf %241, %245 : vector<8x128xf32>
    %247 = arith.truncf %246 : vector<8x128xf32> to vector<8x128xbf16>
    %248 = vector.extract_strided_slice %229 {offsets = [0, 0], sizes = [128, 8], strides = [1, 1]} : vector<128x32xbf16> to vector<128x8xbf16>
    %cst_63 = arith.constant dense<0.000000e+00> : vector<8x8xf32>
    %249 = tpu.matmul %247, %248, %cst_63 {dimension_numbers = #tpu.dot_dimension_numbers<[1], [0], [0], [1], [0, 0, 1, 1], [], []>} : vector<8x128xbf16>, vector<128x8xbf16>, vector<8x8xf32> -> vector<8x8xf32>
    %250 = vector.extract_strided_slice %227 {offsets = [0, 8], sizes = [8, 8], strides = [1, 1]} : vector<8x32xbf16> to vector<8x8xbf16>
    %251 = vector.extract_strided_slice %228 {offsets = [0, 8], sizes = [128, 8], strides = [1, 1]} : vector<128x32xbf16> to vector<128x8xbf16>
    %cst_64 = arith.constant dense<0.000000e+00> : vector<8x128xf32>
    %252 = tpu.matmul %250, %251, %cst_64 {dimension_numbers = #tpu.dot_dimension_numbers<[1], [1], [0], [0], [0, 0, 1, 0], [], []>} : vector<8x8xbf16>, vector<128x8xbf16>, vector<8x128xf32> -> vector<8x128xf32>
    %253 = vector.broadcast %231 : vector<1x128xf32> to vector<8x128xf32>
    %254 = arith.addf %252, %253 : vector<8x128xf32>
    %cst_65 = arith.constant dense<0xFF800000> : vector<8xf32>
    %255 = vector.multi_reduction <maximumf>, %254, %cst_65 [1] : vector<8x128xf32> to vector<8xf32>
    %256 = vector.shape_cast %255 : vector<8xf32> to vector<8x1xf32>
    %257 = vector.broadcast %256 : vector<8x1xf32> to vector<8x128xf32>
    %258 = arith.subf %254, %257 : vector<8x128xf32>
    %259 = math.exp %258 : vector<8x128xf32>
    %cst_66 = arith.constant dense<0.000000e+00> : vector<8xf32>
    %260 = vector.multi_reduction <add>, %259, %cst_66 [1] : vector<8x128xf32> to vector<8xf32>
    %261 = vector.shape_cast %260 : vector<8xf32> to vector<8x1xf32>
    %262 = tpu.reciprocal %261 {approx = true} : vector<8x1xf32> -> vector<8x1xf32>
    %263 = vector.broadcast %262 : vector<8x1xf32> to vector<8x128xf32>
    %264 = arith.mulf %259, %263 : vector<8x128xf32>
    %265 = arith.truncf %264 : vector<8x128xf32> to vector<8x128xbf16>
    %266 = vector.extract_strided_slice %229 {offsets = [0, 8], sizes = [128, 8], strides = [1, 1]} : vector<128x32xbf16> to vector<128x8xbf16>
    %cst_67 = arith.constant dense<0.000000e+00> : vector<8x8xf32>
    %267 = tpu.matmul %265, %266, %cst_67 {dimension_numbers = #tpu.dot_dimension_numbers<[1], [0], [0], [1], [0, 0, 1, 1], [], []>} : vector<8x128xbf16>, vector<128x8xbf16>, vector<8x8xf32> -> vector<8x8xf32>
    %268 = vector.extract_strided_slice %227 {offsets = [0, 16], sizes = [8, 8], strides = [1, 1]} : vector<8x32xbf16> to vector<8x8xbf16>
    %269 = vector.extract_strided_slice %228 {offsets = [0, 16], sizes = [128, 8], strides = [1, 1]} : vector<128x32xbf16> to vector<128x8xbf16>
    %cst_68 = arith.constant dense<0.000000e+00> : vector<8x128xf32>
    %270 = tpu.matmul %268, %269, %cst_68 {dimension_numbers = #tpu.dot_dimension_numbers<[1], [1], [0], [0], [0, 0, 1, 0], [], []>} : vector<8x8xbf16>, vector<128x8xbf16>, vector<8x128xf32> -> vector<8x128xf32>
    %271 = vector.broadcast %231 : vector<1x128xf32> to vector<8x128xf32>
    %272 = arith.addf %270, %271 : vector<8x128xf32>
    %cst_69 = arith.constant dense<0xFF800000> : vector<8xf32>
    %273 = vector.multi_reduction <maximumf>, %272, %cst_69 [1] : vector<8x128xf32> to vector<8xf32>
    %274 = vector.shape_cast %273 : vector<8xf32> to vector<8x1xf32>
    %275 = vector.broadcast %274 : vector<8x1xf32> to vector<8x128xf32>
    %276 = arith.subf %272, %275 : vector<8x128xf32>
    %277 = math.exp %276 : vector<8x128xf32>
    %cst_70 = arith.constant dense<0.000000e+00> : vector<8xf32>
    %278 = vector.multi_reduction <add>, %277, %cst_70 [1] : vector<8x128xf32> to vector<8xf32>
    %279 = vector.shape_cast %278 : vector<8xf32> to vector<8x1xf32>
    %280 = tpu.reciprocal %279 {approx = true} : vector<8x1xf32> -> vector<8x1xf32>
    %281 = vector.broadcast %280 : vector<8x1xf32> to vector<8x128xf32>
    %282 = arith.mulf %277, %281 : vector<8x128xf32>
    %283 = arith.truncf %282 : vector<8x128xf32> to vector<8x128xbf16>
    %284 = vector.extract_strided_slice %229 {offsets = [0, 16], sizes = [128, 8], strides = [1, 1]} : vector<128x32xbf16> to vector<128x8xbf16>
    %cst_71 = arith.constant dense<0.000000e+00> : vector<8x8xf32>
    %285 = tpu.matmul %283, %284, %cst_71 {dimension_numbers = #tpu.dot_dimension_numbers<[1], [0], [0], [1], [0, 0, 1, 1], [], []>} : vector<8x128xbf16>, vector<128x8xbf16>, vector<8x8xf32> -> vector<8x8xf32>
    %286 = vector.extract_strided_slice %227 {offsets = [0, 24], sizes = [8, 8], strides = [1, 1]} : vector<8x32xbf16> to vector<8x8xbf16>
    %287 = vector.extract_strided_slice %228 {offsets = [0, 24], sizes = [128, 8], strides = [1, 1]} : vector<128x32xbf16> to vector<128x8xbf16>
    %cst_72 = arith.constant dense<0.000000e+00> : vector<8x128xf32>
    %288 = tpu.matmul %286, %287, %cst_72 {dimension_numbers = #tpu.dot_dimension_numbers<[1], [1], [0], [0], [0, 0, 1, 0], [], []>} : vector<8x8xbf16>, vector<128x8xbf16>, vector<8x128xf32> -> vector<8x128xf32>
    %289 = vector.broadcast %231 : vector<1x128xf32> to vector<8x128xf32>
    %290 = arith.addf %288, %289 : vector<8x128xf32>
    %cst_73 = arith.constant dense<0xFF800000> : vector<8xf32>
    %291 = vector.multi_reduction <maximumf>, %290, %cst_73 [1] : vector<8x128xf32> to vector<8xf32>
    %292 = vector.shape_cast %291 : vector<8xf32> to vector<8x1xf32>
    %293 = vector.broadcast %292 : vector<8x1xf32> to vector<8x128xf32>
    %294 = arith.subf %290, %293 : vector<8x128xf32>
    %295 = math.exp %294 : vector<8x128xf32>
    %cst_74 = arith.constant dense<0.000000e+00> : vector<8xf32>
    %296 = vector.multi_reduction <add>, %295, %cst_74 [1] : vector<8x128xf32> to vector<8xf32>
    %297 = vector.shape_cast %296 : vector<8xf32> to vector<8x1xf32>
    %298 = tpu.reciprocal %297 {approx = true} : vector<8x1xf32> -> vector<8x1xf32>
    %299 = vector.broadcast %298 : vector<8x1xf32> to vector<8x128xf32>
    %300 = arith.mulf %295, %299 : vector<8x128xf32>
    %301 = arith.truncf %300 : vector<8x128xf32> to vector<8x128xbf16>
    %302 = vector.extract_strided_slice %229 {offsets = [0, 24], sizes = [128, 8], strides = [1, 1]} : vector<128x32xbf16> to vector<128x8xbf16>
    %cst_75 = arith.constant dense<0.000000e+00> : vector<8x8xf32>
    %303 = tpu.matmul %301, %302, %cst_75 {dimension_numbers = #tpu.dot_dimension_numbers<[1], [0], [0], [1], [0, 0, 1, 1], [], []>} : vector<8x128xbf16>, vector<128x8xbf16>, vector<8x8xf32> -> vector<8x8xf32>
    %304 = tpu.concatenate %249, %267, %285, %303 in 1 : vector<8x8xf32>, vector<8x8xf32>, vector<8x8xf32>, vector<8x8xf32> -> vector<8x32xf32>
    %305 = vector.extract_strided_slice %206 {offsets = [8, 0], sizes = [8, 32], strides = [1, 1]} : vector<16x32xbf16> to vector<8x32xbf16>
    %306 = vector.extract_strided_slice %217 {offsets = [128, 0], sizes = [128, 32], strides = [1, 1]} : vector<256x32xbf16> to vector<128x32xbf16>
    %307 = vector.extract_strided_slice %222 {offsets = [128, 0], sizes = [128, 32], strides = [1, 1]} : vector<256x32xbf16> to vector<128x32xbf16>
    %308 = vector.extract_strided_slice %7 {offsets = [1, 0, 0], sizes = [1, 1, 128], strides = [1, 1, 1]} : vector<2x1x128xf32> to vector<1x1x128xf32>
    %309 = vector.shape_cast %308 : vector<1x1x128xf32> to vector<1x128xf32>
    %310 = vector.extract_strided_slice %305 {offsets = [0, 0], sizes = [8, 8], strides = [1, 1]} : vector<8x32xbf16> to vector<8x8xbf16>
    %311 = vector.extract_strided_slice %306 {offsets = [0, 0], sizes = [128, 8], strides = [1, 1]} : vector<128x32xbf16> to vector<128x8xbf16>
    %cst_76 = arith.constant dense<0.000000e+00> : vector<8x128xf32>
    %312 = tpu.matmul %310, %311, %cst_76 {dimension_numbers = #tpu.dot_dimension_numbers<[1], [1], [0], [0], [0, 0, 1, 0], [], []>} : vector<8x8xbf16>, vector<128x8xbf16>, vector<8x128xf32> -> vector<8x128xf32>
    %313 = vector.broadcast %309 : vector<1x128xf32> to vector<8x128xf32>
    %314 = arith.addf %312, %313 : vector<8x128xf32>
    %cst_77 = arith.constant dense<0xFF800000> : vector<8xf32>
    %315 = vector.multi_reduction <maximumf>, %314, %cst_77 [1] : vector<8x128xf32> to vector<8xf32>
    %316 = vector.shape_cast %315 : vector<8xf32> to vector<8x1xf32>
    %317 = vector.broadcast %316 : vector<8x1xf32> to vector<8x128xf32>
    %318 = arith.subf %314, %317 : vector<8x128xf32>
    %319 = math.exp %318 : vector<8x128xf32>
    %cst_78 = arith.constant dense<0.000000e+00> : vector<8xf32>
    %320 = vector.multi_reduction <add>, %319, %cst_78 [1] : vector<8x128xf32> to vector<8xf32>
    %321 = vector.shape_cast %320 : vector<8xf32> to vector<8x1xf32>
    %322 = tpu.reciprocal %321 {approx = true} : vector<8x1xf32> -> vector<8x1xf32>
    %323 = vector.broadcast %322 : vector<8x1xf32> to vector<8x128xf32>
    %324 = arith.mulf %319, %323 : vector<8x128xf32>
    %325 = arith.truncf %324 : vector<8x128xf32> to vector<8x128xbf16>
    %326 = vector.extract_strided_slice %307 {offsets = [0, 0], sizes = [128, 8], strides = [1, 1]} : vector<128x32xbf16> to vector<128x8xbf16>
    %cst_79 = arith.constant dense<0.000000e+00> : vector<8x8xf32>
    %327 = tpu.matmul %325, %326, %cst_79 {dimension_numbers = #tpu.dot_dimension_numbers<[1], [0], [0], [1], [0, 0, 1, 1], [], []>} : vector<8x128xbf16>, vector<128x8xbf16>, vector<8x8xf32> -> vector<8x8xf32>
    %328 = vector.extract_strided_slice %305 {offsets = [0, 8], sizes = [8, 8], strides = [1, 1]} : vector<8x32xbf16> to vector<8x8xbf16>
    %329 = vector.extract_strided_slice %306 {offsets = [0, 8], sizes = [128, 8], strides = [1, 1]} : vector<128x32xbf16> to vector<128x8xbf16>
    %cst_80 = arith.constant dense<0.000000e+00> : vector<8x128xf32>
    %330 = tpu.matmul %328, %329, %cst_80 {dimension_numbers = #tpu.dot_dimension_numbers<[1], [1], [0], [0], [0, 0, 1, 0], [], []>} : vector<8x8xbf16>, vector<128x8xbf16>, vector<8x128xf32> -> vector<8x128xf32>
    %331 = vector.broadcast %309 : vector<1x128xf32> to vector<8x128xf32>
    %332 = arith.addf %330, %331 : vector<8x128xf32>
    %cst_81 = arith.constant dense<0xFF800000> : vector<8xf32>
    %333 = vector.multi_reduction <maximumf>, %332, %cst_81 [1] : vector<8x128xf32> to vector<8xf32>
    %334 = vector.shape_cast %333 : vector<8xf32> to vector<8x1xf32>
    %335 = vector.broadcast %334 : vector<8x1xf32> to vector<8x128xf32>
    %336 = arith.subf %332, %335 : vector<8x128xf32>
    %337 = math.exp %336 : vector<8x128xf32>
    %cst_82 = arith.constant dense<0.000000e+00> : vector<8xf32>
    %338 = vector.multi_reduction <add>, %337, %cst_82 [1] : vector<8x128xf32> to vector<8xf32>
    %339 = vector.shape_cast %338 : vector<8xf32> to vector<8x1xf32>
    %340 = tpu.reciprocal %339 {approx = true} : vector<8x1xf32> -> vector<8x1xf32>
    %341 = vector.broadcast %340 : vector<8x1xf32> to vector<8x128xf32>
    %342 = arith.mulf %337, %341 : vector<8x128xf32>
    %343 = arith.truncf %342 : vector<8x128xf32> to vector<8x128xbf16>
    %344 = vector.extract_strided_slice %307 {offsets = [0, 8], sizes = [128, 8], strides = [1, 1]} : vector<128x32xbf16> to vector<128x8xbf16>
    %cst_83 = arith.constant dense<0.000000e+00> : vector<8x8xf32>
    %345 = tpu.matmul %343, %344, %cst_83 {dimension_numbers = #tpu.dot_dimension_numbers<[1], [0], [0], [1], [0, 0, 1, 1], [], []>} : vector<8x128xbf16>, vector<128x8xbf16>, vector<8x8xf32> -> vector<8x8xf32>
    %346 = vector.extract_strided_slice %305 {offsets = [0, 16], sizes = [8, 8], strides = [1, 1]} : vector<8x32xbf16> to vector<8x8xbf16>
    %347 = vector.extract_strided_slice %306 {offsets = [0, 16], sizes = [128, 8], strides = [1, 1]} : vector<128x32xbf16> to vector<128x8xbf16>
    %cst_84 = arith.constant dense<0.000000e+00> : vector<8x128xf32>
    %348 = tpu.matmul %346, %347, %cst_84 {dimension_numbers = #tpu.dot_dimension_numbers<[1], [1], [0], [0], [0, 0, 1, 0], [], []>} : vector<8x8xbf16>, vector<128x8xbf16>, vector<8x128xf32> -> vector<8x128xf32>
    %349 = vector.broadcast %309 : vector<1x128xf32> to vector<8x128xf32>
    %350 = arith.addf %348, %349 : vector<8x128xf32>
    %cst_85 = arith.constant dense<0xFF800000> : vector<8xf32>
    %351 = vector.multi_reduction <maximumf>, %350, %cst_85 [1] : vector<8x128xf32> to vector<8xf32>
    %352 = vector.shape_cast %351 : vector<8xf32> to vector<8x1xf32>
    %353 = vector.broadcast %352 : vector<8x1xf32> to vector<8x128xf32>
    %354 = arith.subf %350, %353 : vector<8x128xf32>
    %355 = math.exp %354 : vector<8x128xf32>
    %cst_86 = arith.constant dense<0.000000e+00> : vector<8xf32>
    %356 = vector.multi_reduction <add>, %355, %cst_86 [1] : vector<8x128xf32> to vector<8xf32>
    %357 = vector.shape_cast %356 : vector<8xf32> to vector<8x1xf32>
    %358 = tpu.reciprocal %357 {approx = true} : vector<8x1xf32> -> vector<8x1xf32>
    %359 = vector.broadcast %358 : vector<8x1xf32> to vector<8x128xf32>
    %360 = arith.mulf %355, %359 : vector<8x128xf32>
    %361 = arith.truncf %360 : vector<8x128xf32> to vector<8x128xbf16>
    %362 = vector.extract_strided_slice %307 {offsets = [0, 16], sizes = [128, 8], strides = [1, 1]} : vector<128x32xbf16> to vector<128x8xbf16>
    %cst_87 = arith.constant dense<0.000000e+00> : vector<8x8xf32>
    %363 = tpu.matmul %361, %362, %cst_87 {dimension_numbers = #tpu.dot_dimension_numbers<[1], [0], [0], [1], [0, 0, 1, 1], [], []>} : vector<8x128xbf16>, vector<128x8xbf16>, vector<8x8xf32> -> vector<8x8xf32>
    %364 = vector.extract_strided_slice %305 {offsets = [0, 24], sizes = [8, 8], strides = [1, 1]} : vector<8x32xbf16> to vector<8x8xbf16>
    %365 = vector.extract_strided_slice %306 {offsets = [0, 24], sizes = [128, 8], strides = [1, 1]} : vector<128x32xbf16> to vector<128x8xbf16>
    %cst_88 = arith.constant dense<0.000000e+00> : vector<8x128xf32>
    %366 = tpu.matmul %364, %365, %cst_88 {dimension_numbers = #tpu.dot_dimension_numbers<[1], [1], [0], [0], [0, 0, 1, 0], [], []>} : vector<8x8xbf16>, vector<128x8xbf16>, vector<8x128xf32> -> vector<8x128xf32>
    %367 = vector.broadcast %309 : vector<1x128xf32> to vector<8x128xf32>
    %368 = arith.addf %366, %367 : vector<8x128xf32>
    %cst_89 = arith.constant dense<0xFF800000> : vector<8xf32>
    %369 = vector.multi_reduction <maximumf>, %368, %cst_89 [1] : vector<8x128xf32> to vector<8xf32>
    %370 = vector.shape_cast %369 : vector<8xf32> to vector<8x1xf32>
    %371 = vector.broadcast %370 : vector<8x1xf32> to vector<8x128xf32>
    %372 = arith.subf %368, %371 : vector<8x128xf32>
    %373 = math.exp %372 : vector<8x128xf32>
    %cst_90 = arith.constant dense<0.000000e+00> : vector<8xf32>
    %374 = vector.multi_reduction <add>, %373, %cst_90 [1] : vector<8x128xf32> to vector<8xf32>
    %375 = vector.shape_cast %374 : vector<8xf32> to vector<8x1xf32>
    %376 = tpu.reciprocal %375 {approx = true} : vector<8x1xf32> -> vector<8x1xf32>
    %377 = vector.broadcast %376 : vector<8x1xf32> to vector<8x128xf32>
    %378 = arith.mulf %373, %377 : vector<8x128xf32>
    %379 = arith.truncf %378 : vector<8x128xf32> to vector<8x128xbf16>
    %380 = vector.extract_strided_slice %307 {offsets = [0, 24], sizes = [128, 8], strides = [1, 1]} : vector<128x32xbf16> to vector<128x8xbf16>
    %cst_91 = arith.constant dense<0.000000e+00> : vector<8x8xf32>
    %381 = tpu.matmul %379, %380, %cst_91 {dimension_numbers = #tpu.dot_dimension_numbers<[1], [0], [0], [1], [0, 0, 1, 1], [], []>} : vector<8x128xbf16>, vector<128x8xbf16>, vector<8x8xf32> -> vector<8x8xf32>
    %382 = tpu.concatenate %327, %345, %363, %381 in 1 : vector<8x8xf32>, vector<8x8xf32>, vector<8x8xf32>, vector<8x8xf32> -> vector<8x32xf32>
    %383 = tpu.concatenate %304, %382 in 0 : vector<8x32xf32>, vector<8x32xf32> -> vector<16x32xf32>
    %384 = arith.truncf %383 : vector<16x32xf32> to vector<16x32xbf16>
    %cst_92 = arith.constant dense<0.000000e+00> : vector<16x32xf32>
    %385 = tpu.matmul %384, %225, %cst_92 {dimension_numbers = #tpu.dot_dimension_numbers<[1], [0], [0], [1], [0, 0, 1, 1], [], []>} : vector<16x32xbf16>, vector<32x32xbf16>, vector<16x32xf32> -> vector<16x32xf32>
    %386 = vector.broadcast %226 : vector<1x32xf32> to vector<16x32xf32>
    %387 = arith.addf %385, %386 : vector<16x32xf32>
    %388 = arith.addf %197, %387 : vector<16x32xf32>
    %389 = vector.extract_strided_slice %6 {offsets = [11, 0], sizes = [1, 32], strides = [1, 1]} : vector<15x32xf32> to vector<1x32xf32>
    %390 = vector.extract_strided_slice %6 {offsets = [12, 0], sizes = [1, 32], strides = [1, 1]} : vector<15x32xf32> to vector<1x32xf32>
    %cst_93 = arith.constant dense<0.000000e+00> : vector<16xf32>
    %391 = vector.multi_reduction <add>, %388, %cst_93 [1] : vector<16x32xf32> to vector<16xf32>
    %392 = vector.shape_cast %391 : vector<16xf32> to vector<16x1xf32>
    %cst_94 = arith.constant 3.200000e+01 : f32
    %393 = vector.broadcast %cst_94 : f32 to vector<16x1xf32>
    %394 = arith.divf %392, %393 : vector<16x1xf32>
    %395 = vector.broadcast %394 : vector<16x1xf32> to vector<16x32xf32>
    %396 = arith.subf %388, %395 : vector<16x32xf32>
    %397 = arith.mulf %396, %396 : vector<16x32xf32>
    %cst_95 = arith.constant dense<0.000000e+00> : vector<16xf32>
    %398 = vector.multi_reduction <add>, %397, %cst_95 [1] : vector<16x32xf32> to vector<16xf32>
    %399 = vector.shape_cast %398 : vector<16xf32> to vector<16x1xf32>
    %cst_96 = arith.constant 3.200000e+01 : f32
    %400 = vector.broadcast %cst_96 : f32 to vector<16x1xf32>
    %401 = arith.divf %399, %400 : vector<16x1xf32>
    %402 = vector.broadcast %394 : vector<16x1xf32> to vector<16x32xf32>
    %403 = arith.subf %388, %402 : vector<16x32xf32>
    %cst_97 = arith.constant 9.99999974E-6 : f32
    %404 = vector.broadcast %cst_97 : f32 to vector<16x1xf32>
    %405 = arith.addf %401, %404 : vector<16x1xf32>
    %406 = math.rsqrt %405 : vector<16x1xf32>
    %407 = vector.broadcast %406 : vector<16x1xf32> to vector<16x32xf32>
    %408 = arith.mulf %403, %407 : vector<16x32xf32>
    %409 = vector.broadcast %389 : vector<1x32xf32> to vector<16x32xf32>
    %410 = arith.mulf %408, %409 : vector<16x32xf32>
    %411 = vector.broadcast %390 : vector<1x32xf32> to vector<16x32xf32>
    %412 = arith.addf %410, %411 : vector<16x32xf32>
    %413 = arith.truncf %412 : vector<16x32xf32> to vector<16x32xbf16>
    %414 = arith.index_cast %arg1 : i32 to index
    %c0_98 = arith.constant 0 : index
    %c0_99 = arith.constant 0 : index
    %415 = vector.load %arg10[%414, %c0_98, %c0_99] : memref<2x32x128xbf16, #tpu.memory_space<vmem>>, vector<1x32x128xbf16>
    %416 = vector.shape_cast %415 : vector<1x32x128xbf16> to vector<32x128xbf16>
    %cst_100 = arith.constant dense<0.000000e+00> : vector<16x128xf32>
    %417 = tpu.matmul %413, %416, %cst_100 {dimension_numbers = #tpu.dot_dimension_numbers<[1], [0], [0], [1], [0, 0, 1, 1], [], []>} : vector<16x32xbf16>, vector<32x128xbf16>, vector<16x128xf32> -> vector<16x128xf32>
    %418 = arith.index_cast %arg1 : i32 to index
    %c0_101 = arith.constant 0 : index
    %c0_102 = arith.constant 0 : index
    %419 = vector.load %arg13[%418, %c0_101, %c0_102] : memref<2x1x128xf32, #tpu.memory_space<vmem>>, vector<1x1x128xf32>
    %420 = vector.shape_cast %419 : vector<1x1x128xf32> to vector<1x128xf32>
    %421 = vector.broadcast %420 : vector<1x128xf32> to vector<16x128xf32>
    %422 = arith.addf %417, %421 : vector<16x128xf32>
    %cst_103 = arith.constant 0.000000e+00 : f32
    %423 = vector.broadcast %cst_103 : f32 to vector<16x128xf32>
    %424 = arith.maximumf %422, %423 : vector<16x128xf32>
    %425 = arith.truncf %424 : vector<16x128xf32> to vector<16x128xbf16>
    %426 = arith.index_cast %arg1 : i32 to index
    %c0_104 = arith.constant 0 : index
    %c0_105 = arith.constant 0 : index
    %427 = vector.load %arg11[%426, %c0_104, %c0_105] : memref<2x128x32xbf16, #tpu.memory_space<vmem>>, vector<1x128x32xbf16>
    %428 = vector.shape_cast %427 : vector<1x128x32xbf16> to vector<128x32xbf16>
    %cst_106 = arith.constant dense<0.000000e+00> : vector<16x32xf32>
    %429 = tpu.matmul %425, %428, %cst_106 {dimension_numbers = #tpu.dot_dimension_numbers<[1], [0], [0], [1], [0, 0, 1, 1], [], []>} : vector<16x128xbf16>, vector<128x32xbf16>, vector<16x32xf32> -> vector<16x32xf32>
    %430 = vector.extract_strided_slice %6 {offsets = [8, 0], sizes = [1, 32], strides = [1, 1]} : vector<15x32xf32> to vector<1x32xf32>
    %431 = vector.broadcast %430 : vector<1x32xf32> to vector<16x32xf32>
    %432 = arith.addf %429, %431 : vector<16x32xf32>
    %433 = arith.addf %412, %432 : vector<16x32xf32>
    %434 = vector.extract_strided_slice %6 {offsets = [13, 0], sizes = [1, 32], strides = [1, 1]} : vector<15x32xf32> to vector<1x32xf32>
    %435 = vector.extract_strided_slice %6 {offsets = [14, 0], sizes = [1, 32], strides = [1, 1]} : vector<15x32xf32> to vector<1x32xf32>
    %cst_107 = arith.constant dense<0.000000e+00> : vector<16xf32>
    %436 = vector.multi_reduction <add>, %433, %cst_107 [1] : vector<16x32xf32> to vector<16xf32>
    %437 = vector.shape_cast %436 : vector<16xf32> to vector<16x1xf32>
    %cst_108 = arith.constant 3.200000e+01 : f32
    %438 = vector.broadcast %cst_108 : f32 to vector<16x1xf32>
    %439 = arith.divf %437, %438 : vector<16x1xf32>
    %440 = vector.broadcast %439 : vector<16x1xf32> to vector<16x32xf32>
    %441 = arith.subf %433, %440 : vector<16x32xf32>
    %442 = arith.mulf %441, %441 : vector<16x32xf32>
    %cst_109 = arith.constant dense<0.000000e+00> : vector<16xf32>
    %443 = vector.multi_reduction <add>, %442, %cst_109 [1] : vector<16x32xf32> to vector<16xf32>
    %444 = vector.shape_cast %443 : vector<16xf32> to vector<16x1xf32>
    %cst_110 = arith.constant 3.200000e+01 : f32
    %445 = vector.broadcast %cst_110 : f32 to vector<16x1xf32>
    %446 = arith.divf %444, %445 : vector<16x1xf32>
    %447 = vector.broadcast %439 : vector<16x1xf32> to vector<16x32xf32>
    %448 = arith.subf %433, %447 : vector<16x32xf32>
    %cst_111 = arith.constant 9.99999974E-6 : f32
    %449 = vector.broadcast %cst_111 : f32 to vector<16x1xf32>
    %450 = arith.addf %446, %449 : vector<16x1xf32>
    %451 = math.rsqrt %450 : vector<16x1xf32>
    %452 = vector.broadcast %451 : vector<16x1xf32> to vector<16x32xf32>
    %453 = arith.mulf %448, %452 : vector<16x32xf32>
    %454 = vector.broadcast %434 : vector<1x32xf32> to vector<16x32xf32>
    %455 = arith.mulf %453, %454 : vector<16x32xf32>
    %456 = vector.broadcast %435 : vector<1x32xf32> to vector<16x32xf32>
    %457 = arith.addf %455, %456 : vector<16x32xf32>
    %c0_112 = arith.constant 0 : index
    %c0_113 = arith.constant 0 : index
    %458 = vector.load %arg16[%c0_112, %c0_113] : memref<16x32xf32, #tpu.memory_space<vmem>>, vector<16x32xf32>
    tpu.vector_store %arg16[%c0_112, %c0_113], %457 {strides = array<i32>} : memref<16x32xf32, #tpu.memory_space<vmem>>, vector<16x32xf32>,
    %c1_i32 = arith.constant 1 : i32
    %459 = arith.cmpi eq, %arg1, %c1_i32 : i32
    %460 = arith.extui %459 : i1 to i32
    %c0_i32_114 = arith.constant 0 : i32
    %461 = arith.cmpi ne, %460, %c0_i32_114 : i32
    scf.if %461 {
      %c0_115 = arith.constant 0 : index
      %c0_116 = arith.constant 0 : index
      %462 = vector.load %arg14[%c0_115, %c0_116] : memref<2x32xf32, #tpu.memory_space<vmem>>, vector<2x32xf32>
      %463 = vector.extract_strided_slice %462 {offsets = [0, 0], sizes = [1, 32], strides = [1, 1]} : vector<2x32xf32> to vector<1x32xf32>
      %464 = vector.extract_strided_slice %462 {offsets = [1, 0], sizes = [1, 32], strides = [1, 1]} : vector<2x32xf32> to vector<1x32xf32>
      %cst_117 = arith.constant dense<0.000000e+00> : vector<16xf32>
      %465 = vector.multi_reduction <add>, %457, %cst_117 [1] : vector<16x32xf32> to vector<16xf32>
      %466 = vector.shape_cast %465 : vector<16xf32> to vector<16x1xf32>
      %cst_118 = arith.constant 3.200000e+01 : f32
      %467 = vector.broadcast %cst_118 : f32 to vector<16x1xf32>
      %468 = arith.divf %466, %467 : vector<16x1xf32>
      %469 = vector.broadcast %468 : vector<16x1xf32> to vector<16x32xf32>
      %470 = arith.subf %457, %469 : vector<16x32xf32>
      %471 = arith.mulf %470, %470 : vector<16x32xf32>
      %cst_119 = arith.constant dense<0.000000e+00> : vector<16xf32>
      %472 = vector.multi_reduction <add>, %471, %cst_119 [1] : vector<16x32xf32> to vector<16xf32>
      %473 = vector.shape_cast %472 : vector<16xf32> to vector<16x1xf32>
      %cst_120 = arith.constant 3.200000e+01 : f32
      %474 = vector.broadcast %cst_120 : f32 to vector<16x1xf32>
      %475 = arith.divf %473, %474 : vector<16x1xf32>
      %476 = vector.broadcast %468 : vector<16x1xf32> to vector<16x32xf32>
      %477 = arith.subf %457, %476 : vector<16x32xf32>
      %cst_121 = arith.constant 9.99999974E-6 : f32
      %478 = vector.broadcast %cst_121 : f32 to vector<16x1xf32>
      %479 = arith.addf %475, %478 : vector<16x1xf32>
      %480 = math.rsqrt %479 : vector<16x1xf32>
      %481 = vector.broadcast %480 : vector<16x1xf32> to vector<16x32xf32>
      %482 = arith.mulf %477, %481 : vector<16x32xf32>
      %483 = vector.broadcast %463 : vector<1x32xf32> to vector<16x32xf32>
      %484 = arith.mulf %482, %483 : vector<16x32xf32>
      %485 = vector.broadcast %464 : vector<1x32xf32> to vector<16x32xf32>
      %486 = arith.addf %484, %485 : vector<16x32xf32>
      %487 = vector.shape_cast %486 : vector<16x32xf32> to vector<2x8x32xf32>
      %c0_122 = arith.constant 0 : index
      %c0_123 = arith.constant 0 : index
      %c0_124 = arith.constant 0 : index
      %488 = vector.load %arg15[%c0_122, %c0_123, %c0_124] : memref<2x8x32xf32, #tpu.memory_space<vmem>>, vector<2x8x32xf32>
      tpu.vector_store %arg15[%c0_122, %c0_123, %c0_124], %487 {strides = array<i32>} : memref<2x8x32xf32, #tpu.memory_space<vmem>>, vector<2x8x32xf32>,
    } else {
    }
    return
  }
  func.func @transform_0(%arg0: i32, %arg1: i32) -> (i32, i32) {
    %c0_i32 = arith.constant 0 : i32
    %c0_i32_0 = arith.constant 0 : i32
    %c0_i32_1 = arith.constant 0 : i32
    return %c0_i32, %c0_i32_0 : i32, i32
  }
  func.func @transform_1(%arg0: i32, %arg1: i32) -> (i32, i32, i32) {
    %c0_i32 = arith.constant 0 : i32
    %c0_i32_0 = arith.constant 0 : i32
    %c0_i32_1 = arith.constant 0 : i32
    return %arg0, %c0_i32, %c0_i32_0 : i32, i32, i32
  }
  func.func @transform_2(%arg0: i32, %arg1: i32) -> (i32, i32, i32) {
    %c0_i32 = arith.constant 0 : i32
    %c0_i32_0 = arith.constant 0 : i32
    %c0_i32_1 = arith.constant 0 : i32
    return %arg0, %c0_i32, %c0_i32_0 : i32, i32, i32
  }
  func.func @transform_3(%arg0: i32, %arg1: i32) -> (i32, i32, i32) {
    %c0_i32 = arith.constant 0 : i32
    %c0_i32_0 = arith.constant 0 : i32
    %c0_i32_1 = arith.constant 0 : i32
    %c0_i32_2 = arith.constant 0 : i32
    return %c0_i32, %c0_i32_0, %c0_i32_1 : i32, i32, i32
  }
  func.func @transform_4(%arg0: i32, %arg1: i32) -> (i32, i32, i32) {
    %c0_i32 = arith.constant 0 : i32
    %c0_i32_0 = arith.constant 0 : i32
    %c0_i32_1 = arith.constant 0 : i32
    %c0_i32_2 = arith.constant 0 : i32
    return %c0_i32, %c0_i32_0, %c0_i32_1 : i32, i32, i32
  }
  func.func @transform_5(%arg0: i32, %arg1: i32) -> (i32, i32, i32) {
    %c0_i32 = arith.constant 0 : i32
    %c0_i32_0 = arith.constant 0 : i32
    %c0_i32_1 = arith.constant 0 : i32
    %c0_i32_2 = arith.constant 0 : i32
    return %c0_i32, %c0_i32_0, %c0_i32_1 : i32, i32, i32
  }
  func.func @transform_6(%arg0: i32, %arg1: i32) -> (i32, i32, i32) {
    %c0_i32 = arith.constant 0 : i32
    %c0_i32_0 = arith.constant 0 : i32
    %c0_i32_1 = arith.constant 0 : i32
    %c0_i32_2 = arith.constant 0 : i32
    return %c0_i32, %c0_i32_0, %c0_i32_1 : i32, i32, i32
  }
  func.func @transform_7(%arg0: i32, %arg1: i32) -> (i32, i32, i32) {
    %c0_i32 = arith.constant 0 : i32
    %c0_i32_0 = arith.constant 0 : i32
    %c0_i32_1 = arith.constant 0 : i32
    %c0_i32_2 = arith.constant 0 : i32
    return %c0_i32, %c0_i32_0, %c0_i32_1 : i32, i32, i32
  }
  func.func @transform_8(%arg0: i32, %arg1: i32) -> (i32, i32, i32) {
    %c0_i32 = arith.constant 0 : i32
    %c0_i32_0 = arith.constant 0 : i32
    %c0_i32_1 = arith.constant 0 : i32
    %c0_i32_2 = arith.constant 0 : i32
    return %c0_i32, %c0_i32_0, %c0_i32_1 : i32, i32, i32
  }
  func.func @transform_9(%arg0: i32, %arg1: i32) -> (i32, i32, i32) {
    %c0_i32 = arith.constant 0 : i32
    %c0_i32_0 = arith.constant 0 : i32
    %c0_i32_1 = arith.constant 0 : i32
    %c0_i32_2 = arith.constant 0 : i32
    return %c0_i32, %c0_i32_0, %c0_i32_1 : i32, i32, i32
  }
  func.func @transform_10(%arg0: i32, %arg1: i32) -> (i32, i32, i32) {
    %c0_i32 = arith.constant 0 : i32
    %c0_i32_0 = arith.constant 0 : i32
    %c0_i32_1 = arith.constant 0 : i32
    %c0_i32_2 = arith.constant 0 : i32
    return %c0_i32, %c0_i32_0, %c0_i32_1 : i32, i32, i32
  }
  func.func @transform_11(%arg0: i32, %arg1: i32) -> (i32, i32, i32) {
    %c0_i32 = arith.constant 0 : i32
    %c0_i32_0 = arith.constant 0 : i32
    %c0_i32_1 = arith.constant 0 : i32
    %c0_i32_2 = arith.constant 0 : i32
    return %c0_i32, %c0_i32_0, %c0_i32_1 : i32, i32, i32
  }
  func.func @transform_12(%arg0: i32, %arg1: i32) -> (i32, i32) {
    %c0_i32 = arith.constant 0 : i32
    %c0_i32_0 = arith.constant 0 : i32
    %c0_i32_1 = arith.constant 0 : i32
    return %c0_i32, %c0_i32_0 : i32, i32
  }
  func.func @transform_13(%arg0: i32, %arg1: i32) -> (i32, i32, i32) {
    %c0_i32 = arith.constant 0 : i32
    %c0_i32_0 = arith.constant 0 : i32
    %c0_i32_1 = arith.constant 0 : i32
    return %arg0, %c0_i32, %c0_i32_0 : i32, i32, i32
  }
}

</mosaic_0001>

<llo_original>
// kernel: stacked_decoder_pallas.1
$region0: #{stacked_decoder_pallas.1}
  #allocation0 [shape = 'u32[]', space=smem, size = 0x4, offset = 0x4, fixed_abs, tag = 'smem constant byte address 0x4 - core index']
  #allocation1 [shape = 'u32[144,128]{1,0:T(1,128)}', space=vmem, size = 0x12000, scoped, tag = 'internal scratch']
  #allocation2 [shape = 'f32[16,32]{1,0:T(8,128)}', space=vmem, size = 0x2000, scoped, tag = 'scratch operand']
  %s0 = inlined_call_operand.hbm [shape: f32[8,32], index: 0, kind: input, shape index: {}]
  %s1 = inlined_call_operand.hbm [shape: bf16[4,128,32], index: 1, kind: input, shape index: {}]
  %s2 = inlined_call_operand.hbm [shape: f32[4,1,128], index: 2, kind: input, shape index: {}]
  %s3 = inlined_call_operand.hbm [shape: bf16[2,32,96], index: 3, kind: input, shape index: {}]
  %s4 = inlined_call_operand.hbm [shape: bf16[2,32,32], index: 4, kind: input, shape index: {}]
  %s5 = inlined_call_operand.hbm [shape: bf16[2,32,32], index: 5, kind: input, shape index: {}]
  %s6 = inlined_call_operand.hbm [shape: bf16[2,32,64], index: 6, kind: input, shape index: {}]
  %s7 = inlined_call_operand.hbm [shape: bf16[2,32,32], index: 7, kind: input, shape index: {}]
  %s8 = inlined_call_operand.hbm [shape: bf16[2,32,128], index: 8, kind: input, shape index: {}]
  %s9 = inlined_call_operand.hbm [shape: bf16[2,128,32], index: 9, kind: input, shape index: {}]
  %s10 = inlined_call_operand.hbm [shape: f32[2,15,32], index: 10, kind: input, shape index: {}]
  %s11 = inlined_call_operand.hbm [shape: f32[2,1,128], index: 11, kind: input, shape index: {}]
  %s12 = inlined_call_operand.hbm [shape: f32[2,32], index: 12, kind: input, shape index: {}]
  %s13 = inlined_call_operand.hbm [shape: f32[4,8,32], index: 13, kind: output, shape index: {}]
  %s14 = sld [smem:[#allocation0]]
  $region145: #{stacked_decoder_pallas.1} parent=0
    _
  %s16 = ssub.s32 1, %s14
  %s17 = scalar_select 0, %s16, %s14
  $region1: #{stacked_decoder_pallas.1} parent=0
    #allocation3 [shape = 'u8[4096]{0}', space=vmem, size = 0x1000, scoped, tag = 'input window, operand 0, single buffered']
    #allocation4 [shape = 's32[2]{0}', space=sflag, size = 0x8, scoped, tag = 'scoped memory for stacked_decoder_pallas.1']
    #allocation5 [shape = 's32[2]{0}', space=sflag, size = 0x8, scoped, tag = 'scoped memory for stacked_decoder_pallas.1']
    #allocation6 [shape = 'u8[131072]{0}', space=vmem, size = 0x20000, scoped, tag = 'input window, operand 1']
    #allocation7 [shape = 's32[2]{0}', space=sflag, size = 0x8, scoped, tag = 'scoped memory for stacked_decoder_pallas.1']
    #allocation8 [shape = 'u8[2048]{0}', space=vmem, size = 0x800, scoped, tag = 'input window, operand 2']
    #allocation9 [shape = 'u8[16384]{0}', space=vmem, size = 0x4000, scoped, tag = 'input window, operand 3, single buffered']
    #allocation10 [shape = 's32[1]{0}', space=sflag, size = 0x4, scoped, tag = 'scoped memory for stacked_decoder_pallas.1']
    #allocation11 [shape = 'u8[16384]{0}', space=vmem, size = 0x4000, scoped, tag = 'input window, operand 4, single buffered']
    #allocation12 [shape = 'u8[16384]{0}', space=vmem, size = 0x4000, scoped, tag = 'input window, operand 5, single buffered']
    #allocation13 [shape = 's32[1]{0}', space=sflag, size = 0x4, scoped, tag = 'scoped memory for stacked_decoder_pallas.1']
    #allocation14 [shape = 'u8[16384]{0}', space=vmem, size = 0x4000, scoped, tag = 'input window, operand 6, single buffered']
    #allocation15 [shape = 'u8[16384]{0}', space=vmem, size = 0x4000, scoped, tag = 'input window, operand 7, single buffered']
    #allocation16 [shape = 's32[1]{0}', space=sflag, size = 0x4, scoped, tag = 'scoped memory for stacked_decoder_pallas.1']
    #allocation17 [shape = 'u8[16384]{0}', space=vmem, size = 0x4000, scoped, tag = 'input window, operand 8, single buffered']
    #allocation18 [shape = 'u8[65536]{0}', space=vmem, size = 0x10000, scoped, tag = 'input window, operand 9, single buffered']
    #allocation19 [shape = 's32[1]{0}', space=sflag, size = 0x4, scoped, tag = 'scoped memory for stacked_decoder_pallas.1']
    #allocation20 [shape = 'u8[16384]{0}', space=vmem, size = 0x4000, scoped, tag = 'input window, operand 10, single buffered']
    #allocation21 [shape = 'u8[1024]{0}', space=vmem, size = 0x400, scoped, tag = 'input window, operand 11, single buffered']
    #allocation22 [shape = 's32[1]{0}', space=sflag, size = 0x4, scoped, tag = 'scoped memory for stacked_decoder_pallas.1']
    #allocation23 [shape = 'u8[1024]{0}', space=vmem, size = 0x400, scoped, tag = 'input window, operand 12, single buffered']
    #allocation24 [shape = 'u8[16384]{0}', space=vmem, size = 0x4000, scoped, tag = 'output window, operand 0']
    %18 = vsyncpa [#allocation4], 0
    %19 = vsyncpa [#allocation7], 0
    %s20 = scalar_lea.sflag [#allocation7], 1
    %21 = vsyncpa %s20, 0
    %22 = vsyncpa [#allocation10], 0
    %23 = vsyncpa [#allocation13], 0
    %24 = vsyncpa [#allocation16], 0
    %25 = vsyncpa [#allocation19], 0
    %26 = vsyncpa [#allocation22], 0
    %27 = vsyncpa [#allocation5], 0
    %s28 = scalar_lea.sflag [#allocation5], 1
    %29 = vsyncpa %s28, 0
    loop: start=0, step=1, limit=6
    $region2: #{stacked_decoder_pallas.1} parent=1 // loop_pre_header
      _
    $region3: #{stacked_decoder_pallas.1} parent=1 // loop_header
      %s31 = sphi 0, %s35
      %p32 = scmp.ge.s32.totalorder %s31, 6
      %s38 = sphi 0, %s50
      %s39 = sphi 0, %s46
      %s40 = sphi 0, %s38
      %s41 = sphi 0, %s39
      %s42 = sphi 0, %s40
      %s43 = sphi 0, %s41
      %s51 = sphi 0, %s51
      %s53 = sphi 0, %s51
      %s54 = sphi 0, %s53
      %s68 = sphi 0, %s54
      %s74 = sphi 0, %s76
      %s77 = sphi 0, %s74
      %s78 = sphi 0, %s77
      %s94 = sphi 0, %s78
      %s100 = sphi 0, %s102
      %s103 = sphi 0, %s100
      %s104 = sphi 0, %s103
      %s120 = sphi 0, %s104
      %s124 = sphi 0, %s124
      %s126 = sphi 0, %s124
      %s127 = sphi 0, %s126
      %s141 = sphi 0, %s127
      %s145 = sphi 0, %s145
      %s147 = sphi 0, %s145
      %s148 = sphi 0, %s147
      %s162 = sphi 0, %s148
      %s166 = sphi 0, %s166
      %s168 = sphi 0, %s166
      %s169 = sphi 0, %s168
      %s183 = sphi 0, %s169
      %s187 = sphi 0, %s187
      %s189 = sphi 0, %s187
      %s190 = sphi 0, %s189
      %s204 = sphi 0, %s190
      %s208 = sphi 0, %s208
      %s210 = sphi 0, %s208
      %s211 = sphi 0, %s210
      %s225 = sphi 0, %s211
      %s229 = sphi 0, %s229
      %s231 = sphi 0, %s229
      %s232 = sphi 0, %s231
      %s246 = sphi 0, %s232
      %s250 = sphi 0, %s250
      %s252 = sphi 0, %s250
      %s253 = sphi 0, %s252
      %s267 = sphi 0, %s253
      %s271 = sphi 0, %s271
      %s273 = sphi 0, %s271
      %s274 = sphi 0, %s273
      %s288 = sphi 0, %s274
      %s292 = sphi 0, %s292
      %s294 = sphi 0, %s292
      %s295 = sphi 0, %s294
      %s309 = sphi 0, %s295
      %s313 = sphi 0, %s313
      %s315 = sphi 0, %s313
      %s316 = sphi 0, %s315
      %s330 = sphi 0, %s316
      %s336 = sphi 0, %s338
      %s339 = sphi 0, %s336
      %s340 = sphi 0, %s339
      %s356 = sphi 0, %s340
    $region4: #{stacked_decoder_pallas.1} parent=1 // loop_header_branch
      %34 = sbr.rel (%p32) target = $region8
    $region5: #{stacked_decoder_pallas.1} parent=1 // loop_body
      %s36 = ssub.s32 %s31, 1
      %s37 = ssub.s32 %s31, 2
      %s44 = sadd.s32 1, %s39
      %p45 = scmp.ge.s32.totalorder %s44, 2
      %s46 = scalar_select %p45, 0, %s44
      %s47 = sadd.s32 1, %s38
      %s48 = scalar_select %p45, %s47, %s38
      %p49 = scmp.ge.s32.totalorder %s48, 2
      %s50 = scalar_select %p49, 0, %s48
      %s52 = sadd.s32 %s51, 1
      %p55 = scmp.eq.s32.totalorder %s31, 3
      %p56 = scmp.ne.s32.totalorder %s51, %s53
      %p57 = scmp.eq.s32.totalorder %s31, 0
      %p58 = por %p56, %p57
      %p59 = scmp.ne.s32.totalorder %s51, %s53
      %p60 = scmp.eq.s32.totalorder %s36, 3
      %p61 = por %p59, %p60
      %p62 = scmp.ne.s32.totalorder %s53, %s54
      %p63 = scmp.eq.s32.totalorder %s36, 0
      %p64 = por %p62, %p63
      %p65 = scmp.ne.s32.totalorder %s53, %s54
      %p66 = scmp.eq.s32.totalorder %s37, 3
      %p67 = por %p65, %p66
      %p69 = scmp.ne.s32.totalorder %s54, %s68
      %p70 = scmp.eq.s32.totalorder %s37, 0
      %p71 = por %p69, %p70
      %s72 = ssub.s32 %s38, %s50
      %p73 = scmp.eq.s32.totalorder %s72, 0
      %s75 = sadd.s32 %s74, 1
      %s76 = scalar_select %p73, %s74, %s75
      %p79 = pneg %p73
      %p80 = scmp.eq.s32.totalorder %s31, 3
      %p81 = por %p79, %p80
      %p82 = scmp.ne.s32.totalorder %s74, %s77
      %p83 = scmp.eq.s32.totalorder %s31, 0
      %p84 = por %p82, %p83
      %p85 = scmp.ne.s32.totalorder %s74, %s77
      %p86 = scmp.eq.s32.totalorder %s36, 3
      %p87 = por %p85, %p86
      %p88 = scmp.ne.s32.totalorder %s77, %s78
      %p89 = scmp.eq.s32.totalorder %s36, 0
      %p90 = por %p88, %p89
      %p91 = scmp.ne.s32.totalorder %s77, %s78
      %p92 = scmp.eq.s32.totalorder %s37, 3
      %p93 = por %p91, %p92
      %p95 = scmp.ne.s32.totalorder %s78, %s94
      %p96 = scmp.eq.s32.totalorder %s37, 0
      %p97 = por %p95, %p96
      %s98 = ssub.s32 %s38, %s50
      %p99 = scmp.eq.s32.totalorder %s98, 0
      %s101 = sadd.s32 %s100, 1
      %s102 = scalar_select %p99, %s100, %s101
      %p105 = pneg %p99
      %p106 = scmp.eq.s32.totalorder %s31, 3
      %p107 = por %p105, %p106
      %p108 = scmp.ne.s32.totalorder %s100, %s103
      %p109 = scmp.eq.s32.totalorder %s31, 0
      %p110 = por %p108, %p109
      %p111 = scmp.ne.s32.totalorder %s100, %s103
      %p112 = scmp.eq.s32.totalorder %s36, 3
      %p113 = por %p111, %p112
      %p114 = scmp.ne.s32.totalorder %s103, %s104
      %p115 = scmp.eq.s32.totalorder %s36, 0
      %p116 = por %p114, %p115
      %p117 = scmp.ne.s32.totalorder %s103, %s104
      %p118 = scmp.eq.s32.totalorder %s37, 3
      %p119 = por %p117, %p118
      %p121 = scmp.ne.s32.totalorder %s104, %s120
      %p122 = scmp.eq.s32.totalorder %s37, 0
      %p123 = por %p121, %p122
      %s125 = sadd.s32 %s124, 1
      %p128 = scmp.eq.s32.totalorder %s31, 3
      %p129 = scmp.ne.s32.totalorder %s124, %s126
      %p130 = scmp.eq.s32.totalorder %s31, 0
      %p131 = por %p129, %p130
      %p132 = scmp.ne.s32.totalorder %s124, %s126
      %p133 = scmp.eq.s32.totalorder %s36, 3
      %p134 = por %p132, %p133
      %p135 = scmp.ne.s32.totalorder %s126, %s127
      %p136 = scmp.eq.s32.totalorder %s36, 0
      %p137 = por %p135, %p136
      %p138 = scmp.ne.s32.totalorder %s126, %s127
      %p139 = scmp.eq.s32.totalorder %s37, 3
      %p140 = por %p138, %p139
      %p142 = scmp.ne.s32.totalorder %s127, %s141
      %p143 = scmp.eq.s32.totalorder %s37, 0
      %p144 = por %p142, %p143
      %s146 = sadd.s32 %s145, 1
      %p149 = scmp.eq.s32.totalorder %s31, 3
      %p150 = scmp.ne.s32.totalorder %s145, %s147
      %p151 = scmp.eq.s32.totalorder %s31, 0
      %p152 = por %p150, %p151
      %p153 = scmp.ne.s32.totalorder %s145, %s147
      %p154 = scmp.eq.s32.totalorder %s36, 3
      %p155 = por %p153, %p154
      %p156 = scmp.ne.s32.totalorder %s147, %s148
      %p157 = scmp.eq.s32.totalorder %s36, 0
      %p158 = por %p156, %p157
      %p159 = scmp.ne.s32.totalorder %s147, %s148
      %p160 = scmp.eq.s32.totalorder %s37, 3
      %p161 = por %p159, %p160
      %p163 = scmp.ne.s32.totalorder %s148, %s162
      %p164 = scmp.eq.s32.totalorder %s37, 0
      %p165 = por %p163, %p164
      %s167 = sadd.s32 %s166, 1
      %p170 = scmp.eq.s32.totalorder %s31, 3
      %p171 = scmp.ne.s32.totalorder %s166, %s168
      %p172 = scmp.eq.s32.totalorder %s31, 0
      %p173 = por %p171, %p172
      %p174 = scmp.ne.s32.totalorder %s166, %s168
      %p175 = scmp.eq.s32.totalorder %s36, 3
      %p176 = por %p174, %p175
      %p177 = scmp.ne.s32.totalorder %s168, %s169
      %p178 = scmp.eq.s32.totalorder %s36, 0
      %p179 = por %p177, %p178
      %p180 = scmp.ne.s32.totalorder %s168, %s169
      %p181 = scmp.eq.s32.totalorder %s37, 3
      %p182 = por %p180, %p181
      %p184 = scmp.ne.s32.totalorder %s169, %s183
      %p185 = scmp.eq.s32.totalorder %s37, 0
      %p186 = por %p184, %p185
      %s188 = sadd.s32 %s187, 1
      %p191 = scmp.eq.s32.totalorder %s31, 3
      %p192 = scmp.ne.s32.totalorder %s187, %s189
      %p193 = scmp.eq.s32.totalorder %s31, 0
      %p194 = por %p192, %p193
      %p195 = scmp.ne.s32.totalorder %s187, %s189
      %p196 = scmp.eq.s32.totalorder %s36, 3
      %p197 = por %p195, %p196
      %p198 = scmp.ne.s32.totalorder %s189, %s190
      %p199 = scmp.eq.s32.totalorder %s36, 0
      %p200 = por %p198, %p199
      %p201 = scmp.ne.s32.totalorder %s189, %s190
      %p202 = scmp.eq.s32.totalorder %s37, 3
      %p203 = por %p201, %p202
      %p205 = scmp.ne.s32.totalorder %s190, %s204
      %p206 = scmp.eq.s32.totalorder %s37, 0
      %p207 = por %p205, %p206
      %s209 = sadd.s32 %s208, 1
      %p212 = scmp.eq.s32.totalorder %s31, 3
      %p213 = scmp.ne.s32.totalorder %s208, %s210
      %p214 = scmp.eq.s32.totalorder %s31, 0
      %p215 = por %p213, %p214
      %p216 = scmp.ne.s32.totalorder %s208, %s210
      %p217 = scmp.eq.s32.totalorder %s36, 3
      %p218 = por %p216, %p217
      %p219 = scmp.ne.s32.totalorder %s210, %s211
      %p220 = scmp.eq.s32.totalorder %s36, 0
      %p221 = por %p219, %p220
      %p222 = scmp.ne.s32.totalorder %s210, %s211
      %p223 = scmp.eq.s32.totalorder %s37, 3
      %p224 = por %p222, %p223
      %p226 = scmp.ne.s32.totalorder %s211, %s225
      %p227 = scmp.eq.s32.totalorder %s37, 0
      %p228 = por %p226, %p227
      %s230 = sadd.s32 %s229, 1
      %p233 = scmp.eq.s32.totalorder %s31, 3
      %p234 = scmp.ne.s32.totalorder %s229, %s231
      %p235 = scmp.eq.s32.totalorder %s31, 0
      %p236 = por %p234, %p235
      %p237 = scmp.ne.s32.totalorder %s229, %s231
      %p238 = scmp.eq.s32.totalorder %s36, 3
      %p239 = por %p237, %p238
      %p240 = scmp.ne.s32.totalorder %s231, %s232
      %p241 = scmp.eq.s32.totalorder %s36, 0
      %p242 = por %p240, %p241
      %p243 = scmp.ne.s32.totalorder %s231, %s232
      %p244 = scmp.eq.s32.totalorder %s37, 3
      %p245 = por %p243, %p244
      %p247 = scmp.ne.s32.totalorder %s232, %s246
      %p248 = scmp.eq.s32.totalorder %s37, 0
      %p249 = por %p247, %p248
      %s251 = sadd.s32 %s250, 1
      %p254 = scmp.eq.s32.totalorder %s31, 3
      %p255 = scmp.ne.s32.totalorder %s250, %s252
      %p256 = scmp.eq.s32.totalorder %s31, 0
      %p257 = por %p255, %p256
      %p258 = scmp.ne.s32.totalorder %s250, %s252
      %p259 = scmp.eq.s32.totalorder %s36, 3
      %p260 = por %p258, %p259
      %p261 = scmp.ne.s32.totalorder %s252, %s253
      %p262 = scmp.eq.s32.totalorder %s36, 0
      %p263 = por %p261, %p262
      %p264 = scmp.ne.s32.totalorder %s252, %s253
      %p265 = scmp.eq.s32.totalorder %s37, 3
      %p266 = por %p264, %p265
      %p268 = scmp.ne.s32.totalorder %s253, %s267
      %p269 = scmp.eq.s32.totalorder %s37, 0
      %p270 = por %p268, %p269
      %s272 = sadd.s32 %s271, 1
      %p275 = scmp.eq.s32.totalorder %s31, 3
      %p276 = scmp.ne.s32.totalorder %s271, %s273
      %p277 = scmp.eq.s32.totalorder %s31, 0
      %p278 = por %p276, %p277
      %p279 = scmp.ne.s32.totalorder %s271, %s273
      %p280 = scmp.eq.s32.totalorder %s36, 3
      %p281 = por %p279, %p280
      %p282 = scmp.ne.s32.totalorder %s273, %s274
      %p283 = scmp.eq.s32.totalorder %s36, 0
      %p284 = por %p282, %p283
      %p285 = scmp.ne.s32.totalorder %s273, %s274
      %p286 = scmp.eq.s32.totalorder %s37, 3
      %p287 = por %p285, %p286
      %p289 = scmp.ne.s32.totalorder %s274, %s288
      %p290 = scmp.eq.s32.totalorder %s37, 0
      %p291 = por %p289, %p290
      %s293 = sadd.s32 %s292, 1
      %p296 = scmp.eq.s32.totalorder %s31, 3
      %p297 = scmp.ne.s32.totalorder %s292, %s294
      %p298 = scmp.eq.s32.totalorder %s31, 0
      %p299 = por %p297, %p298
      %p300 = scmp.ne.s32.totalorder %s292, %s294
      %p301 = scmp.eq.s32.totalorder %s36, 3
      %p302 = por %p300, %p301
      %p303 = scmp.ne.s32.totalorder %s294, %s295
      %p304 = scmp.eq.s32.totalorder %s36, 0
      %p305 = por %p303, %p304
      %p306 = scmp.ne.s32.totalorder %s294, %s295
      %p307 = scmp.eq.s32.totalorder %s37, 3
      %p308 = por %p306, %p307
      %p310 = scmp.ne.s32.totalorder %s295, %s309
      %p311 = scmp.eq.s32.totalorder %s37, 0
      %p312 = por %p310, %p311
      %s314 = sadd.s32 %s313, 1
      %p317 = scmp.eq.s32.totalorder %s31, 3
      %p318 = scmp.ne.s32.totalorder %s313, %s315
      %p319 = scmp.eq.s32.totalorder %s31, 0
      %p320 = por %p318, %p319
      %p321 = scmp.ne.s32.totalorder %s313, %s315
      %p322 = scmp.eq.s32.totalorder %s36, 3
      %p323 = por %p321, %p322
      %p324 = scmp.ne.s32.totalorder %s315, %s316
      %p325 = scmp.eq.s32.totalorder %s36, 0
      %p326 = por %p324, %p325
      %p327 = scmp.ne.s32.totalorder %s315, %s316
      %p328 = scmp.eq.s32.totalorder %s37, 3
      %p329 = por %p327, %p328
      %p331 = scmp.ne.s32.totalorder %s316, %s330
      %p332 = scmp.eq.s32.totalorder %s37, 0
      %p333 = por %p331, %p332
      %s334 = ssub.s32 %s38, %s50
      %p335 = scmp.eq.s32.totalorder %s334, 0
      %s337 = sadd.s32 %s336, 1
      %s338 = scalar_select %p335, %s336, %s337
      %p341 = pneg %p335
      %p342 = scmp.eq.s32.totalorder %s31, 3
      %p343 = por %p341, %p342
      %p344 = scmp.ne.s32.totalorder %s336, %s339
      %p345 = scmp.eq.s32.totalorder %s31, 0
      %p346 = por %p344, %p345
      %p347 = scmp.ne.s32.totalorder %s336, %s339
      %p348 = scmp.eq.s32.totalorder %s36, 3
      %p349 = por %p347, %p348
      %p350 = scmp.ne.s32.totalorder %s339, %s340
      %p351 = scmp.eq.s32.totalorder %s36, 0
      %p352 = por %p350, %p351
      %p353 = scmp.ne.s32.totalorder %s339, %s340
      %p354 = scmp.eq.s32.totalorder %s37, 3
      %p355 = por %p353, %p354
      %p357 = scmp.ne.s32.totalorder %s340, %s356
      %p358 = scmp.eq.s32.totalorder %s37, 0
      %p359 = por %p357, %p358
      %p360 = scmp.le.s32.totalorder 1, %s31
      %p361 = scmp.lt.s32.totalorder %s31, 5
      %p362 = pnand %p360, %p361
      %p363 = pneg %p362
      // Predicated region
      $region9: #{stacked_decoder_pallas.1} parent=5 // pred_check
        _
      $region10: #{stacked_decoder_pallas.1} parent=5 // pred_check_branch
        %365 = sbr.rel (%p362) target = $region12
      $region11: #{stacked_decoder_pallas.1} parent=5 // pred_region
        %s366 = ssub.s32 %s31, 1
        // Predicated region
        $region13: #{stacked_decoder_pallas.1} parent=11 // pred_check
          %p367 = pneg %p64
        $region14: #{stacked_decoder_pallas.1} parent=11 // pred_check_branch
          %369 = sbr.rel (%p367) target = $region16
        $region15: #{stacked_decoder_pallas.1} parent=11 // pred_region
          %s371 = ssub.s32 128, 128
          %372 = vsyncadd [#allocation4], %s371
          %s374 = sshll.u32 [#allocation3], 4
          %s375 = int_to_ptr.vmem [resolvable:$true] %s374
          %377 = dma.hbm_to_vmem [thread:$0]  %s0, 128, %s375, [#allocation4]
        $region16: #{stacked_decoder_pallas.1} parent=11 // pred_fallthru
          _
        // Predicated region
        $region17: #{stacked_decoder_pallas.1} parent=11 // pred_check
          %p378 = pneg %p137
        $region18: #{stacked_decoder_pallas.1} parent=11 // pred_check_branch
          %380 = sbr.rel (%p378) target = $region20
        $region19: #{stacked_decoder_pallas.1} parent=11 // pred_region
          %s382 = ssub.s32 512, 512
          %383 = vsyncadd [#allocation10], %s382
          %s384 = sshll.u32 [#allocation9], 4
          %s385 = int_to_ptr.vmem [resolvable:$true] %s384
          %390 = dma.hbm_to_vmem [thread:$0]  %s3, 512, %s385, [#allocation10], 64, 64, 4
        $region20: #{stacked_decoder_pallas.1} parent=11 // pred_fallthru
          _
        // Predicated region
        $region21: #{stacked_decoder_pallas.1} parent=11 // pred_check
          %p391 = pneg %p158
        $region22: #{stacked_decoder_pallas.1} parent=11 // pred_check_branch
          %393 = sbr.rel (%p391) target = $region24
        $region23: #{stacked_decoder_pallas.1} parent=11 // pred_region
          %s395 = ssub.s32 512, 512
          %396 = vsyncadd [#allocation10], %s395
          %s397 = sshll.u32 [#allocation11], 4
          %s398 = int_to_ptr.vmem [resolvable:$true] %s397
          %403 = dma.hbm_to_vmem [thread:$0]  %s4, 512, %s398, [#allocation10], 64, 64, 4
        $region24: #{stacked_decoder_pallas.1} parent=11 // pred_fallthru
          _
        // Predicated region
        $region25: #{stacked_decoder_pallas.1} parent=11 // pred_check
          %p404 = pneg %p179
        $region26: #{stacked_decoder_pallas.1} parent=11 // pred_check_branch
          %406 = sbr.rel (%p404) target = $region28
        $region27: #{stacked_decoder_pallas.1} parent=11 // pred_region
          %s408 = ssub.s32 512, 512
          %409 = vsyncadd [#allocation13], %s408
          %s410 = sshll.u32 [#allocation12], 4
          %s411 = int_to_ptr.vmem [resolvable:$true] %s410
          %416 = dma.hbm_to_vmem [thread:$0]  %s5, 512, %s411, [#allocation13], 64, 64, 4
        $region28: #{stacked_decoder_pallas.1} parent=11 // pred_fallthru
          _
        // Predicated region
        $region29: #{stacked_decoder_pallas.1} parent=11 // pred_check
          %p417 = pneg %p200
        $region30: #{stacked_decoder_pallas.1} parent=11 // pred_check_branch
          %419 = sbr.rel (%p417) target = $region32
        $region31: #{stacked_decoder_pallas.1} parent=11 // pred_region
          %s421 = ssub.s32 512, 512
          %422 = vsyncadd [#allocation13], %s421
          %s423 = sshll.u32 [#allocation14], 4
          %s424 = int_to_ptr.vmem [resolvable:$true] %s423
          %429 = dma.hbm_to_vmem [thread:$0]  %s6, 512, %s424, [#allocation13], 64, 64, 4
        $region32: #{stacked_decoder_pallas.1} parent=11 // pred_fallthru
          _
        // Predicated region
        $region33: #{stacked_decoder_pallas.1} parent=11 // pred_check
          %p430 = pneg %p221
        $region34: #{stacked_decoder_pallas.1} parent=11 // pred_check_branch
          %432 = sbr.rel (%p430) target = $region36
        $region35: #{stacked_decoder_pallas.1} parent=11 // pred_region
          %s434 = ssub.s32 512, 512
          %435 = vsyncadd [#allocation16], %s434
          %s436 = sshll.u32 [#allocation15], 4
          %s437 = int_to_ptr.vmem [resolvable:$true] %s436
          %442 = dma.hbm_to_vmem [thread:$0]  %s7, 512, %s437, [#allocation16], 64, 64, 4
        $region36: #{stacked_decoder_pallas.1} parent=11 // pred_fallthru
          _
        // Predicated region
        $region37: #{stacked_decoder_pallas.1} parent=11 // pred_check
          %p443 = pneg %p242
        $region38: #{stacked_decoder_pallas.1} parent=11 // pred_check_branch
          %445 = sbr.rel (%p443) target = $region40
        $region39: #{stacked_decoder_pallas.1} parent=11 // pred_region
          %s447 = ssub.s32 512, 512
          %448 = vsyncadd [#allocation16], %s447
          %s449 = sshll.u32 [#allocation17], 4
          %s450 = int_to_ptr.vmem [resolvable:$true] %s449
          %455 = dma.hbm_to_vmem [thread:$0]  %s8, 512, %s450, [#allocation16], 64, 64, 4
        $region40: #{stacked_decoder_pallas.1} parent=11 // pred_fallthru
          _
        // Predicated region
        $region41: #{stacked_decoder_pallas.1} parent=11 // pred_check
          %p456 = pneg %p263
        $region42: #{stacked_decoder_pallas.1} parent=11 // pred_check_branch
          %458 = sbr.rel (%p456) target = $region44
        $region43: #{stacked_decoder_pallas.1} parent=11 // pred_region
          %s460 = ssub.s32 2048, 2048
          %461 = vsyncadd [#allocation19], %s460
          %s462 = sshll.u32 [#allocation18], 4
          %s463 = int_to_ptr.vmem [resolvable:$true] %s462
          %468 = dma.hbm_to_vmem [thread:$0]  %s9, 2048, %s463, [#allocation19], 64, 64, 4
        $region44: #{stacked_decoder_pallas.1} parent=11 // pred_fallthru
          _
        // Predicated region
        $region45: #{stacked_decoder_pallas.1} parent=11 // pred_check
          %p469 = pneg %p284
        $region46: #{stacked_decoder_pallas.1} parent=11 // pred_check_branch
          %471 = sbr.rel (%p469) target = $region48
        $region47: #{stacked_decoder_pallas.1} parent=11 // pred_region
          %s473 = ssub.s32 512, 512
          %474 = vsyncadd [#allocation19], %s473
          %s475 = sshll.u32 [#allocation20], 4
          %s476 = int_to_ptr.vmem [resolvable:$true] %s475
          %481 = dma.hbm_to_vmem [thread:$0]  %s10, 512, %s476, [#allocation19], 128, 128, 8
        $region48: #{stacked_decoder_pallas.1} parent=11 // pred_fallthru
          _
        // Predicated region
        $region49: #{stacked_decoder_pallas.1} parent=11 // pred_check
          %p482 = pneg %p305
        $region50: #{stacked_decoder_pallas.1} parent=11 // pred_check_branch
          %484 = sbr.rel (%p482) target = $region52
        $region51: #{stacked_decoder_pallas.1} parent=11 // pred_region
          %s486 = ssub.s32 32, 32
          %487 = vsyncadd [#allocation22], %s486
          %s488 = sshll.u32 [#allocation21], 4
          %s489 = int_to_ptr.vmem [resolvable:$true] %s488
          %494 = dma.hbm_to_vmem [thread:$0]  %s11, 32, %s489, [#allocation22], 16, 16, 1
        $region52: #{stacked_decoder_pallas.1} parent=11 // pred_fallthru
          _
        // Predicated region
        $region53: #{stacked_decoder_pallas.1} parent=11 // pred_check
          %p495 = pneg %p326
        $region54: #{stacked_decoder_pallas.1} parent=11 // pred_check_branch
          %497 = sbr.rel (%p495) target = $region56
        $region55: #{stacked_decoder_pallas.1} parent=11 // pred_region
          %s499 = ssub.s32 32, 32
          %500 = vsyncadd [#allocation22], %s499
          %s502 = sshll.u32 [#allocation23], 4
          %s503 = int_to_ptr.vmem [resolvable:$true] %s502
          %505 = dma.hbm_to_vmem [thread:$0]  %s12, 32, %s503, [#allocation22]
        $region56: #{stacked_decoder_pallas.1} parent=11 // pred_fallthru
          _
      $region12: #{stacked_decoder_pallas.1} parent=5 // pred_fallthru
        _
      %p506 = scmp.lt.s32.totalorder %s31, 4
      // Predicated region
      $region57: #{stacked_decoder_pallas.1} parent=5 // pred_check
        %p507 = pneg %p506
      $region58: #{stacked_decoder_pallas.1} parent=5 // pred_check_branch
        %509 = sbr.rel (%p507) target = $region60
      $region59: #{stacked_decoder_pallas.1} parent=5 // pred_region
        // Predicated region
        $region61: #{stacked_decoder_pallas.1} parent=59 // pred_check
          %p510 = pneg %p84
        $region62: #{stacked_decoder_pallas.1} parent=59 // pred_check_branch
          %512 = sbr.rel (%p510) target = $region64
        $region63: #{stacked_decoder_pallas.1} parent=59 // pred_region
          %s513 = sand.u32 %s31, 1
          %s514 = scalar_lea.sflag [#allocation7], %s513
          %s515 = sand.u32 %s74, 1
          %s516 = smul.addr %s515, 128
          %s517 = scalar_lea.vmem [#allocation6], %s516
          %s518 = smul.u32 2, %s38
          %s520 = ssub.s32 2048, 2048
          %521 = vsyncadd %s514, %s520
          %s522 = smul.addr %s518, 16
          %s523 = smul.addr %s522, 64
          %s524 = scalar_lea.hbm %s1, %s523
          %s525 = sshll.u32 %s517, 4
          %s526 = int_to_ptr.vmem [resolvable:$true] %s525
          %531 = dma.hbm_to_vmem [thread:$0]  %s524, 2048, %s526, %s514, 64, 64, 4
        $region64: #{stacked_decoder_pallas.1} parent=59 // pred_fallthru
          _
        // Predicated region
        $region65: #{stacked_decoder_pallas.1} parent=59 // pred_check
          %p532 = pneg %p110
        $region66: #{stacked_decoder_pallas.1} parent=59 // pred_check_branch
          %534 = sbr.rel (%p532) target = $region68
        $region67: #{stacked_decoder_pallas.1} parent=59 // pred_region
          %s535 = sand.u32 %s31, 1
          %s536 = scalar_lea.sflag [#allocation7], %s535
          %s537 = sand.u32 %s100, 1
          %s538 = smul.addr %s537, 2
          %s539 = scalar_lea.vmem [#allocation8], %s538
          %s540 = smul.u32 2, %s38
          %s542 = ssub.s32 32, 32
          %543 = vsyncadd %s536, %s542
          %s544 = smul.addr %s540, 16
          %s545 = scalar_lea.hbm %s2, %s544
          %s546 = sshll.u32 %s539, 4
          %s547 = int_to_ptr.vmem [resolvable:$true] %s546
          %552 = dma.hbm_to_vmem [thread:$0]  %s545, 32, %s547, %s536, 16, 16, 1
        $region68: #{stacked_decoder_pallas.1} parent=59 // pred_fallthru
          _
      $region60: #{stacked_decoder_pallas.1} parent=5 // pred_fallthru
        _
      %p553 = scmp.le.s32.totalorder 1, %s31
      %p554 = scmp.lt.s32.totalorder %s31, 5
      %p555 = pnand %p553, %p554
      %p556 = pneg %p555
      // Predicated region
      $region69: #{stacked_decoder_pallas.1} parent=5 // pred_check
        _
      $region70: #{stacked_decoder_pallas.1} parent=5 // pred_check_branch
        %558 = sbr.rel (%p555) target = $region72
      $region71: #{stacked_decoder_pallas.1} parent=5 // pred_region
        %s559 = ssub.s32 %s31, 1
        // Predicated region
        $region73: #{stacked_decoder_pallas.1} parent=71 // pred_check
          %p560 = pneg %p64
        $region74: #{stacked_decoder_pallas.1} parent=71 // pred_check_branch
          %562 = sbr.rel (%p560) target = $region76
        $region75: #{stacked_decoder_pallas.1} parent=71 // pred_region
          %563 = dma.done [#allocation4], 128
        $region76: #{stacked_decoder_pallas.1} parent=71 // pred_fallthru
          _
        %s564 = sand.u32 %s36, 1
        %s565 = scalar_lea.sflag [#allocation7], %s564
        %s566 = sand.u32 %s77, 1
        %s567 = smul.addr %s566, 128
        %s568 = scalar_lea.vmem [#allocation6], %s567
        // Predicated region
        $region77: #{stacked_decoder_pallas.1} parent=71 // pred_check
          %p569 = pneg %p90
        $region78: #{stacked_decoder_pallas.1} parent=71 // pred_check_branch
          %571 = sbr.rel (%p569) target = $region80
        $region79: #{stacked_decoder_pallas.1} parent=71 // pred_region
          %572 = dma.done %s565, 2048
        $region80: #{stacked_decoder_pallas.1} parent=71 // pred_fallthru
          _
        %s573 = sand.u32 %s36, 1
        %s574 = scalar_lea.sflag [#allocation7], %s573
        %s575 = sand.u32 %s103, 1
        %s576 = smul.addr %s575, 2
        %s577 = scalar_lea.vmem [#allocation8], %s576
        // Predicated region
        $region81: #{stacked_decoder_pallas.1} parent=71 // pred_check
          %p578 = pneg %p116
        $region82: #{stacked_decoder_pallas.1} parent=71 // pred_check_branch
          %580 = sbr.rel (%p578) target = $region84
        $region83: #{stacked_decoder_pallas.1} parent=71 // pred_region
          %581 = dma.done %s574, 32
        $region84: #{stacked_decoder_pallas.1} parent=71 // pred_fallthru
          _
        // Predicated region
        $region85: #{stacked_decoder_pallas.1} parent=71 // pred_check
          %p582 = pneg %p137
        $region86: #{stacked_decoder_pallas.1} parent=71 // pred_check_branch
          %584 = sbr.rel (%p582) target = $region88
        $region87: #{stacked_decoder_pallas.1} parent=71 // pred_region
          %585 = dma.done [#allocation10], 512
        $region88: #{stacked_decoder_pallas.1} parent=71 // pred_fallthru
          _
        // Predicated region
        $region89: #{stacked_decoder_pallas.1} parent=71 // pred_check
          %p586 = pneg %p158
        $region90: #{stacked_decoder_pallas.1} parent=71 // pred_check_branch
          %588 = sbr.rel (%p586) target = $region92
        $region91: #{stacked_decoder_pallas.1} parent=71 // pred_region
          %589 = dma.done [#allocation10], 512
        $region92: #{stacked_decoder_pallas.1} parent=71 // pred_fallthru
          _
        // Predicated region
        $region93: #{stacked_decoder_pallas.1} parent=71 // pred_check
          %p590 = pneg %p179
        $region94: #{stacked_decoder_pallas.1} parent=71 // pred_check_branch
          %592 = sbr.rel (%p590) target = $region96
        $region95: #{stacked_decoder_pallas.1} parent=71 // pred_region
          %593 = dma.done [#allocation13], 512
        $region96: #{stacked_decoder_pallas.1} parent=71 // pred_fallthru
          _
        // Predicated region
        $region97: #{stacked_decoder_pallas.1} parent=71 // pred_check
          %p594 = pneg %p200
        $region98: #{stacked_decoder_pallas.1} parent=71 // pred_check_branch
          %596 = sbr.rel (%p594) target = $region100
        $region99: #{stacked_decoder_pallas.1} parent=71 // pred_region
          %597 = dma.done [#allocation13], 512
        $region100: #{stacked_decoder_pallas.1} parent=71 // pred_fallthru
          _
        // Predicated region
        $region101: #{stacked_decoder_pallas.1} parent=71 // pred_check
          %p598 = pneg %p221
        $region102: #{stacked_decoder_pallas.1} parent=71 // pred_check_branch
          %600 = sbr.rel (%p598) target = $region104
        $region103: #{stacked_decoder_pallas.1} parent=71 // pred_region
          %601 = dma.done [#allocation16], 512
        $region104: #{stacked_decoder_pallas.1} parent=71 // pred_fallthru
          _
        // Predicated region
        $region105: #{stacked_decoder_pallas.1} parent=71 // pred_check
          %p602 = pneg %p242
        $region106: #{stacked_decoder_pallas.1} parent=71 // pred_check_branch
          %604 = sbr.rel (%p602) target = $region108
        $region107: #{stacked_decoder_pallas.1} parent=71 // pred_region
          %605 = dma.done [#allocation16], 512
        $region108: #{stacked_decoder_pallas.1} parent=71 // pred_fallthru
          _
        // Predicated region
        $region109: #{stacked_decoder_pallas.1} parent=71 // pred_check
          %p606 = pneg %p263
        $region110: #{stacked_decoder_pallas.1} parent=71 // pred_check_branch
          %608 = sbr.rel (%p606) target = $region112
        $region111: #{stacked_decoder_pallas.1} parent=71 // pred_region
          %609 = dma.done [#allocation19], 2048
        $region112: #{stacked_decoder_pallas.1} parent=71 // pred_fallthru
          _
        // Predicated region
        $region113: #{stacked_decoder_pallas.1} parent=71 // pred_check
          %p610 = pneg %p284
        $region114: #{stacked_decoder_pallas.1} parent=71 // pred_check_branch
          %612 = sbr.rel (%p610) target = $region116
        $region115: #{stacked_decoder_pallas.1} parent=71 // pred_region
          %613 = dma.done [#allocation19], 512
        $region116: #{stacked_decoder_pallas.1} parent=71 // pred_fallthru
          _
        // Predicated region
        $region117: #{stacked_decoder_pallas.1} parent=71 // pred_check
          %p614 = pneg %p305
        $region118: #{stacked_decoder_pallas.1} parent=71 // pred_check_branch
          %616 = sbr.rel (%p614) target = $region120
        $region119: #{stacked_decoder_pallas.1} parent=71 // pred_region
          %617 = dma.done [#allocation22], 32
        $region120: #{stacked_decoder_pallas.1} parent=71 // pred_fallthru
          _
        // Predicated region
        $region121: #{stacked_decoder_pallas.1} parent=71 // pred_check
          %p618 = pneg %p326
        $region122: #{stacked_decoder_pallas.1} parent=71 // pred_check_branch
          %620 = sbr.rel (%p618) target = $region124
        $region123: #{stacked_decoder_pallas.1} parent=71 // pred_region
          %621 = dma.done [#allocation22], 32
        $region124: #{stacked_decoder_pallas.1} parent=71 // pred_fallthru
          _
        %p622 = pneg %p64
        %p623 = pneg %p61
        %s624 = sand.u32 %s36, 1
        %s625 = scalar_lea.sflag [#allocation7], %s624
        %s626 = sand.u32 %s77, 1
        %s627 = smul.addr %s626, 128
        %s628 = scalar_lea.vmem [#allocation6], %s627
        %p629 = pneg %p90
        %p630 = pneg %p87
        %s631 = sand.u32 %s36, 1
        %s632 = scalar_lea.sflag [#allocation7], %s631
        %s633 = sand.u32 %s103, 1
        %s634 = smul.addr %s633, 2
        %s635 = scalar_lea.vmem [#allocation8], %s634
        %p636 = pneg %p116
        %p637 = pneg %p113
        %p638 = pneg %p137
        %p639 = pneg %p134
        %p640 = pneg %p158
        %p641 = pneg %p155
        %p642 = pneg %p179
        %p643 = pneg %p176
        %p644 = pneg %p200
        %p645 = pneg %p197
        %p646 = pneg %p221
        %p647 = pneg %p218
        %p648 = pneg %p242
        %p649 = pneg %p239
        %p650 = pneg %p263
        %p651 = pneg %p260
        %p652 = pneg %p284
        %p653 = pneg %p281
        %p654 = pneg %p305
        %p655 = pneg %p302
        %p656 = pneg %p326
        %p657 = pneg %p323
        %p658 = pneg %p352
        %p659 = pneg %p349
        %s660 = sand.u32 %s339, 1
        %s661 = scalar_lea.sflag [#allocation5], %s660
        %s662 = sand.u32 %s339, 1
        %s663 = smul.addr %s662, 16
        %s664 = scalar_lea.vmem [#allocation24], %s663
        %s665 = smul.u32 2, %s40
        %s666 = smul.u32 2, %s40
        %s667 = smul.u32 2, %s40
        %p669 = scmp.eq.s32.totalorder %s41, 0
        // Predicated region
        $region125: #{stacked_decoder_pallas.1} parent=71 // pred_check
          %p670 = pneg %p669
        $region126: #{stacked_decoder_pallas.1} parent=71 // pred_check_branch
          %672 = sbr.rel (%p670) target = $region128
        $region127: #{stacked_decoder_pallas.1} parent=71 // pred_region
          %v673 = vld [vmem:[#allocation3] sm:$0xff]
          %vm674 = vcmask 261120
          %675 = vst.msk [vmem:[#allocation2] sm:$0xff] %vm674, %v673
          %676 = vst.msk [vmem:[#allocation2 + $0x8] sm:$0xff] %vm674, %v673
        $region128: #{stacked_decoder_pallas.1} parent=71 // pred_fallthru
          _
        %v677 = vld [vmem:[#allocation2] sm:$0xff]
        %v678 = vld [vmem:[#allocation2 + $0x8] sm:$0xff]
        %s679 = smul.u32 %s41, 16
        %s680 = scalar_lea.vmem [#allocation20], %s679
        %v681 = vld [vmem:[%s680] sm:$0xff]
        %v682 = vld [vmem:[%s680 + $0x8] sm:$0x7f]
        %v683 = vld [vmem:[%s577] sm:$0x1]
        %v684 = vld [vmem:[%s577 + $0x1] sm:$0x1]
        %v685 = vpack.c.bf16 %v678, %v677
        %s686 = smul.u32 %s41, 4
        %s687 = smul.addr %s686, 4
        %s688 = scalar_lea.vmem [#allocation9], %s687
        %v689 = vld [vmem:[%s688] sm:$0xf]
        %v690 = vld [vmem:[%s688 + $0x4] sm:$0xf]
        %v691 = vld [vmem:[%s688 + $0x8] sm:$0xf]
        %v692 = vld [vmem:[%s688 + $0xc] sm:$0xf]
        %v697 = vunpack.c.l.b16 %v689
        %v698 = vunpack.c.l.b16 %v690
        %v699 = vunpack.c.l.b16 %v691
        %v700 = vunpack.c.l.b16 %v692
        %v701 = vpack.c.b16 %v698, %v697
        %v702 = vpack.c.b16 %v700, %v699
        %vm705 = vcmask 261120
        %v707 = vsel %vm705, %v685, 0
        %709 = vmatprep.subr.bf16.mxu0 0
        %710 = vmatpush1.bf16.msra.mxu0 %v701
        %711 = vmatprep.subr.bf16.mxu0 0
        %712 = vmatpush1.bf16.msra.mxu0 %v702
        %713 = vmatprep.subr.bf16.mxu0 0
        %714 = vmatpush1.bf16.msra.mxu0 0
        %715 = vmatprep.subr.bf16.mxu0 0
        %716 = vmatpush1.bf16.msra.mxu0 0
        %717 = vmatprep.subr.bf16.mxu0 0
        %718 = vmatpush1.bf16.msra.mxu0 0
        %719 = vmatprep.subr.bf16.mxu0 0
        %720 = vmatpush1.bf16.msra.mxu0 0
        %721 = vmatprep.subr.bf16.mxu0 0
        %722 = vmatpush1.bf16.msra.mxu0 0
        %723 = vmatprep.subr.bf16.mxu0 0
        %724 = vmatpush1.bf16.msra.mxu0 0
        %725 = vmatprep.subr.bf16.mxu0 0
        %726 = vmatpush1.bf16.msra.mxu0 0
        %727 = vmatprep.subr.bf16.mxu0 0
        %728 = vmatpush1.bf16.msra.mxu0 0
        %729 = vmatprep.subr.bf16.mxu0 0
        %730 = vmatpush1.bf16.msra.mxu0 0
        %731 = vmatprep.subr.bf16.mxu0 0
        %732 = vmatpush1.bf16.msra.mxu0 0
        %733 = vmatprep.subr.bf16.mxu0 0
        %734 = vmatpush1.bf16.msra.mxu0 0
        %735 = vmatprep.subr.bf16.mxu0 0
        %736 = vmatpush1.bf16.msra.mxu0 0
        %737 = vmatprep.subr.bf16.mxu0 0
        %738 = vmatpush1.bf16.msra.mxu0 0
        %739 = vmatprep.subr.bf16.mxu0 0
        %740 = vmatpush1.bf16.msra.mxu0 0
        %741 = vmatprep.mubr.bf16.mxu0 0
        %742 = vmatmul.mubr.bf16.gmra.mrb[0].mxu0 %v707
        %v743 = vpop.f32.mrb[0].mxu0
        %v744 = vadd.f32 0.0, %v743
        %v745 = vpop.f32.mrb[0].mxu0
        %v746 = vpop.f32.mrb[0].mxu0
        %v747 = vadd.f32 0.0, %v746
        %v748 = vpop.f32.mrb[0].mxu0
        %749 = vdwg.mxu0
        %v750 = vlaneseq
        %v751 = vshrl.u32 %v750, 7
        %v752 = vsub.s32 0, %v751
        %v753 = vrot.slane %v681, %v752
        %v754 = vadd.f32 %v744, %v753
        %v755 = vadd.f32 %v747, %v753
        %v756 = vpack.c.bf16 %v755, %v754
        %v757 = vlaneseq
        %v758 = vshrl.u32 %v757, 7
        %v759 = vsub.s32 1, %v758
        %v760 = vrot.slane %v681, %v759
        %762 = vrot.lane.b32.xlu0 %v760, 32
        %v763 = vpop.permute.xlu0 %762
        %v765 = vadd.f32 %v744, %v763
        %v766 = vadd.f32 %v747, %v763
        %v767 = vpack.c.bf16 %v766, %v765
        %v768 = vlaneseq
        %v769 = vshrl.u32 %v768, 7
        %v770 = vsub.s32 2, %v769
        %v771 = vrot.slane %v681, %v770
        %773 = vrot.lane.b32.xlu0 %v771, 64
        %v774 = vpop.permute.xlu0 %773
        %v776 = vadd.f32 %v744, %v774
        %v777 = vadd.f32 %v747, %v774
        %v778 = vpack.c.bf16 %v777, %v776
        %s779 = smul.addr %s686, 4
        %s780 = scalar_lea.vmem [#allocation11], %s779
        %v781 = vld [vmem:[%s780] sm:$0xf]
        %v782 = vld [vmem:[%s780 + $0x4] sm:$0xf]
        %v783 = vld [vmem:[%s780 + $0x8] sm:$0xf]
        %v784 = vld [vmem:[%s780 + $0xc] sm:$0xf]
        %786 = vrot.lane.b32.xlu0 %v767, 96
        %v787 = vpop.permute.xlu0 %786
        %vm788 = vcmask 64512
        %v790 = vsel %vm788, %v756, 0
        %v793 = vsel %vm788, %v787, 0
        %795 = vmatprep.subr.bf16.mxu0 0
        %796 = vmatpush1.bf16.xpose.msra.mxu0 %v793
        %797 = vmatprep.subr.bf16.mxu0 0
        %798 = vmatpush1.bf16.xpose.msra.mxu0 0
        %799 = vmatprep.subr.bf16.mxu0 0
        %800 = vmatpush1.bf16.xpose.msra.mxu0 0
        %801 = vmatprep.subr.bf16.mxu0 0
        %802 = vmatpush1.bf16.xpose.msra.mxu0 0
        %803 = vmatprep.subr.bf16.mxu0 0
        %804 = vmatpush1.bf16.xpose.msra.mxu0 0
        %805 = vmatprep.subr.bf16.mxu0 0
        %806 = vmatpush1.bf16.xpose.msra.mxu0 0
        %807 = vmatprep.subr.bf16.mxu0 0
        %808 = vmatpush1.bf16.xpose.msra.mxu0 0
        %809 = vmatprep.subr.bf16.mxu0 0
        %810 = vmatpush1.bf16.xpose.msra.mxu0 0
        %811 = vmatprep.subr.bf16.mxu0 0
        %812 = vmatpush1.bf16.xpose.msra.mxu0 0
        %813 = vmatprep.subr.bf16.mxu0 0
        %814 = vmatpush1.bf16.xpose.msra.mxu0 0
        %815 = vmatprep.subr.bf16.mxu0 0
        %816 = vmatpush1.bf16.xpose.msra.mxu0 0
        %817 = vmatprep.subr.bf16.mxu0 0
        %818 = vmatpush1.bf16.xpose.msra.mxu0 0
        %819 = vmatprep.subr.bf16.mxu0 0
        %820 = vmatpush1.bf16.xpose.msra.mxu0 0
        %821 = vmatprep.subr.bf16.mxu0 0
        %822 = vmatpush1.bf16.xpose.msra.mxu0 0
        %823 = vmatprep.subr.bf16.mxu0 0
        %824 = vmatpush1.bf16.xpose.msra.mxu0 0
        %825 = vmatprep.subr.bf16.mxu0 0
        %826 = vmatpush1.bf16.xpose.msra.mxu0 0
        %827 = vmatprep.mubr.bf16.mxu0 0
        %828 = vmatmul.mubr.bf16.gmra.mrb[0].mxu0 %v790
        %v829 = vpop.f32.mrb[0].mxu0
        %v830 = vadd.f32 0.0, %v829
        %v831 = vpop.f32.mrb[0].mxu0
        %v832 = vpop.f32.mrb[0].mxu0
        %v833 = vpop.f32.mrb[0].mxu0
        %834 = vdwg.mxu0
        %v835 = vsel %vm788, %v830, -inf
        %836 = vmax.xlane.f32.xlu0 %v835
        %v837 = vpop.xlane.xlu0 %836
        %v838 = vsub.f32 %v830, %v837
        %v839 = vmul.f32 %v838, 1.442695
        %v840 = vpow.pop %v839
        %v841 = vsel %vm788, %v840, 0.0
        %842 = vadd.xlane.f32.xlu0 %v841
        %v843 = vpop.xlane.xlu0 %842
        %v844 = vrcp.pop %v843
        %v845 = vmul.f32 %v840, %v844
        %v846 = vpack.c.bf16 %v845, %v845
        %848 = vrot.lane.b32.xlu0 %v778, 64
        %v849 = vpop.permute.xlu0 %848
        %v851 = vsel %vm788, %v846, 0
        %vm853 = vcmask 1043456
        %v855 = vsel %vm853, %v849, 0
        %857 = vmatprep.subr.bf16.mxu0 0
        %858 = vmatpush1.bf16.msra.mxu0 %v855
        %859 = vmatprep.subr.bf16.mxu0 0
        %860 = vmatpush1.bf16.msra.mxu0 0
        %861 = vmatprep.subr.bf16.mxu0 0
        %862 = vmatpush1.bf16.msra.mxu0 0
        %863 = vmatprep.subr.bf16.mxu0 0
        %864 = vmatpush1.bf16.msra.mxu0 0
        %865 = vmatprep.subr.bf16.mxu0 0
        %866 = vmatpush1.bf16.msra.mxu0 0
        %867 = vmatprep.subr.bf16.mxu0 0
        %868 = vmatpush1.bf16.msra.mxu0 0
        %869 = vmatprep.subr.bf16.mxu0 0
        %870 = vmatpush1.bf16.msra.mxu0 0
        %871 = vmatprep.subr.bf16.mxu0 0
        %872 = vmatpush1.bf16.msra.mxu0 0
        %873 = vmatprep.subr.bf16.mxu0 0
        %874 = vmatpush1.bf16.msra.mxu0 0
        %875 = vmatprep.subr.bf16.mxu0 0
        %876 = vmatpush1.bf16.msra.mxu0 0
        %877 = vmatprep.subr.bf16.mxu0 0
        %878 = vmatpush1.bf16.msra.mxu0 0
        %879 = vmatprep.subr.bf16.mxu0 0
        %880 = vmatpush1.bf16.msra.mxu0 0
        %881 = vmatprep.subr.bf16.mxu0 0
        %882 = vmatpush1.bf16.msra.mxu0 0
        %883 = vmatprep.subr.bf16.mxu0 0
        %884 = vmatpush1.bf16.msra.mxu0 0
        %885 = vmatprep.subr.bf16.mxu0 0
        %886 = vmatpush1.bf16.msra.mxu0 0
        %887 = vmatprep.subr.bf16.mxu0 0
        %888 = vmatpush1.bf16.msra.mxu0 0
        %889 = vmatprep.mubr.bf16.mxu0 0
        %890 = vmatmul.mubr.bf16.gmra.mrb[0].mxu0 %v851
        %v891 = vpop.f32.mrb[0].mxu0
        %v892 = vadd.f32 0.0, %v891
        %v893 = vpop.f32.mrb[0].mxu0
        %v894 = vpop.f32.mrb[0].mxu0
        %v895 = vpop.f32.mrb[0].mxu0
        %896 = vdwg.mxu0
        %898 = vrot.lane.b32.xlu0 %v756, 120
        %v899 = vpop.permute.xlu0 %898
        %900 = vrot.lane.b32.xlu0 %v767, 88
        %v901 = vpop.permute.xlu0 %900
        %v903 = vsel %vm788, %v899, 0
        %v906 = vsel %vm788, %v901, 0
        %908 = vmatprep.subr.bf16.mxu0 0
        %909 = vmatpush1.bf16.xpose.msra.mxu0 %v906
        %910 = vmatprep.subr.bf16.mxu0 0
        %911 = vmatpush1.bf16.xpose.msra.mxu0 0
        %912 = vmatprep.subr.bf16.mxu0 0
        %913 = vmatpush1.bf16.xpose.msra.mxu0 0
        %914 = vmatprep.subr.bf16.mxu0 0
        %915 = vmatpush1.bf16.xpose.msra.mxu0 0
        %916 = vmatprep.subr.bf16.mxu0 0
        %917 = vmatpush1.bf16.xpose.msra.mxu0 0
        %918 = vmatprep.subr.bf16.mxu0 0
        %919 = vmatpush1.bf16.xpose.msra.mxu0 0
        %920 = vmatprep.subr.bf16.mxu0 0
        %921 = vmatpush1.bf16.xpose.msra.mxu0 0
        %922 = vmatprep.subr.bf16.mxu0 0
        %923 = vmatpush1.bf16.xpose.msra.mxu0 0
        %924 = vmatprep.subr.bf16.mxu0 0
        %925 = vmatpush1.bf16.xpose.msra.mxu0 0
        %926 = vmatprep.subr.bf16.mxu0 0
        %927 = vmatpush1.bf16.xpose.msra.mxu0 0
        %928 = vmatprep.subr.bf16.mxu0 0
        %929 = vmatpush1.bf16.xpose.msra.mxu0 0
        %930 = vmatprep.subr.bf16.mxu0 0
        %931 = vmatpush1.bf16.xpose.msra.mxu0 0
        %932 = vmatprep.subr.bf16.mxu0 0
        %933 = vmatpush1.bf16.xpose.msra.mxu0 0
        %934 = vmatprep.subr.bf16.mxu0 0
        %935 = vmatpush1.bf16.xpose.msra.mxu0 0
        %936 = vmatprep.subr.bf16.mxu0 0
        %937 = vmatpush1.bf16.xpose.msra.mxu0 0
        %938 = vmatprep.subr.bf16.mxu0 0
        %939 = vmatpush1.bf16.xpose.msra.mxu0 0
        %940 = vmatprep.mubr.bf16.mxu0 0
        %941 = vmatmul.mubr.bf16.gmra.mrb[0].mxu0 %v903
        %v942 = vpop.f32.mrb[0].mxu0
        %v943 = vadd.f32 0.0, %v942
        %v944 = vpop.f32.mrb[0].mxu0
        %v945 = vpop.f32.mrb[0].mxu0
        %v946 = vpop.f32.mrb[0].mxu0
        %947 = vdwg.mxu0
        %v948 = vsel %vm788, %v943, -inf
        %949 = vmax.xlane.f32.xlu0 %v948
        %v950 = vpop.xlane.xlu0 %949
        %v951 = vsub.f32 %v943, %v950
        %v952 = vmul.f32 %v951, 1.442695
        %v953 = vpow.pop %v952
        %v954 = vsel %vm788, %v953, 0.0
        %955 = vadd.xlane.f32.xlu0 %v954
        %v956 = vpop.xlane.xlu0 %955
        %v957 = vrcp.pop %v956
        %v958 = vmul.f32 %v953, %v957
        %v959 = vpack.c.bf16 %v958, %v958
        %960 = vrot.lane.b32.xlu0 %v778, 56
        %v961 = vpop.permute.xlu0 %960
        %v963 = vsel %vm788, %v959, 0
        %v966 = vsel %vm853, %v961, 0
        %968 = vmatprep.subr.bf16.mxu0 0
        %969 = vmatpush1.bf16.msra.mxu0 %v966
        %970 = vmatprep.subr.bf16.mxu0 0
        %971 = vmatpush1.bf16.msra.mxu0 0
        %972 = vmatprep.subr.bf16.mxu0 0
        %973 = vmatpush1.bf16.msra.mxu0 0
        %974 = vmatprep.subr.bf16.mxu0 0
        %975 = vmatpush1.bf16.msra.mxu0 0
        %976 = vmatprep.subr.bf16.mxu0 0
        %977 = vmatpush1.bf16.msra.mxu0 0
        %978 = vmatprep.subr.bf16.mxu0 0
        %979 = vmatpush1.bf16.msra.mxu0 0
        %980 = vmatprep.subr.bf16.mxu0 0
        %981 = vmatpush1.bf16.msra.mxu0 0
        %982 = vmatprep.subr.bf16.mxu0 0
        %983 = vmatpush1.bf16.msra.mxu0 0
        %984 = vmatprep.subr.bf16.mxu0 0
        %985 = vmatpush1.bf16.msra.mxu0 0
        %986 = vmatprep.subr.bf16.mxu0 0
        %987 = vmatpush1.bf16.msra.mxu0 0
        %988 = vmatprep.subr.bf16.mxu0 0
        %989 = vmatpush1.bf16.msra.mxu0 0
        %990 = vmatprep.subr.bf16.mxu0 0
        %991 = vmatpush1.bf16.msra.mxu0 0
        %992 = vmatprep.subr.bf16.mxu0 0
        %993 = vmatpush1.bf16.msra.mxu0 0
        %994 = vmatprep.subr.bf16.mxu0 0
        %995 = vmatpush1.bf16.msra.mxu0 0
        %996 = vmatprep.subr.bf16.mxu0 0
        %997 = vmatpush1.bf16.msra.mxu0 0
        %998 = vmatprep.subr.bf16.mxu0 0
        %999 = vmatpush1.bf16.msra.mxu0 0
        %1000 = vmatprep.mubr.bf16.mxu0 0
        %1001 = vmatmul.mubr.bf16.gmra.mrb[0].mxu0 %v963
        %v1002 = vpop.f32.mrb[0].mxu0
        %v1003 = vadd.f32 0.0, %v1002
        %v1004 = vpop.f32.mrb[0].mxu0
        %v1005 = vpop.f32.mrb[0].mxu0
        %v1006 = vpop.f32.mrb[0].mxu0
        %1007 = vdwg.mxu0
        %1008 = vrot.lane.b32.xlu0 %v756, 112
        %v1009 = vpop.permute.xlu0 %1008
        %1010 = vrot.lane.b32.xlu0 %v767, 80
        %v1011 = vpop.permute.xlu0 %1010
        %v1013 = vsel %vm788, %v1009, 0
        %v1016 = vsel %vm788, %v1011, 0
        %1018 = vmatprep.subr.bf16.mxu0 0
        %1019 = vmatpush1.bf16.xpose.msra.mxu0 %v1016
        %1020 = vmatprep.subr.bf16.mxu0 0
        %1021 = vmatpush1.bf16.xpose.msra.mxu0 0
        %1022 = vmatprep.subr.bf16.mxu0 0
        %1023 = vmatpush1.bf16.xpose.msra.mxu0 0
        %1024 = vmatprep.subr.bf16.mxu0 0
        %1025 = vmatpush1.bf16.xpose.msra.mxu0 0
        %1026 = vmatprep.subr.bf16.mxu0 0
        %1027 = vmatpush1.bf16.xpose.msra.mxu0 0
        %1028 = vmatprep.subr.bf16.mxu0 0
        %1029 = vmatpush1.bf16.xpose.msra.mxu0 0
        %1030 = vmatprep.subr.bf16.mxu0 0
        %1031 = vmatpush1.bf16.xpose.msra.mxu0 0
        %1032 = vmatprep.subr.bf16.mxu0 0
        %1033 = vmatpush1.bf16.xpose.msra.mxu0 0
        %1034 = vmatprep.subr.bf16.mxu0 0
        %1035 = vmatpush1.bf16.xpose.msra.mxu0 0
        %1036 = vmatprep.subr.bf16.mxu0 0
        %1037 = vmatpush1.bf16.xpose.msra.mxu0 0
        %1038 = vmatprep.subr.bf16.mxu0 0
        %1039 = vmatpush1.bf16.xpose.msra.mxu0 0
        %1040 = vmatprep.subr.bf16.mxu0 0
        %1041 = vmatpush1.bf16.xpose.msra.mxu0 0
        %1042 = vmatprep.subr.bf16.mxu0 0
        %1043 = vmatpush1.bf16.xpose.msra.mxu0 0
        %1044 = vmatprep.subr.bf16.mxu0 0
        %1045 = vmatpush1.bf16.xpose.msra.mxu0 0
        %1046 = vmatprep.subr.bf16.mxu0 0
        %1047 = vmatpush1.bf16.xpose.msra.mxu0 0
        %1048 = vmatprep.subr.bf16.mxu0 0
        %1049 = vmatpush1.bf16.xpose.msra.mxu0 0
        %1050 = vmatprep.mubr.bf16.mxu0 0
        %1051 = vmatmul.mubr.bf16.gmra.mrb[0].mxu0 %v1013
        %v1052 = vpop.f32.mrb[0].mxu0
        %v1053 = vadd.f32 0.0, %v1052
        %v1054 = vpop.f32.mrb[0].mxu0
        %v1055 = vpop.f32.mrb[0].mxu0
        %v1056 = vpop.f32.mrb[0].mxu0
        %1057 = vdwg.mxu0
        %v1058 = vsel %vm788, %v1053, -inf
        %1059 = vmax.xlane.f32.xlu0 %v1058
        %v1060 = vpop.xlane.xlu0 %1059
        %v1061 = vsub.f32 %v1053, %v1060
        %v1062 = vmul.f32 %v1061, 1.442695
        %v1063 = vpow.pop %v1062
        %v1064 = vsel %vm788, %v1063, 0.0
        %1065 = vadd.xlane.f32.xlu0 %v1064
        %v1066 = vpop.xlane.xlu0 %1065
        %v1067 = vrcp.pop %v1066
        %v1068 = vmul.f32 %v1063, %v1067
        %v1069 = vpack.c.bf16 %v1068, %v1068
        %1070 = vrot.lane.b32.xlu0 %v778, 48
        %v1071 = vpop.permute.xlu0 %1070
        %v1073 = vsel %vm788, %v1069, 0
        %v1076 = vsel %vm853, %v1071, 0
        %1078 = vmatprep.subr.bf16.mxu0 0
        %1079 = vmatpush1.bf16.msra.mxu0 %v1076
        %1080 = vmatprep.subr.bf16.mxu0 0
        %1081 = vmatpush1.bf16.msra.mxu0 0
        %1082 = vmatprep.subr.bf16.mxu0 0
        %1083 = vmatpush1.bf16.msra.mxu0 0
        %1084 = vmatprep.subr.bf16.mxu0 0
        %1085 = vmatpush1.bf16.msra.mxu0 0
        %1086 = vmatprep.subr.bf16.mxu0 0
        %1087 = vmatpush1.bf16.msra.mxu0 0
        %1088 = vmatprep.subr.bf16.mxu0 0
        %1089 = vmatpush1.bf16.msra.mxu0 0
        %1090 = vmatprep.subr.bf16.mxu0 0
        %1091 = vmatpush1.bf16.msra.mxu0 0
        %1092 = vmatprep.subr.bf16.mxu0 0
        %1093 = vmatpush1.bf16.msra.mxu0 0
        %1094 = vmatprep.subr.bf16.mxu0 0
        %1095 = vmatpush1.bf16.msra.mxu0 0
        %1096 = vmatprep.subr.bf16.mxu0 0
        %1097 = vmatpush1.bf16.msra.mxu0 0
        %1098 = vmatprep.subr.bf16.mxu0 0
        %1099 = vmatpush1.bf16.msra.mxu0 0
        %1100 = vmatprep.subr.bf16.mxu0 0
        %1101 = vmatpush1.bf16.msra.mxu0 0
        %1102 = vmatprep.subr.bf16.mxu0 0
        %1103 = vmatpush1.bf16.msra.mxu0 0
        %1104 = vmatprep.subr.bf16.mxu0 0
        %1105 = vmatpush1.bf16.msra.mxu0 0
        %1106 = vmatprep.subr.bf16.mxu0 0
        %1107 = vmatpush1.bf16.msra.mxu0 0
        %1108 = vmatprep.subr.bf16.mxu0 0
        %1109 = vmatpush1.bf16.msra.mxu0 0
        %1110 = vmatprep.mubr.bf16.mxu0 0
        %1111 = vmatmul.mubr.bf16.gmra.mrb[0].mxu0 %v1073
        %v1112 = vpop.f32.mrb[0].mxu0
        %v1113 = vadd.f32 0.0, %v1112
        %v1114 = vpop.f32.mrb[0].mxu0
        %v1115 = vpop.f32.mrb[0].mxu0
        %v1116 = vpop.f32.mrb[0].mxu0
        %1117 = vdwg.mxu0
        %1118 = vrot.lane.b32.xlu0 %v756, 104
        %v1119 = vpop.permute.xlu0 %1118
        %1120 = vrot.lane.b32.xlu0 %v767, 72
        %v1121 = vpop.permute.xlu0 %1120
        %v1123 = vsel %vm788, %v1119, 0
        %v1126 = vsel %vm788, %v1121, 0
        %1128 = vmatprep.subr.bf16.mxu0 0
        %1129 = vmatpush1.bf16.xpose.msra.mxu0 %v1126
        %1130 = vmatprep.subr.bf16.mxu0 0
        %1131 = vmatpush1.bf16.xpose.msra.mxu0 0
        %1132 = vmatprep.subr.bf16.mxu0 0
        %1133 = vmatpush1.bf16.xpose.msra.mxu0 0
        %1134 = vmatprep.subr.bf16.mxu0 0
        %1135 = vmatpush1.bf16.xpose.msra.mxu0 0
        %1136 = vmatprep.subr.bf16.mxu0 0
        %1137 = vmatpush1.bf16.xpose.msra.mxu0 0
        %1138 = vmatprep.subr.bf16.mxu0 0
        %1139 = vmatpush1.bf16.xpose.msra.mxu0 0
        %1140 = vmatprep.subr.bf16.mxu0 0
        %1141 = vmatpush1.bf16.xpose.msra.mxu0 0
        %1142 = vmatprep.subr.bf16.mxu0 0
        %1143 = vmatpush1.bf16.xpose.msra.mxu0 0
        %1144 = vmatprep.subr.bf16.mxu0 0
        %1145 = vmatpush1.bf16.xpose.msra.mxu0 0
        %1146 = vmatprep.subr.bf16.mxu0 0
        %1147 = vmatpush1.bf16.xpose.msra.mxu0 0
        %1148 = vmatprep.subr.bf16.mxu0 0
        %1149 = vmatpush1.bf16.xpose.msra.mxu0 0
        %1150 = vmatprep.subr.bf16.mxu0 0
        %1151 = vmatpush1.bf16.xpose.msra.mxu0 0
        %1152 = vmatprep.subr.bf16.mxu0 0
        %1153 = vmatpush1.bf16.xpose.msra.mxu0 0
        %1154 = vmatprep.subr.bf16.mxu0 0
        %1155 = vmatpush1.bf16.xpose.msra.mxu0 0
        %1156 = vmatprep.subr.bf16.mxu0 0
        %1157 = vmatpush1.bf16.xpose.msra.mxu0 0
        %1158 = vmatprep.subr.bf16.mxu0 0
        %1159 = vmatpush1.bf16.xpose.msra.mxu0 0
        %1160 = vmatprep.mubr.bf16.mxu0 0
        %1161 = vmatmul.mubr.bf16.gmra.mrb[0].mxu0 %v1123
        %v1162 = vpop.f32.mrb[0].mxu0
        %v1163 = vadd.f32 0.0, %v1162
        %v1164 = vpop.f32.mrb[0].mxu0
        %v1165 = vpop.f32.mrb[0].mxu0
        %v1166 = vpop.f32.mrb[0].mxu0
        %1167 = vdwg.mxu0
        %v1168 = vsel %vm788, %v1163, -inf
        %1169 = vmax.xlane.f32.xlu0 %v1168
        %v1170 = vpop.xlane.xlu0 %1169
        %v1171 = vsub.f32 %v1163, %v1170
        %v1172 = vmul.f32 %v1171, 1.442695
        %v1173 = vpow.pop %v1172
        %v1174 = vsel %vm788, %v1173, 0.0
        %1175 = vadd.xlane.f32.xlu0 %v1174
        %v1176 = vpop.xlane.xlu0 %1175
        %v1177 = vrcp.pop %v1176
        %v1178 = vmul.f32 %v1173, %v1177
        %v1179 = vpack.c.bf16 %v1178, %v1178
        %1180 = vrot.lane.b32.xlu0 %v778, 40
        %v1181 = vpop.permute.xlu0 %1180
        %v1183 = vsel %vm788, %v1179, 0
        %v1186 = vsel %vm853, %v1181, 0
        %1188 = vmatprep.subr.bf16.mxu0 0
        %1189 = vmatpush1.bf16.msra.mxu0 %v1186
        %1190 = vmatprep.subr.bf16.mxu0 0
        %1191 = vmatpush1.bf16.msra.mxu0 0
        %1192 = vmatprep.subr.bf16.mxu0 0
        %1193 = vmatpush1.bf16.msra.mxu0 0
        %1194 = vmatprep.subr.bf16.mxu0 0
        %1195 = vmatpush1.bf16.msra.mxu0 0
        %1196 = vmatprep.subr.bf16.mxu0 0
        %1197 = vmatpush1.bf16.msra.mxu0 0
        %1198 = vmatprep.subr.bf16.mxu0 0
        %1199 = vmatpush1.bf16.msra.mxu0 0
        %1200 = vmatprep.subr.bf16.mxu0 0
        %1201 = vmatpush1.bf16.msra.mxu0 0
        %1202 = vmatprep.subr.bf16.mxu0 0
        %1203 = vmatpush1.bf16.msra.mxu0 0
        %1204 = vmatprep.subr.bf16.mxu0 0
        %1205 = vmatpush1.bf16.msra.mxu0 0
        %1206 = vmatprep.subr.bf16.mxu0 0
        %1207 = vmatpush1.bf16.msra.mxu0 0
        %1208 = vmatprep.subr.bf16.mxu0 0
        %1209 = vmatpush1.bf16.msra.mxu0 0
        %1210 = vmatprep.subr.bf16.mxu0 0
        %1211 = vmatpush1.bf16.msra.mxu0 0
        %1212 = vmatprep.subr.bf16.mxu0 0
        %1213 = vmatpush1.bf16.msra.mxu0 0
        %1214 = vmatprep.subr.bf16.mxu0 0
        %1215 = vmatpush1.bf16.msra.mxu0 0
        %1216 = vmatprep.subr.bf16.mxu0 0
        %1217 = vmatpush1.bf16.msra.mxu0 0
        %1218 = vmatprep.subr.bf16.mxu0 0
        %1219 = vmatpush1.bf16.msra.mxu0 0
        %1220 = vmatprep.mubr.bf16.mxu0 0
        %1221 = vmatmul.mubr.bf16.gmra.mrb[0].mxu0 %v1183
        %v1222 = vpop.f32.mrb[0].mxu0
        %v1223 = vadd.f32 0.0, %v1222
        %v1224 = vpop.f32.mrb[0].mxu0
        %v1225 = vpop.f32.mrb[0].mxu0
        %v1226 = vpop.f32.mrb[0].mxu0
        %1227 = vdwg.mxu0
        %1229 = vrot.lane.b32.xlu0 %v1003, 8
        %v1230 = vpop.permute.xlu0 %1229
        %1233 = vrot.lane.b32.xlu0 %v1113, 16
        %v1234 = vpop.permute.xlu0 %1233
        %1237 = vrot.lane.b32.xlu0 %v1223, 24
        %v1238 = vpop.permute.xlu0 %1237
        %v1240 = vsel %vm788, %v892, %v1230
        %vm1241 = vcmask 130048
        %v1242 = vsel %vm1241, %v1240, %v1234
        %vm1243 = vcmask 195584
        %v1244 = vsel %vm1243, %v1242, %v1238
        %v1245 = vrot.slane %v756, 4
        %v1246 = vrot.slane %v767, 4
        %1247 = vrot.lane.b32.xlu0 %v1246, 96
        %v1248 = vpop.permute.xlu0 %1247
        %v1250 = vsel %vm788, %v1245, 0
        %v1253 = vsel %vm788, %v1248, 0
        %1255 = vmatprep.subr.bf16.mxu0 0
        %1256 = vmatpush1.bf16.xpose.msra.mxu0 %v1253
        %1257 = vmatprep.subr.bf16.mxu0 0
        %1258 = vmatpush1.bf16.xpose.msra.mxu0 0
        %1259 = vmatprep.subr.bf16.mxu0 0
        %1260 = vmatpush1.bf16.xpose.msra.mxu0 0
        %1261 = vmatprep.subr.bf16.mxu0 0
        %1262 = vmatpush1.bf16.xpose.msra.mxu0 0
        %1263 = vmatprep.subr.bf16.mxu0 0
        %1264 = vmatpush1.bf16.xpose.msra.mxu0 0
        %1265 = vmatprep.subr.bf16.mxu0 0
        %1266 = vmatpush1.bf16.xpose.msra.mxu0 0
        %1267 = vmatprep.subr.bf16.mxu0 0
        %1268 = vmatpush1.bf16.xpose.msra.mxu0 0
        %1269 = vmatprep.subr.bf16.mxu0 0
        %1270 = vmatpush1.bf16.xpose.msra.mxu0 0
        %1271 = vmatprep.subr.bf16.mxu0 0
        %1272 = vmatpush1.bf16.xpose.msra.mxu0 0
        %1273 = vmatprep.subr.bf16.mxu0 0
        %1274 = vmatpush1.bf16.xpose.msra.mxu0 0
        %1275 = vmatprep.subr.bf16.mxu0 0
        %1276 = vmatpush1.bf16.xpose.msra.mxu0 0
        %1277 = vmatprep.subr.bf16.mxu0 0
        %1278 = vmatpush1.bf16.xpose.msra.mxu0 0
        %1279 = vmatprep.subr.bf16.mxu0 0
        %1280 = vmatpush1.bf16.xpose.msra.mxu0 0
        %1281 = vmatprep.subr.bf16.mxu0 0
        %1282 = vmatpush1.bf16.xpose.msra.mxu0 0
        %1283 = vmatprep.subr.bf16.mxu0 0
        %1284 = vmatpush1.bf16.xpose.msra.mxu0 0
        %1285 = vmatprep.subr.bf16.mxu0 0
        %1286 = vmatpush1.bf16.xpose.msra.mxu0 0
        %1287 = vmatprep.mubr.bf16.mxu0 0
        %1288 = vmatmul.mubr.bf16.gmra.mrb[0].mxu0 %v1250
        %v1289 = vpop.f32.mrb[0].mxu0
        %v1290 = vadd.f32 0.0, %v1289
        %v1291 = vpop.f32.mrb[0].mxu0
        %v1292 = vpop.f32.mrb[0].mxu0
        %v1293 = vpop.f32.mrb[0].mxu0
        %1294 = vdwg.mxu0
        %v1295 = vsel %vm788, %v1290, -inf
        %1296 = vmax.xlane.f32.xlu0 %v1295
        %v1297 = vpop.xlane.xlu0 %1296
        %v1298 = vsub.f32 %v1290, %v1297
        %v1299 = vmul.f32 %v1298, 1.442695
        %v1300 = vpow.pop %v1299
        %v1301 = vsel %vm788, %v1300, 0.0
        %1302 = vadd.xlane.f32.xlu0 %v1301
        %v1303 = vpop.xlane.xlu0 %1302
        %v1304 = vrcp.pop %v1303
        %v1305 = vmul.f32 %v1300, %v1304
        %v1306 = vpack.c.bf16 %v1305, %v1305
        %v1307 = vrot.slane %v778, 4
        %1308 = vrot.lane.b32.xlu0 %v1307, 64
        %v1309 = vpop.permute.xlu0 %1308
        %v1311 = vsel %vm788, %v1306, 0
        %v1314 = vsel %vm853, %v1309, 0
        %1316 = vmatprep.subr.bf16.mxu0 0
        %1317 = vmatpush1.bf16.msra.mxu0 %v1314
        %1318 = vmatprep.subr.bf16.mxu0 0
        %1319 = vmatpush1.bf16.msra.mxu0 0
        %1320 = vmatprep.subr.bf16.mxu0 0
        %1321 = vmatpush1.bf16.msra.mxu0 0
        %1322 = vmatprep.subr.bf16.mxu0 0
        %1323 = vmatpush1.bf16.msra.mxu0 0
        %1324 = vmatprep.subr.bf16.mxu0 0
        %1325 = vmatpush1.bf16.msra.mxu0 0
        %1326 = vmatprep.subr.bf16.mxu0 0
        %1327 = vmatpush1.bf16.msra.mxu0 0
        %1328 = vmatprep.subr.bf16.mxu0 0
        %1329 = vmatpush1.bf16.msra.mxu0 0
        %1330 = vmatprep.subr.bf16.mxu0 0
        %1331 = vmatpush1.bf16.msra.mxu0 0
        %1332 = vmatprep.subr.bf16.mxu0 0
        %1333 = vmatpush1.bf16.msra.mxu0 0
        %1334 = vmatprep.subr.bf16.mxu0 0
        %1335 = vmatpush1.bf16.msra.mxu0 0
        %1336 = vmatprep.subr.bf16.mxu0 0
        %1337 = vmatpush1.bf16.msra.mxu0 0
        %1338 = vmatprep.subr.bf16.mxu0 0
        %1339 = vmatpush1.bf16.msra.mxu0 0
        %1340 = vmatprep.subr.bf16.mxu0 0
        %1341 = vmatpush1.bf16.msra.mxu0 0
        %1342 = vmatprep.subr.bf16.mxu0 0
        %1343 = vmatpush1.bf16.msra.mxu0 0
        %1344 = vmatprep.subr.bf16.mxu0 0
        %1345 = vmatpush1.bf16.msra.mxu0 0
        %1346 = vmatprep.subr.bf16.mxu0 0
        %1347 = vmatpush1.bf16.msra.mxu0 0
        %1348 = vmatprep.mubr.bf16.mxu0 0
        %1349 = vmatmul.mubr.bf16.gmra.mrb[0].mxu0 %v1311
        %v1350 = vpop.f32.mrb[0].mxu0
        %v1351 = vadd.f32 0.0, %v1350
        %v1352 = vpop.f32.mrb[0].mxu0
        %v1353 = vpop.f32.mrb[0].mxu0
        %v1354 = vpop.f32.mrb[0].mxu0
        %1355 = vdwg.mxu0
        %1356 = vrot.lane.b32.xlu0 %v1245, 120
        %v1357 = vpop.permute.xlu0 %1356
        %1358 = vrot.lane.b32.xlu0 %v1246, 88
        %v1359 = vpop.permute.xlu0 %1358
        %v1361 = vsel %vm788, %v1357, 0
        %v1364 = vsel %vm788, %v1359, 0
        %1366 = vmatprep.subr.bf16.mxu0 0
        %1367 = vmatpush1.bf16.xpose.msra.mxu0 %v1364
        %1368 = vmatprep.subr.bf16.mxu0 0
        %1369 = vmatpush1.bf16.xpose.msra.mxu0 0
        %1370 = vmatprep.subr.bf16.mxu0 0
        %1371 = vmatpush1.bf16.xpose.msra.mxu0 0
        %1372 = vmatprep.subr.bf16.mxu0 0
        %1373 = vmatpush1.bf16.xpose.msra.mxu0 0
        %1374 = vmatprep.subr.bf16.mxu0 0
        %1375 = vmatpush1.bf16.xpose.msra.mxu0 0
        %1376 = vmatprep.subr.bf16.mxu0 0
        %1377 = vmatpush1.bf16.xpose.msra.mxu0 0
        %1378 = vmatprep.subr.bf16.mxu0 0
        %1379 = vmatpush1.bf16.xpose.msra.mxu0 0
        %1380 = vmatprep.subr.bf16.mxu0 0
        %1381 = vmatpush1.bf16.xpose.msra.mxu0 0
        %1382 = vmatprep.subr.bf16.mxu0 0
        %1383 = vmatpush1.bf16.xpose.msra.mxu0 0
        %1384 = vmatprep.subr.bf16.mxu0 0
        %1385 = vmatpush1.bf16.xpose.msra.mxu0 0
        %1386 = vmatprep.subr.bf16.mxu0 0
        %1387 = vmatpush1.bf16.xpose.msra.mxu0 0
        %1388 = vmatprep.subr.bf16.mxu0 0
        %1389 = vmatpush1.bf16.xpose.msra.mxu0 0
        %1390 = vmatprep.subr.bf16.mxu0 0
        %1391 = vmatpush1.bf16.xpose.msra.mxu0 0
        %1392 = vmatprep.subr.bf16.mxu0 0
        %1393 = vmatpush1.bf16.xpose.msra.mxu0 0
        %1394 = vmatprep.subr.bf16.mxu0 0
        %1395 = vmatpush1.bf16.xpose.msra.mxu0 0
        %1396 = vmatprep.subr.bf16.mxu0 0
        %1397 = vmatpush1.bf16.xpose.msra.mxu0 0
        %1398 = vmatprep.mubr.bf16.mxu0 0
        %1399 = vmatmul.mubr.bf16.gmra.mrb[0].mxu0 %v1361
        %v1400 = vpop.f32.mrb[0].mxu0
        %v1401 = vadd.f32 0.0, %v1400
        %v1402 = vpop.f32.mrb[0].mxu0
        %v1403 = vpop.f32.mrb[0].mxu0
        %v1404 = vpop.f32.mrb[0].mxu0
        %1405 = vdwg.mxu0
        %v1406 = vsel %vm788, %v1401, -inf
        %1407 = vmax.xlane.f32.xlu0 %v1406
        %v1408 = vpop.xlane.xlu0 %1407
        %v1409 = vsub.f32 %v1401, %v1408
        %v1410 = vmul.f32 %v1409, 1.442695
        %v1411 = vpow.pop %v1410
        %v1412 = vsel %vm788, %v1411, 0.0
        %1413 = vadd.xlane.f32.xlu0 %v1412
        %v1414 = vpop.xlane.xlu0 %1413
        %v1415 = vrcp.pop %v1414
        %v1416 = vmul.f32 %v1411, %v1415
        %v1417 = vpack.c.bf16 %v1416, %v1416
        %1418 = vrot.lane.b32.xlu0 %v1307, 56
        %v1419 = vpop.permute.xlu0 %1418
        %v1421 = vsel %vm788, %v1417, 0
        %v1424 = vsel %vm853, %v1419, 0
        %1426 = vmatprep.subr.bf16.mxu0 0
        %1427 = vmatpush1.bf16.msra.mxu0 %v1424
        %1428 = vmatprep.subr.bf16.mxu0 0
        %1429 = vmatpush1.bf16.msra.mxu0 0
        %1430 = vmatprep.subr.bf16.mxu0 0
        %1431 = vmatpush1.bf16.msra.mxu0 0
        %1432 = vmatprep.subr.bf16.mxu0 0
        %1433 = vmatpush1.bf16.msra.mxu0 0
        %1434 = vmatprep.subr.bf16.mxu0 0
        %1435 = vmatpush1.bf16.msra.mxu0 0
        %1436 = vmatprep.subr.bf16.mxu0 0
        %1437 = vmatpush1.bf16.msra.mxu0 0
        %1438 = vmatprep.subr.bf16.mxu0 0
        %1439 = vmatpush1.bf16.msra.mxu0 0
        %1440 = vmatprep.subr.bf16.mxu0 0
        %1441 = vmatpush1.bf16.msra.mxu0 0
        %1442 = vmatprep.subr.bf16.mxu0 0
        %1443 = vmatpush1.bf16.msra.mxu0 0
        %1444 = vmatprep.subr.bf16.mxu0 0
        %1445 = vmatpush1.bf16.msra.mxu0 0
        %1446 = vmatprep.subr.bf16.mxu0 0
        %1447 = vmatpush1.bf16.msra.mxu0 0
        %1448 = vmatprep.subr.bf16.mxu0 0
        %1449 = vmatpush1.bf16.msra.mxu0 0
        %1450 = vmatprep.subr.bf16.mxu0 0
        %1451 = vmatpush1.bf16.msra.mxu0 0
        %1452 = vmatprep.subr.bf16.mxu0 0
        %1453 = vmatpush1.bf16.msra.mxu0 0
        %1454 = vmatprep.subr.bf16.mxu0 0
        %1455 = vmatpush1.bf16.msra.mxu0 0
        %1456 = vmatprep.subr.bf16.mxu0 0
        %1457 = vmatpush1.bf16.msra.mxu0 0
        %1458 = vmatprep.mubr.bf16.mxu0 0
        %1459 = vmatmul.mubr.bf16.gmra.mrb[0].mxu0 %v1421
        %v1460 = vpop.f32.mrb[0].mxu0
        %v1461 = vadd.f32 0.0, %v1460
        %v1462 = vpop.f32.mrb[0].mxu0
        %v1463 = vpop.f32.mrb[0].mxu0
        %v1464 = vpop.f32.mrb[0].mxu0
        %1465 = vdwg.mxu0
        %1466 = vrot.lane.b32.xlu0 %v1245, 112
        %v1467 = vpop.permute.xlu0 %1466
        %1468 = vrot.lane.b32.xlu0 %v1246, 80
        %v1469 = vpop.permute.xlu0 %1468
        %v1471 = vsel %vm788, %v1467, 0
        %v1474 = vsel %vm788, %v1469, 0
        %1476 = vmatprep.subr.bf16.mxu0 0
        %1477 = vmatpush1.bf16.xpose.msra.mxu0 %v1474
        %1478 = vmatprep.subr.bf16.mxu0 0
        %1479 = vmatpush1.bf16.xpose.msra.mxu0 0
        %1480 = vmatprep.subr.bf16.mxu0 0
        %1481 = vmatpush1.bf16.xpose.msra.mxu0 0
        %1482 = vmatprep.subr.bf16.mxu0 0
        %1483 = vmatpush1.bf16.xpose.msra.mxu0 0
        %1484 = vmatprep.subr.bf16.mxu0 0
        %1485 = vmatpush1.bf16.xpose.msra.mxu0 0
        %1486 = vmatprep.subr.bf16.mxu0 0
        %1487 = vmatpush1.bf16.xpose.msra.mxu0 0
        %1488 = vmatprep.subr.bf16.mxu0 0
        %1489 = vmatpush1.bf16.xpose.msra.mxu0 0
        %1490 = vmatprep.subr.bf16.mxu0 0
        %1491 = vmatpush1.bf16.xpose.msra.mxu0 0
        %1492 = vmatprep.subr.bf16.mxu0 0
        %1493 = vmatpush1.bf16.xpose.msra.mxu0 0
        %1494 = vmatprep.subr.bf16.mxu0 0
        %1495 = vmatpush1.bf16.xpose.msra.mxu0 0
        %1496 = vmatprep.subr.bf16.mxu0 0
        %1497 = vmatpush1.bf16.xpose.msra.mxu0 0
        %1498 = vmatprep.subr.bf16.mxu0 0
        %1499 = vmatpush1.bf16.xpose.msra.mxu0 0
        %1500 = vmatprep.subr.bf16.mxu0 0
        %1501 = vmatpush1.bf16.xpose.msra.mxu0 0
        %1502 = vmatprep.subr.bf16.mxu0 0
        %1503 = vmatpush1.bf16.xpose.msra.mxu0 0
        %1504 = vmatprep.subr.bf16.mxu0 0
        %1505 = vmatpush1.bf16.xpose.msra.mxu0 0
        %1506 = vmatprep.subr.bf16.mxu0 0
        %1507 = vmatpush1.bf16.xpose.msra.mxu0 0
        %1508 = vmatprep.mubr.bf16.mxu0 0
        %1509 = vmatmul.mubr.bf16.gmra.mrb[0].mxu0 %v1471
        %v1510 = vpop.f32.mrb[0].mxu0
        %v1511 = vadd.f32 0.0, %v1510
        %v1512 = vpop.f32.mrb[0].mxu0
        %v1513 = vpop.f32.mrb[0].mxu0
        %v1514 = vpop.f32.mrb[0].mxu0
        %1515 = vdwg.mxu0
        %v1516 = vsel %vm788, %v1511, -inf
        %1517 = vmax.xlane.f32.xlu0 %v1516
        %v1518 = vpop.xlane.xlu0 %1517
        %v1519 = vsub.f32 %v1511, %v1518
        %v1520 = vmul.f32 %v1519, 1.442695
        %v1521 = vpow.pop %v1520
        %v1522 = vsel %vm788, %v1521, 0.0
        %1523 = vadd.xlane.f32.xlu0 %v1522
        %v1524 = vpop.xlane.xlu0 %1523
        %v1525 = vrcp.pop %v1524
        %v1526 = vmul.f32 %v1521, %v1525
        %v1527 = vpack.c.bf16 %v1526, %v1526
        %1528 = vrot.lane.b32.xlu0 %v1307, 48
        %v1529 = vpop.permute.xlu0 %1528
        %v1531 = vsel %vm788, %v1527, 0
        %v1534 = vsel %vm853, %v1529, 0
        %1536 = vmatprep.subr.bf16.mxu0 0
        %1537 = vmatpush1.bf16.msra.mxu0 %v1534
        %1538 = vmatprep.subr.bf16.mxu0 0
        %1539 = vmatpush1.bf16.msra.mxu0 0
        %1540 = vmatprep.subr.bf16.mxu0 0
        %1541 = vmatpush1.bf16.msra.mxu0 0
        %1542 = vmatprep.subr.bf16.mxu0 0
        %1543 = vmatpush1.bf16.msra.mxu0 0
        %1544 = vmatprep.subr.bf16.mxu0 0
        %1545 = vmatpush1.bf16.msra.mxu0 0
        %1546 = vmatprep.subr.bf16.mxu0 0
        %1547 = vmatpush1.bf16.msra.mxu0 0
        %1548 = vmatprep.subr.bf16.mxu0 0
        %1549 = vmatpush1.bf16.msra.mxu0 0
        %1550 = vmatprep.subr.bf16.mxu0 0
        %1551 = vmatpush1.bf16.msra.mxu0 0
        %1552 = vmatprep.subr.bf16.mxu0 0
        %1553 = vmatpush1.bf16.msra.mxu0 0
        %1554 = vmatprep.subr.bf16.mxu0 0
        %1555 = vmatpush1.bf16.msra.mxu0 0
        %1556 = vmatprep.subr.bf16.mxu0 0
        %1557 = vmatpush1.bf16.msra.mxu0 0
        %1558 = vmatprep.subr.bf16.mxu0 0
        %1559 = vmatpush1.bf16.msra.mxu0 0
        %1560 = vmatprep.subr.bf16.mxu0 0
        %1561 = vmatpush1.bf16.msra.mxu0 0
        %1562 = vmatprep.subr.bf16.mxu0 0
        %1563 = vmatpush1.bf16.msra.mxu0 0
        %1564 = vmatprep.subr.bf16.mxu0 0
        %1565 = vmatpush1.bf16.msra.mxu0 0
        %1566 = vmatprep.subr.bf16.mxu0 0
        %1567 = vmatpush1.bf16.msra.mxu0 0
        %1568 = vmatprep.mubr.bf16.mxu0 0
        %1569 = vmatmul.mubr.bf16.gmra.mrb[0].mxu0 %v1531
        %v1570 = vpop.f32.mrb[0].mxu0
        %v1571 = vadd.f32 0.0, %v1570
        %v1572 = vpop.f32.mrb[0].mxu0
        %v1573 = vpop.f32.mrb[0].mxu0
        %v1574 = vpop.f32.mrb[0].mxu0
        %1575 = vdwg.mxu0
        %1576 = vrot.lane.b32.xlu0 %v1245, 104
        %v1577 = vpop.permute.xlu0 %1576
        %1578 = vrot.lane.b32.xlu0 %v1246, 72
        %v1579 = vpop.permute.xlu0 %1578
        %v1581 = vsel %vm788, %v1577, 0
        %v1584 = vsel %vm788, %v1579, 0
        %1586 = vmatprep.subr.bf16.mxu0 0
        %1587 = vmatpush1.bf16.xpose.msra.mxu0 %v1584
        %1588 = vmatprep.subr.bf16.mxu0 0
        %1589 = vmatpush1.bf16.xpose.msra.mxu0 0
        %1590 = vmatprep.subr.bf16.mxu0 0
        %1591 = vmatpush1.bf16.xpose.msra.mxu0 0
        %1592 = vmatprep.subr.bf16.mxu0 0
        %1593 = vmatpush1.bf16.xpose.msra.mxu0 0
        %1594 = vmatprep.subr.bf16.mxu0 0
        %1595 = vmatpush1.bf16.xpose.msra.mxu0 0
        %1596 = vmatprep.subr.bf16.mxu0 0
        %1597 = vmatpush1.bf16.xpose.msra.mxu0 0
        %1598 = vmatprep.subr.bf16.mxu0 0
        %1599 = vmatpush1.bf16.xpose.msra.mxu0 0
        %1600 = vmatprep.subr.bf16.mxu0 0
        %1601 = vmatpush1.bf16.xpose.msra.mxu0 0
        %1602 = vmatprep.subr.bf16.mxu0 0
        %1603 = vmatpush1.bf16.xpose.msra.mxu0 0
        %1604 = vmatprep.subr.bf16.mxu0 0
        %1605 = vmatpush1.bf16.xpose.msra.mxu0 0
        %1606 = vmatprep.subr.bf16.mxu0 0
        %1607 = vmatpush1.bf16.xpose.msra.mxu0 0
        %1608 = vmatprep.subr.bf16.mxu0 0
        %1609 = vmatpush1.bf16.xpose.msra.mxu0 0
        %1610 = vmatprep.subr.bf16.mxu0 0
        %1611 = vmatpush1.bf16.xpose.msra.mxu0 0
        %1612 = vmatprep.subr.bf16.mxu0 0
        %1613 = vmatpush1.bf16.xpose.msra.mxu0 0
        %1614 = vmatprep.subr.bf16.mxu0 0
        %1615 = vmatpush1.bf16.xpose.msra.mxu0 0
        %1616 = vmatprep.subr.bf16.mxu0 0
        %1617 = vmatpush1.bf16.xpose.msra.mxu0 0
        %1618 = vmatprep.mubr.bf16.mxu0 0
        %1619 = vmatmul.mubr.bf16.gmra.mrb[0].mxu0 %v1581
        %v1620 = vpop.f32.mrb[0].mxu0
        %v1621 = vadd.f32 0.0, %v1620
        %v1622 = vpop.f32.mrb[0].mxu0
        %v1623 = vpop.f32.mrb[0].mxu0
        %v1624 = vpop.f32.mrb[0].mxu0
        %1625 = vdwg.mxu0
        %v1626 = vsel %vm788, %v1621, -inf
        %1627 = vmax.xlane.f32.xlu0 %v1626
        %v1628 = vpop.xlane.xlu0 %1627
        %v1629 = vsub.f32 %v1621, %v1628
        %v1630 = vmul.f32 %v1629, 1.442695
        %v1631 = vpow.pop %v1630
        %v1632 = vsel %vm788, %v1631, 0.0
        %1633 = vadd.xlane.f32.xlu0 %v1632
        %v1634 = vpop.xlane.xlu0 %1633
        %v1635 = vrcp.pop %v1634
        %v1636 = vmul.f32 %v1631, %v1635
        %v1637 = vpack.c.bf16 %v1636, %v1636
        %1638 = vrot.lane.b32.xlu0 %v1307, 40
        %v1639 = vpop.permute.xlu0 %1638
        %v1641 = vsel %vm788, %v1637, 0
        %v1644 = vsel %vm853, %v1639, 0
        %1646 = vmatprep.subr.bf16.mxu0 0
        %1647 = vmatpush1.bf16.msra.mxu0 %v1644
        %1648 = vmatprep.subr.bf16.mxu0 0
        %1649 = vmatpush1.bf16.msra.mxu0 0
        %1650 = vmatprep.subr.bf16.mxu0 0
        %1651 = vmatpush1.bf16.msra.mxu0 0
        %1652 = vmatprep.subr.bf16.mxu0 0
        %1653 = vmatpush1.bf16.msra.mxu0 0
        %1654 = vmatprep.subr.bf16.mxu0 0
        %1655 = vmatpush1.bf16.msra.mxu0 0
        %1656 = vmatprep.subr.bf16.mxu0 0
        %1657 = vmatpush1.bf16.msra.mxu0 0
        %1658 = vmatprep.subr.bf16.mxu0 0
        %1659 = vmatpush1.bf16.msra.mxu0 0
        %1660 = vmatprep.subr.bf16.mxu0 0
        %1661 = vmatpush1.bf16.msra.mxu0 0
        %1662 = vmatprep.subr.bf16.mxu0 0
        %1663 = vmatpush1.bf16.msra.mxu0 0
        %1664 = vmatprep.subr.bf16.mxu0 0
        %1665 = vmatpush1.bf16.msra.mxu0 0
        %1666 = vmatprep.subr.bf16.mxu0 0
        %1667 = vmatpush1.bf16.msra.mxu0 0
        %1668 = vmatprep.subr.bf16.mxu0 0
        %1669 = vmatpush1.bf16.msra.mxu0 0
        %1670 = vmatprep.subr.bf16.mxu0 0
        %1671 = vmatpush1.bf16.msra.mxu0 0
        %1672 = vmatprep.subr.bf16.mxu0 0
        %1673 = vmatpush1.bf16.msra.mxu0 0
        %1674 = vmatprep.subr.bf16.mxu0 0
        %1675 = vmatpush1.bf16.msra.mxu0 0
        %1676 = vmatprep.subr.bf16.mxu0 0
        %1677 = vmatpush1.bf16.msra.mxu0 0
        %1678 = vmatprep.mubr.bf16.mxu0 0
        %1679 = vmatmul.mubr.bf16.gmra.mrb[0].mxu0 %v1641
        %v1680 = vpop.f32.mrb[0].mxu0
        %v1681 = vadd.f32 0.0, %v1680
        %v1682 = vpop.f32.mrb[0].mxu0
        %v1683 = vpop.f32.mrb[0].mxu0
        %v1684 = vpop.f32.mrb[0].mxu0
        %1685 = vdwg.mxu0
        %1687 = vrot.lane.b32.xlu0 %v1461, 8
        %v1688 = vpop.permute.xlu0 %1687
        %1691 = vrot.lane.b32.xlu0 %v1571, 16
        %v1692 = vpop.permute.xlu0 %1691
        %1695 = vrot.lane.b32.xlu0 %v1681, 24
        %v1696 = vpop.permute.xlu0 %1695
        %v1698 = vsel %vm788, %v1351, %v1688
        %v1699 = vsel %vm1241, %v1698, %v1692
        %v1700 = vsel %vm1243, %v1699, %v1696
        %v1701 = vpack.c.bf16 %v1700, %v1244
        %v1702 = vlaneseq
        %v1703 = vshrl.u32 %v1702, 7
        %v1704 = vsub.s32 3, %v1703
        %v1705 = vrot.slane %v681, %v1704
        %v1710 = vunpack.c.l.b16 %v781
        %v1711 = vunpack.c.l.b16 %v782
        %v1712 = vunpack.c.l.b16 %v783
        %v1713 = vunpack.c.l.b16 %v784
        %v1714 = vpack.c.b16 %v1711, %v1710
        %v1715 = vpack.c.b16 %v1713, %v1712
        %v1719 = vsel %vm705, %v1701, 0
        %1721 = vmatprep.subr.bf16.mxu0 0
        %1722 = vmatpush1.bf16.msra.mxu0 %v1714
        %1723 = vmatprep.subr.bf16.mxu0 0
        %1724 = vmatpush1.bf16.msra.mxu0 %v1715
        %1725 = vmatprep.subr.bf16.mxu0 0
        %1726 = vmatpush1.bf16.msra.mxu0 0
        %1727 = vmatprep.subr.bf16.mxu0 0
        %1728 = vmatpush1.bf16.msra.mxu0 0
        %1729 = vmatprep.subr.bf16.mxu0 0
        %1730 = vmatpush1.bf16.msra.mxu0 0
        %1731 = vmatprep.subr.bf16.mxu0 0
        %1732 = vmatpush1.bf16.msra.mxu0 0
        %1733 = vmatprep.subr.bf16.mxu0 0
        %1734 = vmatpush1.bf16.msra.mxu0 0
        %1735 = vmatprep.subr.bf16.mxu0 0
        %1736 = vmatpush1.bf16.msra.mxu0 0
        %1737 = vmatprep.subr.bf16.mxu0 0
        %1738 = vmatpush1.bf16.msra.mxu0 0
        %1739 = vmatprep.subr.bf16.mxu0 0
        %1740 = vmatpush1.bf16.msra.mxu0 0
        %1741 = vmatprep.subr.bf16.mxu0 0
        %1742 = vmatpush1.bf16.msra.mxu0 0
        %1743 = vmatprep.subr.bf16.mxu0 0
        %1744 = vmatpush1.bf16.msra.mxu0 0
        %1745 = vmatprep.subr.bf16.mxu0 0
        %1746 = vmatpush1.bf16.msra.mxu0 0
        %1747 = vmatprep.subr.bf16.mxu0 0
        %1748 = vmatpush1.bf16.msra.mxu0 0
        %1749 = vmatprep.subr.bf16.mxu0 0
        %1750 = vmatpush1.bf16.msra.mxu0 0
        %1751 = vmatprep.subr.bf16.mxu0 0
        %1752 = vmatpush1.bf16.msra.mxu0 0
        %1753 = vmatprep.mubr.bf16.mxu0 0
        %1754 = vmatmul.mubr.bf16.gmra.mrb[0].mxu0 %v1719
        %v1755 = vpop.f32.mrb[0].mxu0
        %v1756 = vadd.f32 %v1705, %v1755
        %v1757 = vpop.f32.mrb[0].mxu0
        %v1758 = vpop.f32.mrb[0].mxu0
        %v1759 = vadd.f32 %v1705, %v1758
        %v1760 = vpop.f32.mrb[0].mxu0
        %1761 = vdwg.mxu0
        %v1762 = vadd.f32 %v677, %v1756
        %v1763 = vadd.f32 %v678, %v1759
        %v1764 = vsel %vm705, %v1762, 0.0
        %1765 = vadd.xlane.f32.xlu0 %v1764
        %v1766 = vpop.xlane.xlu0 %1765
        %v1767 = vsel %vm705, %v1763, 0.0
        %1768 = vadd.xlane.f32.xlu0 %v1767
        %v1769 = vpop.xlane.xlu0 %1768
        %v1770 = vrcp.pop 32.0
        %v1771 = vmul.f32 %v1766, %v1770
        %v1772 = vmul.f32 %v1769, %v1770
        %v1773 = vsub.f32 %v1762, %v1771
        %v1774 = vsub.f32 %v1763, %v1772
        %v1775 = vmul.f32 %v1773, %v1773
        %v1776 = vmul.f32 %v1774, %v1774
        %v1777 = vsel %vm705, %v1775, 0.0
        %1778 = vadd.xlane.f32.xlu0 %v1777
        %v1779 = vpop.xlane.xlu0 %1778
        %v1780 = vsel %vm705, %v1776, 0.0
        %1781 = vadd.xlane.f32.xlu0 %v1780
        %v1782 = vpop.xlane.xlu0 %1781
        %v1783 = vmul.f32 %v1779, %v1770
        %v1784 = vmul.f32 %v1782, %v1770
        %v1785 = vadd.f32 %v1783, 1e-05
        %v1786 = vadd.f32 %v1784, 1e-05
        %v1787 = vrsqrt.pop %v1785
        %v1788 = vrsqrt.pop %v1786
        %v1789 = vmul.f32 %v1773, %v1787
        %v1790 = vmul.f32 %v1774, %v1788
        %v1791 = vlaneseq
        %v1792 = vshrl.u32 %v1791, 7
        %v1793 = vsub.s32 1, %v1792
        %v1794 = vrot.slane %v682, %v1793
        %v1795 = vmul.f32 %v1789, %v1794
        %v1796 = vmul.f32 %v1790, %v1794
        %v1797 = vlaneseq
        %v1798 = vshrl.u32 %v1797, 7
        %v1799 = vsub.s32 2, %v1798
        %v1800 = vrot.slane %v682, %v1799
        %v1801 = vadd.f32 %v1795, %v1800
        %v1802 = vadd.f32 %v1796, %v1800
        %v1803 = vpack.c.bf16 %v1802, %v1801
        %s1804 = smul.addr %s686, 4
        %s1805 = scalar_lea.vmem [#allocation12], %s1804
        %v1806 = vld [vmem:[%s1805] sm:$0xf]
        %v1807 = vld [vmem:[%s1805 + $0x4] sm:$0xf]
        %v1808 = vld [vmem:[%s1805 + $0x8] sm:$0xf]
        %v1809 = vld [vmem:[%s1805 + $0xc] sm:$0xf]
        %v1810 = vlaneseq
        %v1811 = vshrl.u32 %v1810, 7
        %v1812 = vsub.s32 4, %v1811
        %v1813 = vrot.slane %v681, %v1812
        %v1818 = vunpack.c.l.b16 %v1806
        %v1819 = vunpack.c.l.b16 %v1807
        %v1820 = vunpack.c.l.b16 %v1808
        %v1821 = vunpack.c.l.b16 %v1809
        %v1822 = vpack.c.b16 %v1819, %v1818
        %v1823 = vpack.c.b16 %v1821, %v1820
        %v1827 = vsel %vm705, %v1803, 0
        %1829 = vmatprep.subr.bf16.mxu0 0
        %1830 = vmatpush1.bf16.msra.mxu0 %v1822
        %1831 = vmatprep.subr.bf16.mxu0 0
        %1832 = vmatpush1.bf16.msra.mxu0 %v1823
        %1833 = vmatprep.subr.bf16.mxu0 0
        %1834 = vmatpush1.bf16.msra.mxu0 0
        %1835 = vmatprep.subr.bf16.mxu0 0
        %1836 = vmatpush1.bf16.msra.mxu0 0
        %1837 = vmatprep.subr.bf16.mxu0 0
        %1838 = vmatpush1.bf16.msra.mxu0 0
        %1839 = vmatprep.subr.bf16.mxu0 0
        %1840 = vmatpush1.bf16.msra.mxu0 0
        %1841 = vmatprep.subr.bf16.mxu0 0
        %1842 = vmatpush1.bf16.msra.mxu0 0
        %1843 = vmatprep.subr.bf16.mxu0 0
        %1844 = vmatpush1.bf16.msra.mxu0 0
        %1845 = vmatprep.subr.bf16.mxu0 0
        %1846 = vmatpush1.bf16.msra.mxu0 0
        %1847 = vmatprep.subr.bf16.mxu0 0
        %1848 = vmatpush1.bf16.msra.mxu0 0
        %1849 = vmatprep.subr.bf16.mxu0 0
        %1850 = vmatpush1.bf16.msra.mxu0 0
        %1851 = vmatprep.subr.bf16.mxu0 0
        %1852 = vmatpush1.bf16.msra.mxu0 0
        %1853 = vmatprep.subr.bf16.mxu0 0
        %1854 = vmatpush1.bf16.msra.mxu0 0
        %1855 = vmatprep.subr.bf16.mxu0 0
        %1856 = vmatpush1.bf16.msra.mxu0 0
        %1857 = vmatprep.subr.bf16.mxu0 0
        %1858 = vmatpush1.bf16.msra.mxu0 0
        %1859 = vmatprep.subr.bf16.mxu0 0
        %1860 = vmatpush1.bf16.msra.mxu0 0
        %1861 = vmatprep.mubr.bf16.mxu0 0
        %1862 = vmatmul.mubr.bf16.gmra.mrb[0].mxu0 %v1827
        %v1863 = vpop.f32.mrb[0].mxu0
        %v1864 = vadd.f32 %v1813, %v1863
        %v1865 = vpop.f32.mrb[0].mxu0
        %v1866 = vpop.f32.mrb[0].mxu0
        %v1867 = vadd.f32 %v1813, %v1866
        %v1868 = vpop.f32.mrb[0].mxu0
        %1869 = vdwg.mxu0
        %v1870 = vpack.c.bf16 %v1867, %v1864
        %v1871 = vld [vmem:[%s568] sm:$0xf]
        %v1872 = vld [vmem:[%s568 + $0x4] sm:$0xf]
        %v1873 = vld [vmem:[%s568 + $0x8] sm:$0xf]
        %v1874 = vld [vmem:[%s568 + $0xc] sm:$0xf]
        %v1875 = vld [vmem:[%s568 + $0x10] sm:$0xf]
        %v1876 = vld [vmem:[%s568 + $0x14] sm:$0xf]
        %v1877 = vld [vmem:[%s568 + $0x18] sm:$0xf]
        %v1878 = vld [vmem:[%s568 + $0x1c] sm:$0xf]
        %v1879 = vld [vmem:[%s568 + $0x20] sm:$0xf]
        %v1880 = vld [vmem:[%s568 + $0x24] sm:$0xf]
        %v1881 = vld [vmem:[%s568 + $0x28] sm:$0xf]
        %v1882 = vld [vmem:[%s568 + $0x2c] sm:$0xf]
        %v1883 = vld [vmem:[%s568 + $0x30] sm:$0xf]
        %v1884 = vld [vmem:[%s568 + $0x34] sm:$0xf]
        %v1885 = vld [vmem:[%s568 + $0x38] sm:$0xf]
        %v1886 = vld [vmem:[%s568 + $0x3c] sm:$0xf]
        %v1887 = vld [vmem:[%s568 + $0x40] sm:$0xf]
        %v1888 = vld [vmem:[%s568 + $0x44] sm:$0xf]
        %v1889 = vld [vmem:[%s568 + $0x48] sm:$0xf]
        %v1890 = vld [vmem:[%s568 + $0x4c] sm:$0xf]
        %v1891 = vld [vmem:[%s568 + $0x50] sm:$0xf]
        %v1892 = vld [vmem:[%s568 + $0x54] sm:$0xf]
        %v1893 = vld [vmem:[%s568 + $0x58] sm:$0xf]
        %v1894 = vld [vmem:[%s568 + $0x5c] sm:$0xf]
        %v1895 = vld [vmem:[%s568 + $0x60] sm:$0xf]
        %v1896 = vld [vmem:[%s568 + $0x64] sm:$0xf]
        %v1897 = vld [vmem:[%s568 + $0x68] sm:$0xf]
        %v1898 = vld [vmem:[%s568 + $0x6c] sm:$0xf]
        %v1899 = vld [vmem:[%s568 + $0x70] sm:$0xf]
        %v1900 = vld [vmem:[%s568 + $0x74] sm:$0xf]
        %v1901 = vld [vmem:[%s568 + $0x78] sm:$0xf]
        %v1902 = vld [vmem:[%s568 + $0x7c] sm:$0xf]
        %s1903 = smul.addr %s686, 4
        %s1904 = scalar_lea.vmem [#allocation14], %s1903
        %v1905 = vld [vmem:[%s1904] sm:$0xf]
        %v1906 = vld [vmem:[%s1904 + $0x4] sm:$0xf]
        %v1907 = vld [vmem:[%s1904 + $0x8] sm:$0xf]
        %v1908 = vld [vmem:[%s1904 + $0xc] sm:$0xf]
        %v1941 = vunpack.c.l.b16 %v1871
        %v1942 = vunpack.c.l.b16 %v1872
        %v1943 = vunpack.c.l.b16 %v1873
        %v1944 = vunpack.c.l.b16 %v1874
        %v1945 = vunpack.c.l.b16 %v1875
        %v1946 = vunpack.c.l.b16 %v1876
        %v1947 = vunpack.c.l.b16 %v1877
        %v1948 = vunpack.c.l.b16 %v1878
        %v1949 = vunpack.c.l.b16 %v1879
        %v1950 = vunpack.c.l.b16 %v1880
        %v1951 = vunpack.c.l.b16 %v1881
        %v1952 = vunpack.c.l.b16 %v1882
        %v1953 = vunpack.c.l.b16 %v1883
        %v1954 = vunpack.c.l.b16 %v1884
        %v1955 = vunpack.c.l.b16 %v1885
        %v1956 = vunpack.c.l.b16 %v1886
        %v1957 = vunpack.c.l.b16 %v1887
        %v1958 = vunpack.c.l.b16 %v1888
        %v1959 = vunpack.c.l.b16 %v1889
        %v1960 = vunpack.c.l.b16 %v1890
        %v1961 = vunpack.c.l.b16 %v1891
        %v1962 = vunpack.c.l.b16 %v1892
        %v1963 = vunpack.c.l.b16 %v1893
        %v1964 = vunpack.c.l.b16 %v1894
        %v1965 = vunpack.c.l.b16 %v1895
        %v1966 = vunpack.c.l.b16 %v1896
        %v1967 = vunpack.c.l.b16 %v1897
        %v1968 = vunpack.c.l.b16 %v1898
        %v1969 = vunpack.c.l.b16 %v1899
        %v1970 = vunpack.c.l.b16 %v1900
        %v1971 = vunpack.c.l.b16 %v1901
        %v1972 = vunpack.c.l.b16 %v1902
        %v1973 = vpack.c.b16 %v1942, %v1941
        %v1974 = vpack.c.b16 %v1944, %v1943
        %v1975 = vpack.c.b16 %v1946, %v1945
        %v1976 = vpack.c.b16 %v1948, %v1947
        %v1977 = vpack.c.b16 %v1950, %v1949
        %v1978 = vpack.c.b16 %v1952, %v1951
        %v1979 = vpack.c.b16 %v1954, %v1953
        %v1980 = vpack.c.b16 %v1956, %v1955
        %v1981 = vpack.c.b16 %v1958, %v1957
        %v1982 = vpack.c.b16 %v1960, %v1959
        %v1983 = vpack.c.b16 %v1962, %v1961
        %v1984 = vpack.c.b16 %v1964, %v1963
        %v1985 = vpack.c.b16 %v1966, %v1965
        %v1986 = vpack.c.b16 %v1968, %v1967
        %v1987 = vpack.c.b16 %v1970, %v1969
        %v1988 = vpack.c.b16 %v1972, %v1971
        %v1993 = vunpack.c.l.b16 %v1905
        %v1994 = vunpack.c.l.b16 %v1906
        %v1995 = vunpack.c.l.b16 %v1907
        %v1996 = vunpack.c.l.b16 %v1908
        %v1997 = vpack.c.b16 %v1994, %v1993
        %v1998 = vpack.c.b16 %v1996, %v1995
        %v2002 = vsel %vm705, %v1973, 0
        %v2005 = vsel %vm705, %v1974, 0
        %v2008 = vsel %vm705, %v1975, 0
        %v2011 = vsel %vm705, %v1976, 0
        %v2014 = vsel %vm705, %v1977, 0
        %v2017 = vsel %vm705, %v1978, 0
        %v2020 = vsel %vm705, %v1979, 0
        %v2023 = vsel %vm705, %v1980, 0
        %v2026 = vsel %vm705, %v1981, 0
        %v2029 = vsel %vm705, %v1982, 0
        %v2032 = vsel %vm705, %v1983, 0
        %v2035 = vsel %vm705, %v1984, 0
        %v2038 = vsel %vm705, %v1985, 0
        %v2041 = vsel %vm705, %v1986, 0
        %v2044 = vsel %vm705, %v1987, 0
        %v2047 = vsel %vm705, %v1988, 0
        %2049 = vmatprep.subr.bf16.mxu0 0
        %2050 = vmatpush1.bf16.msra.mxu0 %v1997
        %2051 = vmatprep.subr.bf16.mxu0 0
        %2052 = vmatpush1.bf16.msra.mxu0 %v1998
        %2053 = vmatprep.subr.bf16.mxu0 0
        %2054 = vmatpush1.bf16.msra.mxu0 0
        %2055 = vmatprep.subr.bf16.mxu0 0
        %2056 = vmatpush1.bf16.msra.mxu0 0
        %2057 = vmatprep.subr.bf16.mxu0 0
        %2058 = vmatpush1.bf16.msra.mxu0 0
        %2059 = vmatprep.subr.bf16.mxu0 0
        %2060 = vmatpush1.bf16.msra.mxu0 0
        %2061 = vmatprep.subr.bf16.mxu0 0
        %2062 = vmatpush1.bf16.msra.mxu0 0
        %2063 = vmatprep.subr.bf16.mxu0 0
        %2064 = vmatpush1.bf16.msra.mxu0 0
        %2065 = vmatprep.subr.bf16.mxu0 0
        %2066 = vmatpush1.bf16.msra.mxu0 0
        %2067 = vmatprep.subr.bf16.mxu0 0
        %2068 = vmatpush1.bf16.msra.mxu0 0
        %2069 = vmatprep.subr.bf16.mxu0 0
        %2070 = vmatpush1.bf16.msra.mxu0 0
        %2071 = vmatprep.subr.bf16.mxu0 0
        %2072 = vmatpush1.bf16.msra.mxu0 0
        %2073 = vmatprep.subr.bf16.mxu0 0
        %2074 = vmatpush1.bf16.msra.mxu0 0
        %2075 = vmatprep.subr.bf16.mxu0 0
        %2076 = vmatpush1.bf16.msra.mxu0 0
        %2077 = vmatprep.subr.bf16.mxu0 0
        %2078 = vmatpush1.bf16.msra.mxu0 0
        %2079 = vmatprep.subr.bf16.mxu0 0
        %2080 = vmatpush1.bf16.msra.mxu0 0
        %2081 = vmatprep.mubr.bf16.mxu0 0
        %2082 = vmatmul.mubr.bf16.gmra.mrb[0].mxu0 %v2002
        %v2083 = vpop.f32.mrb[0].mxu0
        %v2084 = vadd.f32 0.0, %v2083
        %v2085 = vpop.f32.mrb[0].mxu0
        %v2086 = vpop.f32.mrb[0].mxu0
        %v2087 = vadd.f32 0.0, %v2086
        %v2088 = vpop.f32.mrb[0].mxu0
        %2089 = vmatprep.mubr.bf16.mxu0 0
        %2090 = vmatmul.mubr.bf16.gmra.mrb[0].mxu0 %v2005
        %v2091 = vpop.f32.mrb[0].mxu0
        %v2092 = vadd.f32 0.0, %v2091
        %v2093 = vpop.f32.mrb[0].mxu0
        %v2094 = vpop.f32.mrb[0].mxu0
        %v2095 = vadd.f32 0.0, %v2094
        %v2096 = vpop.f32.mrb[0].mxu0
        %2097 = vmatprep.mubr.bf16.mxu0 0
        %2098 = vmatmul.mubr.bf16.gmra.mrb[0].mxu0 %v2008
        %v2099 = vpop.f32.mrb[0].mxu0
        %v2100 = vadd.f32 0.0, %v2099
        %v2101 = vpop.f32.mrb[0].mxu0
        %v2102 = vpop.f32.mrb[0].mxu0
        %v2103 = vadd.f32 0.0, %v2102
        %v2104 = vpop.f32.mrb[0].mxu0
        %2105 = vmatprep.mubr.bf16.mxu0 0
        %2106 = vmatmul.mubr.bf16.gmra.mrb[0].mxu0 %v2011
        %v2107 = vpop.f32.mrb[0].mxu0
        %v2108 = vadd.f32 0.0, %v2107
        %v2109 = vpop.f32.mrb[0].mxu0
        %v2110 = vpop.f32.mrb[0].mxu0
        %v2111 = vadd.f32 0.0, %v2110
        %v2112 = vpop.f32.mrb[0].mxu0
        %2113 = vmatprep.mubr.bf16.mxu0 0
        %2114 = vmatmul.mubr.bf16.gmra.mrb[0].mxu0 %v2014
        %v2115 = vpop.f32.mrb[0].mxu0
        %v2116 = vadd.f32 0.0, %v2115
        %v2117 = vpop.f32.mrb[0].mxu0
        %v2118 = vpop.f32.mrb[0].mxu0
        %v2119 = vadd.f32 0.0, %v2118
        %v2120 = vpop.f32.mrb[0].mxu0
        %2121 = vmatprep.mubr.bf16.mxu0 0
        %2122 = vmatmul.mubr.bf16.gmra.mrb[0].mxu0 %v2017
        %v2123 = vpop.f32.mrb[0].mxu0
        %v2124 = vadd.f32 0.0, %v2123
        %v2125 = vpop.f32.mrb[0].mxu0
        %v2126 = vpop.f32.mrb[0].mxu0
        %v2127 = vadd.f32 0.0, %v2126
        %v2128 = vpop.f32.mrb[0].mxu0
        %2129 = vmatprep.mubr.bf16.mxu0 0
        %2130 = vmatmul.mubr.bf16.gmra.mrb[0].mxu0 %v2020
        %v2131 = vpop.f32.mrb[0].mxu0
        %v2132 = vadd.f32 0.0, %v2131
        %v2133 = vpop.f32.mrb[0].mxu0
        %v2134 = vpop.f32.mrb[0].mxu0
        %v2135 = vadd.f32 0.0, %v2134
        %v2136 = vpop.f32.mrb[0].mxu0
        %2137 = vmatprep.mubr.bf16.mxu0 0
        %2138 = vmatmul.mubr.bf16.gmra.mrb[0].mxu0 %v2023
        %v2139 = vpop.f32.mrb[0].mxu0
        %v2140 = vadd.f32 0.0, %v2139
        %v2141 = vpop.f32.mrb[0].mxu0
        %v2142 = vpop.f32.mrb[0].mxu0
        %v2143 = vadd.f32 0.0, %v2142
        %v2144 = vpop.f32.mrb[0].mxu0
        %2145 = vmatprep.mubr.bf16.mxu0 0
        %2146 = vmatmul.mubr.bf16.gmra.mrb[0].mxu0 %v2026
        %v2147 = vpop.f32.mrb[0].mxu0
        %v2148 = vadd.f32 0.0, %v2147
        %v2149 = vpop.f32.mrb[0].mxu0
        %v2150 = vpop.f32.mrb[0].mxu0
        %v2151 = vadd.f32 0.0, %v2150
        %v2152 = vpop.f32.mrb[0].mxu0
        %2153 = vmatprep.mubr.bf16.mxu0 0
        %2154 = vmatmul.mubr.bf16.gmra.mrb[0].mxu0 %v2029
        %v2155 = vpop.f32.mrb[0].mxu0
        %v2156 = vadd.f32 0.0, %v2155
        %v2157 = vpop.f32.mrb[0].mxu0
        %v2158 = vpop.f32.mrb[0].mxu0
        %v2159 = vadd.f32 0.0, %v2158
        %v2160 = vpop.f32.mrb[0].mxu0
        %2161 = vmatprep.mubr.bf16.mxu0 0
        %2162 = vmatmul.mubr.bf16.gmra.mrb[0].mxu0 %v2032
        %v2163 = vpop.f32.mrb[0].mxu0
        %v2164 = vadd.f32 0.0, %v2163
        %v2165 = vpop.f32.mrb[0].mxu0
        %v2166 = vpop.f32.mrb[0].mxu0
        %v2167 = vadd.f32 0.0, %v2166
        %v2168 = vpop.f32.mrb[0].mxu0
        %2169 = vmatprep.mubr.bf16.mxu0 0
        %2170 = vmatmul.mubr.bf16.gmra.mrb[0].mxu0 %v2035
        %v2171 = vpop.f32.mrb[0].mxu0
        %v2172 = vadd.f32 0.0, %v2171
        %v2173 = vpop.f32.mrb[0].mxu0
        %v2174 = vpop.f32.mrb[0].mxu0
        %v2175 = vadd.f32 0.0, %v2174
        %v2176 = vpop.f32.mrb[0].mxu0
        %2177 = vmatprep.mubr.bf16.mxu0 0
        %2178 = vmatmul.mubr.bf16.gmra.mrb[0].mxu0 %v2038
        %v2179 = vpop.f32.mrb[0].mxu0
        %v2180 = vadd.f32 0.0, %v2179
        %v2181 = vpop.f32.mrb[0].mxu0
        %v2182 = vpop.f32.mrb[0].mxu0
        %v2183 = vadd.f32 0.0, %v2182
        %v2184 = vpop.f32.mrb[0].mxu0
        %2185 = vmatprep.mubr.bf16.mxu0 0
        %2186 = vmatmul.mubr.bf16.gmra.mrb[0].mxu0 %v2041
        %v2187 = vpop.f32.mrb[0].mxu0
        %v2188 = vadd.f32 0.0, %v2187
        %v2189 = vpop.f32.mrb[0].mxu0
        %v2190 = vpop.f32.mrb[0].mxu0
        %v2191 = vadd.f32 0.0, %v2190
        %v2192 = vpop.f32.mrb[0].mxu0
        %2193 = vmatprep.mubr.bf16.mxu0 0
        %2194 = vmatmul.mubr.bf16.gmra.mrb[0].mxu0 %v2044
        %v2195 = vpop.f32.mrb[0].mxu0
        %v2196 = vadd.f32 0.0, %v2195
        %v2197 = vpop.f32.mrb[0].mxu0
        %v2198 = vpop.f32.mrb[0].mxu0
        %v2199 = vadd.f32 0.0, %v2198
        %v2200 = vpop.f32.mrb[0].mxu0
        %2201 = vmatprep.mubr.bf16.mxu0 0
        %2202 = vmatmul.mubr.bf16.gmra.mrb[0].mxu0 %v2047
        %v2203 = vpop.f32.mrb[0].mxu0
        %v2204 = vadd.f32 0.0, %v2203
        %v2205 = vpop.f32.mrb[0].mxu0
        %v2206 = vpop.f32.mrb[0].mxu0
        %v2207 = vadd.f32 0.0, %v2206
        %v2208 = vpop.f32.mrb[0].mxu0
        %2209 = vdwg.mxu0
        %v2210 = vlaneseq
        %v2211 = vshrl.u32 %v2210, 7
        %v2212 = vsub.s32 5, %v2211
        %v2213 = vrot.slane %v681, %v2212
        %v2214 = vadd.f32 %v2084, %v2213
        %v2215 = vadd.f32 %v2087, %v2213
        %v2216 = vadd.f32 %v2092, %v2213
        %v2217 = vadd.f32 %v2095, %v2213
        %v2218 = vadd.f32 %v2100, %v2213
        %v2219 = vadd.f32 %v2103, %v2213
        %v2220 = vadd.f32 %v2108, %v2213
        %v2221 = vadd.f32 %v2111, %v2213
        %v2222 = vadd.f32 %v2116, %v2213
        %v2223 = vadd.f32 %v2119, %v2213
        %v2224 = vadd.f32 %v2124, %v2213
        %v2225 = vadd.f32 %v2127, %v2213
        %v2226 = vadd.f32 %v2132, %v2213
        %v2227 = vadd.f32 %v2135, %v2213
        %v2228 = vadd.f32 %v2140, %v2213
        %v2229 = vadd.f32 %v2143, %v2213
        %v2230 = vadd.f32 %v2148, %v2213
        %v2231 = vadd.f32 %v2151, %v2213
        %v2232 = vadd.f32 %v2156, %v2213
        %v2233 = vadd.f32 %v2159, %v2213
        %v2234 = vadd.f32 %v2164, %v2213
        %v2235 = vadd.f32 %v2167, %v2213
        %v2236 = vadd.f32 %v2172, %v2213
        %v2237 = vadd.f32 %v2175, %v2213
        %v2238 = vadd.f32 %v2180, %v2213
        %v2239 = vadd.f32 %v2183, %v2213
        %v2240 = vadd.f32 %v2188, %v2213
        %v2241 = vadd.f32 %v2191, %v2213
        %v2242 = vadd.f32 %v2196, %v2213
        %v2243 = vadd.f32 %v2199, %v2213
        %v2244 = vadd.f32 %v2204, %v2213
        %v2245 = vadd.f32 %v2207, %v2213
        %v2246 = vpack.c.bf16 %v2215, %v2214
        %v2247 = vpack.c.bf16 %v2217, %v2216
        %v2248 = vpack.c.bf16 %v2219, %v2218
        %v2249 = vpack.c.bf16 %v2221, %v2220
        %v2250 = vpack.c.bf16 %v2223, %v2222
        %v2251 = vpack.c.bf16 %v2225, %v2224
        %v2252 = vpack.c.bf16 %v2227, %v2226
        %v2253 = vpack.c.bf16 %v2229, %v2228
        %v2254 = vpack.c.bf16 %v2231, %v2230
        %v2255 = vpack.c.bf16 %v2233, %v2232
        %v2256 = vpack.c.bf16 %v2235, %v2234
        %v2257 = vpack.c.bf16 %v2237, %v2236
        %v2258 = vpack.c.bf16 %v2239, %v2238
        %v2259 = vpack.c.bf16 %v2241, %v2240
        %v2260 = vpack.c.bf16 %v2243, %v2242
        %v2261 = vpack.c.bf16 %v2245, %v2244
        %v2262 = vlaneseq
        %v2263 = vshrl.u32 %v2262, 7
        %v2264 = vsub.s32 6, %v2263
        %v2265 = vrot.slane %v681, %v2264
        %2267 = vrot.lane.b32.xlu0 %v2265, 32
        %v2268 = vpop.permute.xlu0 %2267
        %v2270 = vadd.f32 %v2084, %v2268
        %v2271 = vadd.f32 %v2087, %v2268
        %v2272 = vadd.f32 %v2092, %v2268
        %v2273 = vadd.f32 %v2095, %v2268
        %v2274 = vadd.f32 %v2100, %v2268
        %v2275 = vadd.f32 %v2103, %v2268
        %v2276 = vadd.f32 %v2108, %v2268
        %v2277 = vadd.f32 %v2111, %v2268
        %v2278 = vadd.f32 %v2116, %v2268
        %v2279 = vadd.f32 %v2119, %v2268
        %v2280 = vadd.f32 %v2124, %v2268
        %v2281 = vadd.f32 %v2127, %v2268
        %v2282 = vadd.f32 %v2132, %v2268
        %v2283 = vadd.f32 %v2135, %v2268
        %v2284 = vadd.f32 %v2140, %v2268
        %v2285 = vadd.f32 %v2143, %v2268
        %v2286 = vadd.f32 %v2148, %v2268
        %v2287 = vadd.f32 %v2151, %v2268
        %v2288 = vadd.f32 %v2156, %v2268
        %v2289 = vadd.f32 %v2159, %v2268
        %v2290 = vadd.f32 %v2164, %v2268
        %v2291 = vadd.f32 %v2167, %v2268
        %v2292 = vadd.f32 %v2172, %v2268
        %v2293 = vadd.f32 %v2175, %v2268
        %v2294 = vadd.f32 %v2180, %v2268
        %v2295 = vadd.f32 %v2183, %v2268
        %v2296 = vadd.f32 %v2188, %v2268
        %v2297 = vadd.f32 %v2191, %v2268
        %v2298 = vadd.f32 %v2196, %v2268
        %v2299 = vadd.f32 %v2199, %v2268
        %v2300 = vadd.f32 %v2204, %v2268
        %v2301 = vadd.f32 %v2207, %v2268
        %v2302 = vpack.c.bf16 %v2271, %v2270
        %v2303 = vpack.c.bf16 %v2273, %v2272
        %v2304 = vpack.c.bf16 %v2275, %v2274
        %v2305 = vpack.c.bf16 %v2277, %v2276
        %v2306 = vpack.c.bf16 %v2279, %v2278
        %v2307 = vpack.c.bf16 %v2281, %v2280
        %v2308 = vpack.c.bf16 %v2283, %v2282
        %v2309 = vpack.c.bf16 %v2285, %v2284
        %v2310 = vpack.c.bf16 %v2287, %v2286
        %v2311 = vpack.c.bf16 %v2289, %v2288
        %v2312 = vpack.c.bf16 %v2291, %v2290
        %v2313 = vpack.c.bf16 %v2293, %v2292
        %v2314 = vpack.c.bf16 %v2295, %v2294
        %v2315 = vpack.c.bf16 %v2297, %v2296
        %v2316 = vpack.c.bf16 %v2299, %v2298
        %v2317 = vpack.c.bf16 %v2301, %v2300
        %s2318 = smul.addr %s686, 4
        %s2319 = scalar_lea.vmem [#allocation15], %s2318
        %v2320 = vld [vmem:[%s2319] sm:$0xf]
        %v2321 = vld [vmem:[%s2319 + $0x4] sm:$0xf]
        %v2322 = vld [vmem:[%s2319 + $0x8] sm:$0xf]
        %v2323 = vld [vmem:[%s2319 + $0xc] sm:$0xf]
        %v2325 = vlaneseq
        %v2326 = vshrl.u32 %v2325, 7
        %v2327 = vsub.s32 0, %v2326
        %v2328 = vrot.slane %v683, %v2327
        %v2331 = vsel %vm788, %v1870, 0
        %v2334 = vsel %vm788, %v2246, 0
        %v2337 = vsel %vm788, %v2247, 0
        %v2340 = vsel %vm788, %v2248, 0
        %v2343 = vsel %vm788, %v2249, 0
        %v2346 = vsel %vm788, %v2250, 0
        %v2349 = vsel %vm788, %v2251, 0
        %v2352 = vsel %vm788, %v2252, 0
        %v2355 = vsel %vm788, %v2253, 0
        %2357 = vmatprep.subr.bf16.mxu0 0
        %2358 = vmatpush1.bf16.xpose.msra.mxu0 %v2334
        %2359 = vmatprep.subr.bf16.mxu0 0
        %2360 = vmatpush1.bf16.xpose.msra.mxu0 %v2337
        %2361 = vmatprep.subr.bf16.mxu0 0
        %2362 = vmatpush1.bf16.xpose.msra.mxu0 %v2340
        %2363 = vmatprep.subr.bf16.mxu0 0
        %2364 = vmatpush1.bf16.xpose.msra.mxu0 %v2343
        %2365 = vmatprep.subr.bf16.mxu0 0
        %2366 = vmatpush1.bf16.xpose.msra.mxu0 %v2346
        %2367 = vmatprep.subr.bf16.mxu0 0
        %2368 = vmatpush1.bf16.xpose.msra.mxu0 %v2349
        %2369 = vmatprep.subr.bf16.mxu0 0
        %2370 = vmatpush1.bf16.xpose.msra.mxu0 %v2352
        %2371 = vmatprep.subr.bf16.mxu0 0
        %2372 = vmatpush1.bf16.xpose.msra.mxu0 %v2355
        %2373 = vmatprep.subr.bf16.mxu0 0
        %2374 = vmatpush1.bf16.xpose.msra.mxu0 0
        %2375 = vmatprep.subr.bf16.mxu0 0
        %2376 = vmatpush1.bf16.xpose.msra.mxu0 0
        %2377 = vmatprep.subr.bf16.mxu0 0
        %2378 = vmatpush1.bf16.xpose.msra.mxu0 0
        %2379 = vmatprep.subr.bf16.mxu0 0
        %2380 = vmatpush1.bf16.xpose.msra.mxu0 0
        %2381 = vmatprep.subr.bf16.mxu0 0
        %2382 = vmatpush1.bf16.xpose.msra.mxu0 0
        %2383 = vmatprep.subr.bf16.mxu0 0
        %2384 = vmatpush1.bf16.xpose.msra.mxu0 0
        %2385 = vmatprep.subr.bf16.mxu0 0
        %2386 = vmatpush1.bf16.xpose.msra.mxu0 0
        %2387 = vmatprep.subr.bf16.mxu0 0
        %2388 = vmatpush1.bf16.xpose.msra.mxu0 0
        %2389 = vmatprep.mubr.bf16.mxu0 0
        %2390 = vmatmul.mubr.bf16.gmra.mrb[0].mxu0 %v2331
        %v2391 = vpop.f32.mrb[0].mxu0
        %v2392 = vadd.f32 %v2328, %v2391
        %v2393 = vpop.f32.mrb[0].mxu0
        %v2394 = vpop.f32.mrb[0].mxu0
        %v2395 = vpop.f32.mrb[0].mxu0
        %2396 = vdwg.mxu0
        %2397 = vmax.xlane.f32.xlu0 %v2392
        %v2398 = vpop.xlane.xlu0 %2397
        %v2399 = vsub.f32 %v2392, %v2398
        %v2400 = vmul.f32 %v2399, 1.442695
        %v2401 = vpow.pop %v2400
        %2402 = vadd.xlane.f32.xlu0 %v2401
        %v2403 = vpop.xlane.xlu0 %2402
        %v2404 = vrcp.pop %v2403
        %v2405 = vmul.f32 %v2401, %v2404
        %v2406 = vpack.c.bf16 %v2405, %v2405
        %2415 = vrot.lane.b32.xlu0 %v2302, 96
        %v2416 = vpop.permute.xlu0 %2415
        %2417 = vrot.lane.b32.xlu0 %v2303, 96
        %v2418 = vpop.permute.xlu0 %2417
        %2419 = vrot.lane.b32.xlu0 %v2304, 96
        %v2420 = vpop.permute.xlu0 %2419
        %2421 = vrot.lane.b32.xlu0 %v2305, 96
        %v2422 = vpop.permute.xlu0 %2421
        %2423 = vrot.lane.b32.xlu0 %v2306, 96
        %v2424 = vpop.permute.xlu0 %2423
        %2425 = vrot.lane.b32.xlu0 %v2307, 96
        %v2426 = vpop.permute.xlu0 %2425
        %2427 = vrot.lane.b32.xlu0 %v2308, 96
        %v2428 = vpop.permute.xlu0 %2427
        %2429 = vrot.lane.b32.xlu0 %v2309, 96
        %v2430 = vpop.permute.xlu0 %2429
        %2439 = vmatprep.subr.bf16.mxu0 0
        %2440 = vmatpush1.bf16.msra.mxu0 %v2416
        %2441 = vmatprep.subr.bf16.mxu0 0
        %2442 = vmatpush1.bf16.msra.mxu0 %v2418
        %2443 = vmatprep.subr.bf16.mxu0 0
        %2444 = vmatpush1.bf16.msra.mxu0 %v2420
        %2445 = vmatprep.subr.bf16.mxu0 0
        %2446 = vmatpush1.bf16.msra.mxu0 %v2422
        %2447 = vmatprep.subr.bf16.mxu0 0
        %2448 = vmatpush1.bf16.msra.mxu0 %v2424
        %2449 = vmatprep.subr.bf16.mxu0 0
        %2450 = vmatpush1.bf16.msra.mxu0 %v2426
        %2451 = vmatprep.subr.bf16.mxu0 0
        %2452 = vmatpush1.bf16.msra.mxu0 %v2428
        %2453 = vmatprep.subr.bf16.mxu0 0
        %2454 = vmatpush1.bf16.msra.mxu0 %v2430
        %2455 = vmatprep.subr.bf16.mxu0 0
        %2456 = vmatpush1.bf16.msra.mxu0 0
        %2457 = vmatprep.subr.bf16.mxu0 0
        %2458 = vmatpush1.bf16.msra.mxu0 0
        %2459 = vmatprep.subr.bf16.mxu0 0
        %2460 = vmatpush1.bf16.msra.mxu0 0
        %2461 = vmatprep.subr.bf16.mxu0 0
        %2462 = vmatpush1.bf16.msra.mxu0 0
        %2463 = vmatprep.subr.bf16.mxu0 0
        %2464 = vmatpush1.bf16.msra.mxu0 0
        %2465 = vmatprep.subr.bf16.mxu0 0
        %2466 = vmatpush1.bf16.msra.mxu0 0
        %2467 = vmatprep.subr.bf16.mxu0 0
        %2468 = vmatpush1.bf16.msra.mxu0 0
        %2469 = vmatprep.subr.bf16.mxu0 0
        %2470 = vmatpush1.bf16.msra.mxu0 0
        %2471 = vmatprep.mubr.bf16.mxu0 0
        %2472 = vmatmul.mubr.bf16.gmra.mrb[0].mxu0 %v2406
        %v2473 = vpop.f32.mrb[0].mxu0
        %v2474 = vadd.f32 0.0, %v2473
        %v2475 = vpop.f32.mrb[0].mxu0
        %v2476 = vpop.f32.mrb[0].mxu0
        %v2477 = vpop.f32.mrb[0].mxu0
        %2478 = vdwg.mxu0
        %2480 = vrot.lane.b32.xlu0 %v1870, 120
        %v2481 = vpop.permute.xlu0 %2480
        %2490 = vrot.lane.b32.xlu0 %v2246, 120
        %v2491 = vpop.permute.xlu0 %2490
        %2492 = vrot.lane.b32.xlu0 %v2247, 120
        %v2493 = vpop.permute.xlu0 %2492
        %2494 = vrot.lane.b32.xlu0 %v2248, 120
        %v2495 = vpop.permute.xlu0 %2494
        %2496 = vrot.lane.b32.xlu0 %v2249, 120
        %v2497 = vpop.permute.xlu0 %2496
        %2498 = vrot.lane.b32.xlu0 %v2250, 120
        %v2499 = vpop.permute.xlu0 %2498
        %2500 = vrot.lane.b32.xlu0 %v2251, 120
        %v2501 = vpop.permute.xlu0 %2500
        %2502 = vrot.lane.b32.xlu0 %v2252, 120
        %v2503 = vpop.permute.xlu0 %2502
        %2504 = vrot.lane.b32.xlu0 %v2253, 120
        %v2505 = vpop.permute.xlu0 %2504
        %v2507 = vsel %vm788, %v2481, 0
        %v2510 = vsel %vm788, %v2491, 0
        %v2513 = vsel %vm788, %v2493, 0
        %v2516 = vsel %vm788, %v2495, 0
        %v2519 = vsel %vm788, %v2497, 0
        %v2522 = vsel %vm788, %v2499, 0
        %v2525 = vsel %vm788, %v2501, 0
        %v2528 = vsel %vm788, %v2503, 0
        %v2531 = vsel %vm788, %v2505, 0
        %2533 = vmatprep.subr.bf16.mxu0 0
        %2534 = vmatpush1.bf16.xpose.msra.mxu0 %v2510
        %2535 = vmatprep.subr.bf16.mxu0 0
        %2536 = vmatpush1.bf16.xpose.msra.mxu0 %v2513
        %2537 = vmatprep.subr.bf16.mxu0 0
        %2538 = vmatpush1.bf16.xpose.msra.mxu0 %v2516
        %2539 = vmatprep.subr.bf16.mxu0 0
        %2540 = vmatpush1.bf16.xpose.msra.mxu0 %v2519
        %2541 = vmatprep.subr.bf16.mxu0 0
        %2542 = vmatpush1.bf16.xpose.msra.mxu0 %v2522
        %2543 = vmatprep.subr.bf16.mxu0 0
        %2544 = vmatpush1.bf16.xpose.msra.mxu0 %v2525
        %2545 = vmatprep.subr.bf16.mxu0 0
        %2546 = vmatpush1.bf16.xpose.msra.mxu0 %v2528
        %2547 = vmatprep.subr.bf16.mxu0 0
        %2548 = vmatpush1.bf16.xpose.msra.mxu0 %v2531
        %2549 = vmatprep.subr.bf16.mxu0 0
        %2550 = vmatpush1.bf16.xpose.msra.mxu0 0
        %2551 = vmatprep.subr.bf16.mxu0 0
        %2552 = vmatpush1.bf16.xpose.msra.mxu0 0
        %2553 = vmatprep.subr.bf16.mxu0 0
        %2554 = vmatpush1.bf16.xpose.msra.mxu0 0
        %2555 = vmatprep.subr.bf16.mxu0 0
        %2556 = vmatpush1.bf16.xpose.msra.mxu0 0
        %2557 = vmatprep.subr.bf16.mxu0 0
        %2558 = vmatpush1.bf16.xpose.msra.mxu0 0
        %2559 = vmatprep.subr.bf16.mxu0 0
        %2560 = vmatpush1.bf16.xpose.msra.mxu0 0
        %2561 = vmatprep.subr.bf16.mxu0 0
        %2562 = vmatpush1.bf16.xpose.msra.mxu0 0
        %2563 = vmatprep.subr.bf16.mxu0 0
        %2564 = vmatpush1.bf16.xpose.msra.mxu0 0
        %2565 = vmatprep.mubr.bf16.mxu0 0
        %2566 = vmatmul.mubr.bf16.gmra.mrb[0].mxu0 %v2507
        %v2567 = vpop.f32.mrb[0].mxu0
        %v2568 = vadd.f32 %v2328, %v2567
        %v2569 = vpop.f32.mrb[0].mxu0
        %v2570 = vpop.f32.mrb[0].mxu0
        %v2571 = vpop.f32.mrb[0].mxu0
        %2572 = vdwg.mxu0
        %2573 = vmax.xlane.f32.xlu0 %v2568
        %v2574 = vpop.xlane.xlu0 %2573
        %v2575 = vsub.f32 %v2568, %v2574
        %v2576 = vmul.f32 %v2575, 1.442695
        %v2577 = vpow.pop %v2576
        %2578 = vadd.xlane.f32.xlu0 %v2577
        %v2579 = vpop.xlane.xlu0 %2578
        %v2580 = vrcp.pop %v2579
        %v2581 = vmul.f32 %v2577, %v2580
        %v2582 = vpack.c.bf16 %v2581, %v2581
        %2583 = vrot.lane.b32.xlu0 %v2302, 88
        %v2584 = vpop.permute.xlu0 %2583
        %2585 = vrot.lane.b32.xlu0 %v2303, 88
        %v2586 = vpop.permute.xlu0 %2585
        %2587 = vrot.lane.b32.xlu0 %v2304, 88
        %v2588 = vpop.permute.xlu0 %2587
        %2589 = vrot.lane.b32.xlu0 %v2305, 88
        %v2590 = vpop.permute.xlu0 %2589
        %2591 = vrot.lane.b32.xlu0 %v2306, 88
        %v2592 = vpop.permute.xlu0 %2591
        %2593 = vrot.lane.b32.xlu0 %v2307, 88
        %v2594 = vpop.permute.xlu0 %2593
        %2595 = vrot.lane.b32.xlu0 %v2308, 88
        %v2596 = vpop.permute.xlu0 %2595
        %2597 = vrot.lane.b32.xlu0 %v2309, 88
        %v2598 = vpop.permute.xlu0 %2597
        %2607 = vmatprep.subr.bf16.mxu0 0
        %2608 = vmatpush1.bf16.msra.mxu0 %v2584
        %2609 = vmatprep.subr.bf16.mxu0 0
        %2610 = vmatpush1.bf16.msra.mxu0 %v2586
        %2611 = vmatprep.subr.bf16.mxu0 0
        %2612 = vmatpush1.bf16.msra.mxu0 %v2588
        %2613 = vmatprep.subr.bf16.mxu0 0
        %2614 = vmatpush1.bf16.msra.mxu0 %v2590
        %2615 = vmatprep.subr.bf16.mxu0 0
        %2616 = vmatpush1.bf16.msra.mxu0 %v2592
        %2617 = vmatprep.subr.bf16.mxu0 0
        %2618 = vmatpush1.bf16.msra.mxu0 %v2594
        %2619 = vmatprep.subr.bf16.mxu0 0
        %2620 = vmatpush1.bf16.msra.mxu0 %v2596
        %2621 = vmatprep.subr.bf16.mxu0 0
        %2622 = vmatpush1.bf16.msra.mxu0 %v2598
        %2623 = vmatprep.subr.bf16.mxu0 0
        %2624 = vmatpush1.bf16.msra.mxu0 0
        %2625 = vmatprep.subr.bf16.mxu0 0
        %2626 = vmatpush1.bf16.msra.mxu0 0
        %2627 = vmatprep.subr.bf16.mxu0 0
        %2628 = vmatpush1.bf16.msra.mxu0 0
        %2629 = vmatprep.subr.bf16.mxu0 0
        %2630 = vmatpush1.bf16.msra.mxu0 0
        %2631 = vmatprep.subr.bf16.mxu0 0
        %2632 = vmatpush1.bf16.msra.mxu0 0
        %2633 = vmatprep.subr.bf16.mxu0 0
        %2634 = vmatpush1.bf16.msra.mxu0 0
        %2635 = vmatprep.subr.bf16.mxu0 0
        %2636 = vmatpush1.bf16.msra.mxu0 0
        %2637 = vmatprep.subr.bf16.mxu0 0
        %2638 = vmatpush1.bf16.msra.mxu0 0
        %2639 = vmatprep.mubr.bf16.mxu0 0
        %2640 = vmatmul.mubr.bf16.gmra.mrb[0].mxu0 %v2582
        %v2641 = vpop.f32.mrb[0].mxu0
        %v2642 = vadd.f32 0.0, %v2641
        %v2643 = vpop.f32.mrb[0].mxu0
        %v2644 = vpop.f32.mrb[0].mxu0
        %v2645 = vpop.f32.mrb[0].mxu0
        %2646 = vdwg.mxu0
        %2647 = vrot.lane.b32.xlu0 %v1870, 112
        %v2648 = vpop.permute.xlu0 %2647
        %2649 = vrot.lane.b32.xlu0 %v2246, 112
        %v2650 = vpop.permute.xlu0 %2649
        %2651 = vrot.lane.b32.xlu0 %v2247, 112
        %v2652 = vpop.permute.xlu0 %2651
        %2653 = vrot.lane.b32.xlu0 %v2248, 112
        %v2654 = vpop.permute.xlu0 %2653
        %2655 = vrot.lane.b32.xlu0 %v2249, 112
        %v2656 = vpop.permute.xlu0 %2655
        %2657 = vrot.lane.b32.xlu0 %v2250, 112
        %v2658 = vpop.permute.xlu0 %2657
        %2659 = vrot.lane.b32.xlu0 %v2251, 112
        %v2660 = vpop.permute.xlu0 %2659
        %2661 = vrot.lane.b32.xlu0 %v2252, 112
        %v2662 = vpop.permute.xlu0 %2661
        %2663 = vrot.lane.b32.xlu0 %v2253, 112
        %v2664 = vpop.permute.xlu0 %2663
        %v2666 = vsel %vm788, %v2648, 0
        %v2669 = vsel %vm788, %v2650, 0
        %v2672 = vsel %vm788, %v2652, 0
        %v2675 = vsel %vm788, %v2654, 0
        %v2678 = vsel %vm788, %v2656, 0
        %v2681 = vsel %vm788, %v2658, 0
        %v2684 = vsel %vm788, %v2660, 0
        %v2687 = vsel %vm788, %v2662, 0
        %v2690 = vsel %vm788, %v2664, 0
        %2692 = vmatprep.subr.bf16.mxu0 0
        %2693 = vmatpush1.bf16.xpose.msra.mxu0 %v2669
        %2694 = vmatprep.subr.bf16.mxu0 0
        %2695 = vmatpush1.bf16.xpose.msra.mxu0 %v2672
        %2696 = vmatprep.subr.bf16.mxu0 0
        %2697 = vmatpush1.bf16.xpose.msra.mxu0 %v2675
        %2698 = vmatprep.subr.bf16.mxu0 0
        %2699 = vmatpush1.bf16.xpose.msra.mxu0 %v2678
        %2700 = vmatprep.subr.bf16.mxu0 0
        %2701 = vmatpush1.bf16.xpose.msra.mxu0 %v2681
        %2702 = vmatprep.subr.bf16.mxu0 0
        %2703 = vmatpush1.bf16.xpose.msra.mxu0 %v2684
        %2704 = vmatprep.subr.bf16.mxu0 0
        %2705 = vmatpush1.bf16.xpose.msra.mxu0 %v2687
        %2706 = vmatprep.subr.bf16.mxu0 0
        %2707 = vmatpush1.bf16.xpose.msra.mxu0 %v2690
        %2708 = vmatprep.subr.bf16.mxu0 0
        %2709 = vmatpush1.bf16.xpose.msra.mxu0 0
        %2710 = vmatprep.subr.bf16.mxu0 0
        %2711 = vmatpush1.bf16.xpose.msra.mxu0 0
        %2712 = vmatprep.subr.bf16.mxu0 0
        %2713 = vmatpush1.bf16.xpose.msra.mxu0 0
        %2714 = vmatprep.subr.bf16.mxu0 0
        %2715 = vmatpush1.bf16.xpose.msra.mxu0 0
        %2716 = vmatprep.subr.bf16.mxu0 0
        %2717 = vmatpush1.bf16.xpose.msra.mxu0 0
        %2718 = vmatprep.subr.bf16.mxu0 0
        %2719 = vmatpush1.bf16.xpose.msra.mxu0 0
        %2720 = vmatprep.subr.bf16.mxu0 0
        %2721 = vmatpush1.bf16.xpose.msra.mxu0 0
        %2722 = vmatprep.subr.bf16.mxu0 0
        %2723 = vmatpush1.bf16.xpose.msra.mxu0 0
        %2724 = vmatprep.mubr.bf16.mxu0 0
        %2725 = vmatmul.mubr.bf16.gmra.mrb[0].mxu0 %v2666
        %v2726 = vpop.f32.mrb[0].mxu0
        %v2727 = vadd.f32 %v2328, %v2726
        %v2728 = vpop.f32.mrb[0].mxu0
        %v2729 = vpop.f32.mrb[0].mxu0
        %v2730 = vpop.f32.mrb[0].mxu0
        %2731 = vdwg.mxu0
        %2732 = vmax.xlane.f32.xlu0 %v2727
        %v2733 = vpop.xlane.xlu0 %2732
        %v2734 = vsub.f32 %v2727, %v2733
        %v2735 = vmul.f32 %v2734, 1.442695
        %v2736 = vpow.pop %v2735
        %2737 = vadd.xlane.f32.xlu0 %v2736
        %v2738 = vpop.xlane.xlu0 %2737
        %v2739 = vrcp.pop %v2738
        %v2740 = vmul.f32 %v2736, %v2739
        %v2741 = vpack.c.bf16 %v2740, %v2740
        %2742 = vrot.lane.b32.xlu0 %v2302, 80
        %v2743 = vpop.permute.xlu0 %2742
        %2744 = vrot.lane.b32.xlu0 %v2303, 80
        %v2745 = vpop.permute.xlu0 %2744
        %2746 = vrot.lane.b32.xlu0 %v2304, 80
        %v2747 = vpop.permute.xlu0 %2746
        %2748 = vrot.lane.b32.xlu0 %v2305, 80
        %v2749 = vpop.permute.xlu0 %2748
        %2750 = vrot.lane.b32.xlu0 %v2306, 80
        %v2751 = vpop.permute.xlu0 %2750
        %2752 = vrot.lane.b32.xlu0 %v2307, 80
        %v2753 = vpop.permute.xlu0 %2752
        %2754 = vrot.lane.b32.xlu0 %v2308, 80
        %v2755 = vpop.permute.xlu0 %2754
        %2756 = vrot.lane.b32.xlu0 %v2309, 80
        %v2757 = vpop.permute.xlu0 %2756
        %2766 = vmatprep.subr.bf16.mxu0 0
        %2767 = vmatpush1.bf16.msra.mxu0 %v2743
        %2768 = vmatprep.subr.bf16.mxu0 0
        %2769 = vmatpush1.bf16.msra.mxu0 %v2745
        %2770 = vmatprep.subr.bf16.mxu0 0
        %2771 = vmatpush1.bf16.msra.mxu0 %v2747
        %2772 = vmatprep.subr.bf16.mxu0 0
        %2773 = vmatpush1.bf16.msra.mxu0 %v2749
        %2774 = vmatprep.subr.bf16.mxu0 0
        %2775 = vmatpush1.bf16.msra.mxu0 %v2751
        %2776 = vmatprep.subr.bf16.mxu0 0
        %2777 = vmatpush1.bf16.msra.mxu0 %v2753
        %2778 = vmatprep.subr.bf16.mxu0 0
        %2779 = vmatpush1.bf16.msra.mxu0 %v2755
        %2780 = vmatprep.subr.bf16.mxu0 0
        %2781 = vmatpush1.bf16.msra.mxu0 %v2757
        %2782 = vmatprep.subr.bf16.mxu0 0
        %2783 = vmatpush1.bf16.msra.mxu0 0
        %2784 = vmatprep.subr.bf16.mxu0 0
        %2785 = vmatpush1.bf16.msra.mxu0 0
        %2786 = vmatprep.subr.bf16.mxu0 0
        %2787 = vmatpush1.bf16.msra.mxu0 0
        %2788 = vmatprep.subr.bf16.mxu0 0
        %2789 = vmatpush1.bf16.msra.mxu0 0
        %2790 = vmatprep.subr.bf16.mxu0 0
        %2791 = vmatpush1.bf16.msra.mxu0 0
        %2792 = vmatprep.subr.bf16.mxu0 0
        %2793 = vmatpush1.bf16.msra.mxu0 0
        %2794 = vmatprep.subr.bf16.mxu0 0
        %2795 = vmatpush1.bf16.msra.mxu0 0
        %2796 = vmatprep.subr.bf16.mxu0 0
        %2797 = vmatpush1.bf16.msra.mxu0 0
        %2798 = vmatprep.mubr.bf16.mxu0 0
        %2799 = vmatmul.mubr.bf16.gmra.mrb[0].mxu0 %v2741
        %v2800 = vpop.f32.mrb[0].mxu0
        %v2801 = vadd.f32 0.0, %v2800
        %v2802 = vpop.f32.mrb[0].mxu0
        %v2803 = vpop.f32.mrb[0].mxu0
        %v2804 = vpop.f32.mrb[0].mxu0
        %2805 = vdwg.mxu0
        %2806 = vrot.lane.b32.xlu0 %v1870, 104
        %v2807 = vpop.permute.xlu0 %2806
        %2808 = vrot.lane.b32.xlu0 %v2246, 104
        %v2809 = vpop.permute.xlu0 %2808
        %2810 = vrot.lane.b32.xlu0 %v2247, 104
        %v2811 = vpop.permute.xlu0 %2810
        %2812 = vrot.lane.b32.xlu0 %v2248, 104
        %v2813 = vpop.permute.xlu0 %2812
        %2814 = vrot.lane.b32.xlu0 %v2249, 104
        %v2815 = vpop.permute.xlu0 %2814
        %2816 = vrot.lane.b32.xlu0 %v2250, 104
        %v2817 = vpop.permute.xlu0 %2816
        %2818 = vrot.lane.b32.xlu0 %v2251, 104
        %v2819 = vpop.permute.xlu0 %2818
        %2820 = vrot.lane.b32.xlu0 %v2252, 104
        %v2821 = vpop.permute.xlu0 %2820
        %2822 = vrot.lane.b32.xlu0 %v2253, 104
        %v2823 = vpop.permute.xlu0 %2822
        %v2825 = vsel %vm788, %v2807, 0
        %v2828 = vsel %vm788, %v2809, 0
        %v2831 = vsel %vm788, %v2811, 0
        %v2834 = vsel %vm788, %v2813, 0
        %v2837 = vsel %vm788, %v2815, 0
        %v2840 = vsel %vm788, %v2817, 0
        %v2843 = vsel %vm788, %v2819, 0
        %v2846 = vsel %vm788, %v2821, 0
        %v2849 = vsel %vm788, %v2823, 0
        %2851 = vmatprep.subr.bf16.mxu0 0
        %2852 = vmatpush1.bf16.xpose.msra.mxu0 %v2828
        %2853 = vmatprep.subr.bf16.mxu0 0
        %2854 = vmatpush1.bf16.xpose.msra.mxu0 %v2831
        %2855 = vmatprep.subr.bf16.mxu0 0
        %2856 = vmatpush1.bf16.xpose.msra.mxu0 %v2834
        %2857 = vmatprep.subr.bf16.mxu0 0
        %2858 = vmatpush1.bf16.xpose.msra.mxu0 %v2837
        %2859 = vmatprep.subr.bf16.mxu0 0
        %2860 = vmatpush1.bf16.xpose.msra.mxu0 %v2840
        %2861 = vmatprep.subr.bf16.mxu0 0
        %2862 = vmatpush1.bf16.xpose.msra.mxu0 %v2843
        %2863 = vmatprep.subr.bf16.mxu0 0
        %2864 = vmatpush1.bf16.xpose.msra.mxu0 %v2846
        %2865 = vmatprep.subr.bf16.mxu0 0
        %2866 = vmatpush1.bf16.xpose.msra.mxu0 %v2849
        %2867 = vmatprep.subr.bf16.mxu0 0
        %2868 = vmatpush1.bf16.xpose.msra.mxu0 0
        %2869 = vmatprep.subr.bf16.mxu0 0
        %2870 = vmatpush1.bf16.xpose.msra.mxu0 0
        %2871 = vmatprep.subr.bf16.mxu0 0
        %2872 = vmatpush1.bf16.xpose.msra.mxu0 0
        %2873 = vmatprep.subr.bf16.mxu0 0
        %2874 = vmatpush1.bf16.xpose.msra.mxu0 0
        %2875 = vmatprep.subr.bf16.mxu0 0
        %2876 = vmatpush1.bf16.xpose.msra.mxu0 0
        %2877 = vmatprep.subr.bf16.mxu0 0
        %2878 = vmatpush1.bf16.xpose.msra.mxu0 0
        %2879 = vmatprep.subr.bf16.mxu0 0
        %2880 = vmatpush1.bf16.xpose.msra.mxu0 0
        %2881 = vmatprep.subr.bf16.mxu0 0
        %2882 = vmatpush1.bf16.xpose.msra.mxu0 0
        %2883 = vmatprep.mubr.bf16.mxu0 0
        %2884 = vmatmul.mubr.bf16.gmra.mrb[0].mxu0 %v2825
        %v2885 = vpop.f32.mrb[0].mxu0
        %v2886 = vadd.f32 %v2328, %v2885
        %v2887 = vpop.f32.mrb[0].mxu0
        %v2888 = vpop.f32.mrb[0].mxu0
        %v2889 = vpop.f32.mrb[0].mxu0
        %2890 = vdwg.mxu0
        %2891 = vmax.xlane.f32.xlu0 %v2886
        %v2892 = vpop.xlane.xlu0 %2891
        %v2893 = vsub.f32 %v2886, %v2892
        %v2894 = vmul.f32 %v2893, 1.442695
        %v2895 = vpow.pop %v2894
        %2896 = vadd.xlane.f32.xlu0 %v2895
        %v2897 = vpop.xlane.xlu0 %2896
        %v2898 = vrcp.pop %v2897
        %v2899 = vmul.f32 %v2895, %v2898
        %v2900 = vpack.c.bf16 %v2899, %v2899
        %2901 = vrot.lane.b32.xlu0 %v2302, 72
        %v2902 = vpop.permute.xlu0 %2901
        %2903 = vrot.lane.b32.xlu0 %v2303, 72
        %v2904 = vpop.permute.xlu0 %2903
        %2905 = vrot.lane.b32.xlu0 %v2304, 72
        %v2906 = vpop.permute.xlu0 %2905
        %2907 = vrot.lane.b32.xlu0 %v2305, 72
        %v2908 = vpop.permute.xlu0 %2907
        %2909 = vrot.lane.b32.xlu0 %v2306, 72
        %v2910 = vpop.permute.xlu0 %2909
        %2911 = vrot.lane.b32.xlu0 %v2307, 72
        %v2912 = vpop.permute.xlu0 %2911
        %2913 = vrot.lane.b32.xlu0 %v2308, 72
        %v2914 = vpop.permute.xlu0 %2913
        %2915 = vrot.lane.b32.xlu0 %v2309, 72
        %v2916 = vpop.permute.xlu0 %2915
        %2925 = vmatprep.subr.bf16.mxu0 0
        %2926 = vmatpush1.bf16.msra.mxu0 %v2902
        %2927 = vmatprep.subr.bf16.mxu0 0
        %2928 = vmatpush1.bf16.msra.mxu0 %v2904
        %2929 = vmatprep.subr.bf16.mxu0 0
        %2930 = vmatpush1.bf16.msra.mxu0 %v2906
        %2931 = vmatprep.subr.bf16.mxu0 0
        %2932 = vmatpush1.bf16.msra.mxu0 %v2908
        %2933 = vmatprep.subr.bf16.mxu0 0
        %2934 = vmatpush1.bf16.msra.mxu0 %v2910
        %2935 = vmatprep.subr.bf16.mxu0 0
        %2936 = vmatpush1.bf16.msra.mxu0 %v2912
        %2937 = vmatprep.subr.bf16.mxu0 0
        %2938 = vmatpush1.bf16.msra.mxu0 %v2914
        %2939 = vmatprep.subr.bf16.mxu0 0
        %2940 = vmatpush1.bf16.msra.mxu0 %v2916
        %2941 = vmatprep.subr.bf16.mxu0 0
        %2942 = vmatpush1.bf16.msra.mxu0 0
        %2943 = vmatprep.subr.bf16.mxu0 0
        %2944 = vmatpush1.bf16.msra.mxu0 0
        %2945 = vmatprep.subr.bf16.mxu0 0
        %2946 = vmatpush1.bf16.msra.mxu0 0
        %2947 = vmatprep.subr.bf16.mxu0 0
        %2948 = vmatpush1.bf16.msra.mxu0 0
        %2949 = vmatprep.subr.bf16.mxu0 0
        %2950 = vmatpush1.bf16.msra.mxu0 0
        %2951 = vmatprep.subr.bf16.mxu0 0
        %2952 = vmatpush1.bf16.msra.mxu0 0
        %2953 = vmatprep.subr.bf16.mxu0 0
        %2954 = vmatpush1.bf16.msra.mxu0 0
        %2955 = vmatprep.subr.bf16.mxu0 0
        %2956 = vmatpush1.bf16.msra.mxu0 0
        %2957 = vmatprep.mubr.bf16.mxu0 0
        %2958 = vmatmul.mubr.bf16.gmra.mrb[0].mxu0 %v2900
        %v2959 = vpop.f32.mrb[0].mxu0
        %v2960 = vadd.f32 0.0, %v2959
        %v2961 = vpop.f32.mrb[0].mxu0
        %v2962 = vpop.f32.mrb[0].mxu0
        %v2963 = vpop.f32.mrb[0].mxu0
        %2964 = vdwg.mxu0
        %2966 = vrot.lane.b32.xlu0 %v2642, 8
        %v2967 = vpop.permute.xlu0 %2966
        %2970 = vrot.lane.b32.xlu0 %v2801, 16
        %v2971 = vpop.permute.xlu0 %2970
        %2974 = vrot.lane.b32.xlu0 %v2960, 24
        %v2975 = vpop.permute.xlu0 %2974
        %v2977 = vsel %vm788, %v2474, %v2967
        %v2978 = vsel %vm1241, %v2977, %v2971
        %v2979 = vsel %vm1243, %v2978, %v2975
        %v2981 = vlaneseq
        %v2982 = vshrl.u32 %v2981, 7
        %v2983 = vsub.s32 0, %v2982
        %v2984 = vrot.slane %v684, %v2983
        %v2986 = vrot.slane %v1870, 4
        %v2988 = vsel %vm788, %v2986, 0
        %v2991 = vsel %vm788, %v2254, 0
        %v2994 = vsel %vm788, %v2255, 0
        %v2997 = vsel %vm788, %v2256, 0
        %v3000 = vsel %vm788, %v2257, 0
        %v3003 = vsel %vm788, %v2258, 0
        %v3006 = vsel %vm788, %v2259, 0
        %v3009 = vsel %vm788, %v2260, 0
        %v3012 = vsel %vm788, %v2261, 0
        %3014 = vmatprep.subr.bf16.mxu0 0
        %3015 = vmatpush1.bf16.xpose.msra.mxu0 %v2991
        %3016 = vmatprep.subr.bf16.mxu0 0
        %3017 = vmatpush1.bf16.xpose.msra.mxu0 %v2994
        %3018 = vmatprep.subr.bf16.mxu0 0
        %3019 = vmatpush1.bf16.xpose.msra.mxu0 %v2997
        %3020 = vmatprep.subr.bf16.mxu0 0
        %3021 = vmatpush1.bf16.xpose.msra.mxu0 %v3000
        %3022 = vmatprep.subr.bf16.mxu0 0
        %3023 = vmatpush1.bf16.xpose.msra.mxu0 %v3003
        %3024 = vmatprep.subr.bf16.mxu0 0
        %3025 = vmatpush1.bf16.xpose.msra.mxu0 %v3006
        %3026 = vmatprep.subr.bf16.mxu0 0
        %3027 = vmatpush1.bf16.xpose.msra.mxu0 %v3009
        %3028 = vmatprep.subr.bf16.mxu0 0
        %3029 = vmatpush1.bf16.xpose.msra.mxu0 %v3012
        %3030 = vmatprep.subr.bf16.mxu0 0
        %3031 = vmatpush1.bf16.xpose.msra.mxu0 0
        %3032 = vmatprep.subr.bf16.mxu0 0
        %3033 = vmatpush1.bf16.xpose.msra.mxu0 0
        %3034 = vmatprep.subr.bf16.mxu0 0
        %3035 = vmatpush1.bf16.xpose.msra.mxu0 0
        %3036 = vmatprep.subr.bf16.mxu0 0
        %3037 = vmatpush1.bf16.xpose.msra.mxu0 0
        %3038 = vmatprep.subr.bf16.mxu0 0
        %3039 = vmatpush1.bf16.xpose.msra.mxu0 0
        %3040 = vmatprep.subr.bf16.mxu0 0
        %3041 = vmatpush1.bf16.xpose.msra.mxu0 0
        %3042 = vmatprep.subr.bf16.mxu0 0
        %3043 = vmatpush1.bf16.xpose.msra.mxu0 0
        %3044 = vmatprep.subr.bf16.mxu0 0
        %3045 = vmatpush1.bf16.xpose.msra.mxu0 0
        %3046 = vmatprep.mubr.bf16.mxu0 0
        %3047 = vmatmul.mubr.bf16.gmra.mrb[0].mxu0 %v2988
        %v3048 = vpop.f32.mrb[0].mxu0
        %v3049 = vadd.f32 %v2984, %v3048
        %v3050 = vpop.f32.mrb[0].mxu0
        %v3051 = vpop.f32.mrb[0].mxu0
        %v3052 = vpop.f32.mrb[0].mxu0
        %3053 = vdwg.mxu0
        %3054 = vmax.xlane.f32.xlu0 %v3049
        %v3055 = vpop.xlane.xlu0 %3054
        %v3056 = vsub.f32 %v3049, %v3055
        %v3057 = vmul.f32 %v3056, 1.442695
        %v3058 = vpow.pop %v3057
        %3059 = vadd.xlane.f32.xlu0 %v3058
        %v3060 = vpop.xlane.xlu0 %3059
        %v3061 = vrcp.pop %v3060
        %v3062 = vmul.f32 %v3058, %v3061
        %v3063 = vpack.c.bf16 %v3062, %v3062
        %3072 = vrot.lane.b32.xlu0 %v2310, 96
        %v3073 = vpop.permute.xlu0 %3072
        %3074 = vrot.lane.b32.xlu0 %v2311, 96
        %v3075 = vpop.permute.xlu0 %3074
        %3076 = vrot.lane.b32.xlu0 %v2312, 96
        %v3077 = vpop.permute.xlu0 %3076
        %3078 = vrot.lane.b32.xlu0 %v2313, 96
        %v3079 = vpop.permute.xlu0 %3078
        %3080 = vrot.lane.b32.xlu0 %v2314, 96
        %v3081 = vpop.permute.xlu0 %3080
        %3082 = vrot.lane.b32.xlu0 %v2315, 96
        %v3083 = vpop.permute.xlu0 %3082
        %3084 = vrot.lane.b32.xlu0 %v2316, 96
        %v3085 = vpop.permute.xlu0 %3084
        %3086 = vrot.lane.b32.xlu0 %v2317, 96
        %v3087 = vpop.permute.xlu0 %3086
        %3096 = vmatprep.subr.bf16.mxu0 0
        %3097 = vmatpush1.bf16.msra.mxu0 %v3073
        %3098 = vmatprep.subr.bf16.mxu0 0
        %3099 = vmatpush1.bf16.msra.mxu0 %v3075
        %3100 = vmatprep.subr.bf16.mxu0 0
        %3101 = vmatpush1.bf16.msra.mxu0 %v3077
        %3102 = vmatprep.subr.bf16.mxu0 0
        %3103 = vmatpush1.bf16.msra.mxu0 %v3079
        %3104 = vmatprep.subr.bf16.mxu0 0
        %3105 = vmatpush1.bf16.msra.mxu0 %v3081
        %3106 = vmatprep.subr.bf16.mxu0 0
        %3107 = vmatpush1.bf16.msra.mxu0 %v3083
        %3108 = vmatprep.subr.bf16.mxu0 0
        %3109 = vmatpush1.bf16.msra.mxu0 %v3085
        %3110 = vmatprep.subr.bf16.mxu0 0
        %3111 = vmatpush1.bf16.msra.mxu0 %v3087
        %3112 = vmatprep.subr.bf16.mxu0 0
        %3113 = vmatpush1.bf16.msra.mxu0 0
        %3114 = vmatprep.subr.bf16.mxu0 0
        %3115 = vmatpush1.bf16.msra.mxu0 0
        %3116 = vmatprep.subr.bf16.mxu0 0
        %3117 = vmatpush1.bf16.msra.mxu0 0
        %3118 = vmatprep.subr.bf16.mxu0 0
        %3119 = vmatpush1.bf16.msra.mxu0 0
        %3120 = vmatprep.subr.bf16.mxu0 0
        %3121 = vmatpush1.bf16.msra.mxu0 0
        %3122 = vmatprep.subr.bf16.mxu0 0
        %3123 = vmatpush1.bf16.msra.mxu0 0
        %3124 = vmatprep.subr.bf16.mxu0 0
        %3125 = vmatpush1.bf16.msra.mxu0 0
        %3126 = vmatprep.subr.bf16.mxu0 0
        %3127 = vmatpush1.bf16.msra.mxu0 0
        %3128 = vmatprep.mubr.bf16.mxu0 0
        %3129 = vmatmul.mubr.bf16.gmra.mrb[0].mxu0 %v3063
        %v3130 = vpop.f32.mrb[0].mxu0
        %v3131 = vadd.f32 0.0, %v3130
        %v3132 = vpop.f32.mrb[0].mxu0
        %v3133 = vpop.f32.mrb[0].mxu0
        %v3134 = vpop.f32.mrb[0].mxu0
        %3135 = vdwg.mxu0
        %3136 = vrot.lane.b32.xlu0 %v2986, 120
        %v3137 = vpop.permute.xlu0 %3136
        %3146 = vrot.lane.b32.xlu0 %v2254, 120
        %v3147 = vpop.permute.xlu0 %3146
        %3148 = vrot.lane.b32.xlu0 %v2255, 120
        %v3149 = vpop.permute.xlu0 %3148
        %3150 = vrot.lane.b32.xlu0 %v2256, 120
        %v3151 = vpop.permute.xlu0 %3150
        %3152 = vrot.lane.b32.xlu0 %v2257, 120
        %v3153 = vpop.permute.xlu0 %3152
        %3154 = vrot.lane.b32.xlu0 %v2258, 120
        %v3155 = vpop.permute.xlu0 %3154
        %3156 = vrot.lane.b32.xlu0 %v2259, 120
        %v3157 = vpop.permute.xlu0 %3156
        %3158 = vrot.lane.b32.xlu0 %v2260, 120
        %v3159 = vpop.permute.xlu0 %3158
        %3160 = vrot.lane.b32.xlu0 %v2261, 120
        %v3161 = vpop.permute.xlu0 %3160
        %v3163 = vsel %vm788, %v3137, 0
        %v3166 = vsel %vm788, %v3147, 0
        %v3169 = vsel %vm788, %v3149, 0
        %v3172 = vsel %vm788, %v3151, 0
        %v3175 = vsel %vm788, %v3153, 0
        %v3178 = vsel %vm788, %v3155, 0
        %v3181 = vsel %vm788, %v3157, 0
        %v3184 = vsel %vm788, %v3159, 0
        %v3187 = vsel %vm788, %v3161, 0
        %3189 = vmatprep.subr.bf16.mxu0 0
        %3190 = vmatpush1.bf16.xpose.msra.mxu0 %v3166
        %3191 = vmatprep.subr.bf16.mxu0 0
        %3192 = vmatpush1.bf16.xpose.msra.mxu0 %v3169
        %3193 = vmatprep.subr.bf16.mxu0 0
        %3194 = vmatpush1.bf16.xpose.msra.mxu0 %v3172
        %3195 = vmatprep.subr.bf16.mxu0 0
        %3196 = vmatpush1.bf16.xpose.msra.mxu0 %v3175
        %3197 = vmatprep.subr.bf16.mxu0 0
        %3198 = vmatpush1.bf16.xpose.msra.mxu0 %v3178
        %3199 = vmatprep.subr.bf16.mxu0 0
        %3200 = vmatpush1.bf16.xpose.msra.mxu0 %v3181
        %3201 = vmatprep.subr.bf16.mxu0 0
        %3202 = vmatpush1.bf16.xpose.msra.mxu0 %v3184
        %3203 = vmatprep.subr.bf16.mxu0 0
        %3204 = vmatpush1.bf16.xpose.msra.mxu0 %v3187
        %3205 = vmatprep.subr.bf16.mxu0 0
        %3206 = vmatpush1.bf16.xpose.msra.mxu0 0
        %3207 = vmatprep.subr.bf16.mxu0 0
        %3208 = vmatpush1.bf16.xpose.msra.mxu0 0
        %3209 = vmatprep.subr.bf16.mxu0 0
        %3210 = vmatpush1.bf16.xpose.msra.mxu0 0
        %3211 = vmatprep.subr.bf16.mxu0 0
        %3212 = vmatpush1.bf16.xpose.msra.mxu0 0
        %3213 = vmatprep.subr.bf16.mxu0 0
        %3214 = vmatpush1.bf16.xpose.msra.mxu0 0
        %3215 = vmatprep.subr.bf16.mxu0 0
        %3216 = vmatpush1.bf16.xpose.msra.mxu0 0
        %3217 = vmatprep.subr.bf16.mxu0 0
        %3218 = vmatpush1.bf16.xpose.msra.mxu0 0
        %3219 = vmatprep.subr.bf16.mxu0 0
        %3220 = vmatpush1.bf16.xpose.msra.mxu0 0
        %3221 = vmatprep.mubr.bf16.mxu0 0
        %3222 = vmatmul.mubr.bf16.gmra.mrb[0].mxu0 %v3163
        %v3223 = vpop.f32.mrb[0].mxu0
        %v3224 = vadd.f32 %v2984, %v3223
        %v3225 = vpop.f32.mrb[0].mxu0
        %v3226 = vpop.f32.mrb[0].mxu0
        %v3227 = vpop.f32.mrb[0].mxu0
        %3228 = vdwg.mxu0
        %3229 = vmax.xlane.f32.xlu0 %v3224
        %v3230 = vpop.xlane.xlu0 %3229
        %v3231 = vsub.f32 %v3224, %v3230
        %v3232 = vmul.f32 %v3231, 1.442695
        %v3233 = vpow.pop %v3232
        %3234 = vadd.xlane.f32.xlu0 %v3233
        %v3235 = vpop.xlane.xlu0 %3234
        %v3236 = vrcp.pop %v3235
        %v3237 = vmul.f32 %v3233, %v3236
        %v3238 = vpack.c.bf16 %v3237, %v3237
        %3239 = vrot.lane.b32.xlu0 %v2310, 88
        %v3240 = vpop.permute.xlu0 %3239
        %3241 = vrot.lane.b32.xlu0 %v2311, 88
        %v3242 = vpop.permute.xlu0 %3241
        %3243 = vrot.lane.b32.xlu0 %v2312, 88
        %v3244 = vpop.permute.xlu0 %3243
        %3245 = vrot.lane.b32.xlu0 %v2313, 88
        %v3246 = vpop.permute.xlu0 %3245
        %3247 = vrot.lane.b32.xlu0 %v2314, 88
        %v3248 = vpop.permute.xlu0 %3247
        %3249 = vrot.lane.b32.xlu0 %v2315, 88
        %v3250 = vpop.permute.xlu0 %3249
        %3251 = vrot.lane.b32.xlu0 %v2316, 88
        %v3252 = vpop.permute.xlu0 %3251
        %3253 = vrot.lane.b32.xlu0 %v2317, 88
        %v3254 = vpop.permute.xlu0 %3253
        %3263 = vmatprep.subr.bf16.mxu0 0
        %3264 = vmatpush1.bf16.msra.mxu0 %v3240
        %3265 = vmatprep.subr.bf16.mxu0 0
        %3266 = vmatpush1.bf16.msra.mxu0 %v3242
        %3267 = vmatprep.subr.bf16.mxu0 0
        %3268 = vmatpush1.bf16.msra.mxu0 %v3244
        %3269 = vmatprep.subr.bf16.mxu0 0
        %3270 = vmatpush1.bf16.msra.mxu0 %v3246
        %3271 = vmatprep.subr.bf16.mxu0 0
        %3272 = vmatpush1.bf16.msra.mxu0 %v3248
        %3273 = vmatprep.subr.bf16.mxu0 0
        %3274 = vmatpush1.bf16.msra.mxu0 %v3250
        %3275 = vmatprep.subr.bf16.mxu0 0
        %3276 = vmatpush1.bf16.msra.mxu0 %v3252
        %3277 = vmatprep.subr.bf16.mxu0 0
        %3278 = vmatpush1.bf16.msra.mxu0 %v3254
        %3279 = vmatprep.subr.bf16.mxu0 0
        %3280 = vmatpush1.bf16.msra.mxu0 0
        %3281 = vmatprep.subr.bf16.mxu0 0
        %3282 = vmatpush1.bf16.msra.mxu0 0
        %3283 = vmatprep.subr.bf16.mxu0 0
        %3284 = vmatpush1.bf16.msra.mxu0 0
        %3285 = vmatprep.subr.bf16.mxu0 0
        %3286 = vmatpush1.bf16.msra.mxu0 0
        %3287 = vmatprep.subr.bf16.mxu0 0
        %3288 = vmatpush1.bf16.msra.mxu0 0
        %3289 = vmatprep.subr.bf16.mxu0 0
        %3290 = vmatpush1.bf16.msra.mxu0 0
        %3291 = vmatprep.subr.bf16.mxu0 0
        %3292 = vmatpush1.bf16.msra.mxu0 0
        %3293 = vmatprep.subr.bf16.mxu0 0
        %3294 = vmatpush1.bf16.msra.mxu0 0
        %3295 = vmatprep.mubr.bf16.mxu0 0
        %3296 = vmatmul.mubr.bf16.gmra.mrb[0].mxu0 %v3238
        %v3297 = vpop.f32.mrb[0].mxu0
        %v3298 = vadd.f32 0.0, %v3297
        %v3299 = vpop.f32.mrb[0].mxu0
        %v3300 = vpop.f32.mrb[0].mxu0
        %v3301 = vpop.f32.mrb[0].mxu0
        %3302 = vdwg.mxu0
        %3303 = vrot.lane.b32.xlu0 %v2986, 112
        %v3304 = vpop.permute.xlu0 %3303
        %3305 = vrot.lane.b32.xlu0 %v2254, 112
        %v3306 = vpop.permute.xlu0 %3305
        %3307 = vrot.lane.b32.xlu0 %v2255, 112
        %v3308 = vpop.permute.xlu0 %3307
        %3309 = vrot.lane.b32.xlu0 %v2256, 112
        %v3310 = vpop.permute.xlu0 %3309
        %3311 = vrot.lane.b32.xlu0 %v2257, 112
        %v3312 = vpop.permute.xlu0 %3311
        %3313 = vrot.lane.b32.xlu0 %v2258, 112
        %v3314 = vpop.permute.xlu0 %3313
        %3315 = vrot.lane.b32.xlu0 %v2259, 112
        %v3316 = vpop.permute.xlu0 %3315
        %3317 = vrot.lane.b32.xlu0 %v2260, 112
        %v3318 = vpop.permute.xlu0 %3317
        %3319 = vrot.lane.b32.xlu0 %v2261, 112
        %v3320 = vpop.permute.xlu0 %3319
        %v3322 = vsel %vm788, %v3304, 0
        %v3325 = vsel %vm788, %v3306, 0
        %v3328 = vsel %vm788, %v3308, 0
        %v3331 = vsel %vm788, %v3310, 0
        %v3334 = vsel %vm788, %v3312, 0
        %v3337 = vsel %vm788, %v3314, 0
        %v3340 = vsel %vm788, %v3316, 0
        %v3343 = vsel %vm788, %v3318, 0
        %v3346 = vsel %vm788, %v3320, 0
        %3348 = vmatprep.subr.bf16.mxu0 0
        %3349 = vmatpush1.bf16.xpose.msra.mxu0 %v3325
        %3350 = vmatprep.subr.bf16.mxu0 0
        %3351 = vmatpush1.bf16.xpose.msra.mxu0 %v3328
        %3352 = vmatprep.subr.bf16.mxu0 0
        %3353 = vmatpush1.bf16.xpose.msra.mxu0 %v3331
        %3354 = vmatprep.subr.bf16.mxu0 0
        %3355 = vmatpush1.bf16.xpose.msra.mxu0 %v3334
        %3356 = vmatprep.subr.bf16.mxu0 0
        %3357 = vmatpush1.bf16.xpose.msra.mxu0 %v3337
        %3358 = vmatprep.subr.bf16.mxu0 0
        %3359 = vmatpush1.bf16.xpose.msra.mxu0 %v3340
        %3360 = vmatprep.subr.bf16.mxu0 0
        %3361 = vmatpush1.bf16.xpose.msra.mxu0 %v3343
        %3362 = vmatprep.subr.bf16.mxu0 0
        %3363 = vmatpush1.bf16.xpose.msra.mxu0 %v3346
        %3364 = vmatprep.subr.bf16.mxu0 0
        %3365 = vmatpush1.bf16.xpose.msra.mxu0 0
        %3366 = vmatprep.subr.bf16.mxu0 0
        %3367 = vmatpush1.bf16.xpose.msra.mxu0 0
        %3368 = vmatprep.subr.bf16.mxu0 0
        %3369 = vmatpush1.bf16.xpose.msra.mxu0 0
        %3370 = vmatprep.subr.bf16.mxu0 0
        %3371 = vmatpush1.bf16.xpose.msra.mxu0 0
        %3372 = vmatprep.subr.bf16.mxu0 0
        %3373 = vmatpush1.bf16.xpose.msra.mxu0 0
        %3374 = vmatprep.subr.bf16.mxu0 0
        %3375 = vmatpush1.bf16.xpose.msra.mxu0 0
        %3376 = vmatprep.subr.bf16.mxu0 0
        %3377 = vmatpush1.bf16.xpose.msra.mxu0 0
        %3378 = vmatprep.subr.bf16.mxu0 0
        %3379 = vmatpush1.bf16.xpose.msra.mxu0 0
        %3380 = vmatprep.mubr.bf16.mxu0 0
        %3381 = vmatmul.mubr.bf16.gmra.mrb[0].mxu0 %v3322
        %v3382 = vpop.f32.mrb[0].mxu0
        %v3383 = vadd.f32 %v2984, %v3382
        %v3384 = vpop.f32.mrb[0].mxu0
        %v3385 = vpop.f32.mrb[0].mxu0
        %v3386 = vpop.f32.mrb[0].mxu0
        %3387 = vdwg.mxu0
        %3388 = vmax.xlane.f32.xlu0 %v3383
        %v3389 = vpop.xlane.xlu0 %3388
        %v3390 = vsub.f32 %v3383, %v3389
        %v3391 = vmul.f32 %v3390, 1.442695
        %v3392 = vpow.pop %v3391
        %3393 = vadd.xlane.f32.xlu0 %v3392
        %v3394 = vpop.xlane.xlu0 %3393
        %v3395 = vrcp.pop %v3394
        %v3396 = vmul.f32 %v3392, %v3395
        %v3397 = vpack.c.bf16 %v3396, %v3396
        %3398 = vrot.lane.b32.xlu0 %v2310, 80
        %v3399 = vpop.permute.xlu0 %3398
        %3400 = vrot.lane.b32.xlu0 %v2311, 80
        %v3401 = vpop.permute.xlu0 %3400
        %3402 = vrot.lane.b32.xlu0 %v2312, 80
        %v3403 = vpop.permute.xlu0 %3402
        %3404 = vrot.lane.b32.xlu0 %v2313, 80
        %v3405 = vpop.permute.xlu0 %3404
        %3406 = vrot.lane.b32.xlu0 %v2314, 80
        %v3407 = vpop.permute.xlu0 %3406
        %3408 = vrot.lane.b32.xlu0 %v2315, 80
        %v3409 = vpop.permute.xlu0 %3408
        %3410 = vrot.lane.b32.xlu0 %v2316, 80
        %v3411 = vpop.permute.xlu0 %3410
        %3412 = vrot.lane.b32.xlu0 %v2317, 80
        %v3413 = vpop.permute.xlu0 %3412
        %3422 = vmatprep.subr.bf16.mxu0 0
        %3423 = vmatpush1.bf16.msra.mxu0 %v3399
        %3424 = vmatprep.subr.bf16.mxu0 0
        %3425 = vmatpush1.bf16.msra.mxu0 %v3401
        %3426 = vmatprep.subr.bf16.mxu0 0
        %3427 = vmatpush1.bf16.msra.mxu0 %v3403
        %3428 = vmatprep.subr.bf16.mxu0 0
        %3429 = vmatpush1.bf16.msra.mxu0 %v3405
        %3430 = vmatprep.subr.bf16.mxu0 0
        %3431 = vmatpush1.bf16.msra.mxu0 %v3407
        %3432 = vmatprep.subr.bf16.mxu0 0
        %3433 = vmatpush1.bf16.msra.mxu0 %v3409
        %3434 = vmatprep.subr.bf16.mxu0 0
        %3435 = vmatpush1.bf16.msra.mxu0 %v3411
        %3436 = vmatprep.subr.bf16.mxu0 0
        %3437 = vmatpush1.bf16.msra.mxu0 %v3413
        %3438 = vmatprep.subr.bf16.mxu0 0
        %3439 = vmatpush1.bf16.msra.mxu0 0
        %3440 = vmatprep.subr.bf16.mxu0 0
        %3441 = vmatpush1.bf16.msra.mxu0 0
        %3442 = vmatprep.subr.bf16.mxu0 0
        %3443 = vmatpush1.bf16.msra.mxu0 0
        %3444 = vmatprep.subr.bf16.mxu0 0
        %3445 = vmatpush1.bf16.msra.mxu0 0
        %3446 = vmatprep.subr.bf16.mxu0 0
        %3447 = vmatpush1.bf16.msra.mxu0 0
        %3448 = vmatprep.subr.bf16.mxu0 0
        %3449 = vmatpush1.bf16.msra.mxu0 0
        %3450 = vmatprep.subr.bf16.mxu0 0
        %3451 = vmatpush1.bf16.msra.mxu0 0
        %3452 = vmatprep.subr.bf16.mxu0 0
        %3453 = vmatpush1.bf16.msra.mxu0 0
        %3454 = vmatprep.mubr.bf16.mxu0 0
        %3455 = vmatmul.mubr.bf16.gmra.mrb[0].mxu0 %v3397
        %v3456 = vpop.f32.mrb[0].mxu0
        %v3457 = vadd.f32 0.0, %v3456
        %v3458 = vpop.f32.mrb[0].mxu0
        %v3459 = vpop.f32.mrb[0].mxu0
        %v3460 = vpop.f32.mrb[0].mxu0
        %3461 = vdwg.mxu0
        %3462 = vrot.lane.b32.xlu0 %v2986, 104
        %v3463 = vpop.permute.xlu0 %3462
        %3464 = vrot.lane.b32.xlu0 %v2254, 104
        %v3465 = vpop.permute.xlu0 %3464
        %3466 = vrot.lane.b32.xlu0 %v2255, 104
        %v3467 = vpop.permute.xlu0 %3466
        %3468 = vrot.lane.b32.xlu0 %v2256, 104
        %v3469 = vpop.permute.xlu0 %3468
        %3470 = vrot.lane.b32.xlu0 %v2257, 104
        %v3471 = vpop.permute.xlu0 %3470
        %3472 = vrot.lane.b32.xlu0 %v2258, 104
        %v3473 = vpop.permute.xlu0 %3472
        %3474 = vrot.lane.b32.xlu0 %v2259, 104
        %v3475 = vpop.permute.xlu0 %3474
        %3476 = vrot.lane.b32.xlu0 %v2260, 104
        %v3477 = vpop.permute.xlu0 %3476
        %3478 = vrot.lane.b32.xlu0 %v2261, 104
        %v3479 = vpop.permute.xlu0 %3478
        %v3481 = vsel %vm788, %v3463, 0
        %v3484 = vsel %vm788, %v3465, 0
        %v3487 = vsel %vm788, %v3467, 0
        %v3490 = vsel %vm788, %v3469, 0
        %v3493 = vsel %vm788, %v3471, 0
        %v3496 = vsel %vm788, %v3473, 0
        %v3499 = vsel %vm788, %v3475, 0
        %v3502 = vsel %vm788, %v3477, 0
        %v3505 = vsel %vm788, %v3479, 0
        %3507 = vmatprep.subr.bf16.mxu0 0
        %3508 = vmatpush1.bf16.xpose.msra.mxu0 %v3484
        %3509 = vmatprep.subr.bf16.mxu0 0
        %3510 = vmatpush1.bf16.xpose.msra.mxu0 %v3487
        %3511 = vmatprep.subr.bf16.mxu0 0
        %3512 = vmatpush1.bf16.xpose.msra.mxu0 %v3490
        %3513 = vmatprep.subr.bf16.mxu0 0
        %3514 = vmatpush1.bf16.xpose.msra.mxu0 %v3493
        %3515 = vmatprep.subr.bf16.mxu0 0
        %3516 = vmatpush1.bf16.xpose.msra.mxu0 %v3496
        %3517 = vmatprep.subr.bf16.mxu0 0
        %3518 = vmatpush1.bf16.xpose.msra.mxu0 %v3499
        %3519 = vmatprep.subr.bf16.mxu0 0
        %3520 = vmatpush1.bf16.xpose.msra.mxu0 %v3502
        %3521 = vmatprep.subr.bf16.mxu0 0
        %3522 = vmatpush1.bf16.xpose.msra.mxu0 %v3505
        %3523 = vmatprep.subr.bf16.mxu0 0
        %3524 = vmatpush1.bf16.xpose.msra.mxu0 0
        %3525 = vmatprep.subr.bf16.mxu0 0
        %3526 = vmatpush1.bf16.xpose.msra.mxu0 0
        %3527 = vmatprep.subr.bf16.mxu0 0
        %3528 = vmatpush1.bf16.xpose.msra.mxu0 0
        %3529 = vmatprep.subr.bf16.mxu0 0
        %3530 = vmatpush1.bf16.xpose.msra.mxu0 0
        %3531 = vmatprep.subr.bf16.mxu0 0
        %3532 = vmatpush1.bf16.xpose.msra.mxu0 0
        %3533 = vmatprep.subr.bf16.mxu0 0
        %3534 = vmatpush1.bf16.xpose.msra.mxu0 0
        %3535 = vmatprep.subr.bf16.mxu0 0
        %3536 = vmatpush1.bf16.xpose.msra.mxu0 0
        %3537 = vmatprep.subr.bf16.mxu0 0
        %3538 = vmatpush1.bf16.xpose.msra.mxu0 0
        %3539 = vmatprep.mubr.bf16.mxu0 0
        %3540 = vmatmul.mubr.bf16.gmra.mrb[0].mxu0 %v3481
        %v3541 = vpop.f32.mrb[0].mxu0
        %v3542 = vadd.f32 %v2984, %v3541
        %v3543 = vpop.f32.mrb[0].mxu0
        %v3544 = vpop.f32.mrb[0].mxu0
        %v3545 = vpop.f32.mrb[0].mxu0
        %3546 = vdwg.mxu0
        %3547 = vmax.xlane.f32.xlu0 %v3542
        %v3548 = vpop.xlane.xlu0 %3547
        %v3549 = vsub.f32 %v3542, %v3548
        %v3550 = vmul.f32 %v3549, 1.442695
        %v3551 = vpow.pop %v3550
        %3552 = vadd.xlane.f32.xlu0 %v3551
        %v3553 = vpop.xlane.xlu0 %3552
        %v3554 = vrcp.pop %v3553
        %v3555 = vmul.f32 %v3551, %v3554
        %v3556 = vpack.c.bf16 %v3555, %v3555
        %3557 = vrot.lane.b32.xlu0 %v2310, 72
        %v3558 = vpop.permute.xlu0 %3557
        %3559 = vrot.lane.b32.xlu0 %v2311, 72
        %v3560 = vpop.permute.xlu0 %3559
        %3561 = vrot.lane.b32.xlu0 %v2312, 72
        %v3562 = vpop.permute.xlu0 %3561
        %3563 = vrot.lane.b32.xlu0 %v2313, 72
        %v3564 = vpop.permute.xlu0 %3563
        %3565 = vrot.lane.b32.xlu0 %v2314, 72
        %v3566 = vpop.permute.xlu0 %3565
        %3567 = vrot.lane.b32.xlu0 %v2315, 72
        %v3568 = vpop.permute.xlu0 %3567
        %3569 = vrot.lane.b32.xlu0 %v2316, 72
        %v3570 = vpop.permute.xlu0 %3569
        %3571 = vrot.lane.b32.xlu0 %v2317, 72
        %v3572 = vpop.permute.xlu0 %3571
        %3581 = vmatprep.subr.bf16.mxu0 0
        %3582 = vmatpush1.bf16.msra.mxu0 %v3558
        %3583 = vmatprep.subr.bf16.mxu0 0
        %3584 = vmatpush1.bf16.msra.mxu0 %v3560
        %3585 = vmatprep.subr.bf16.mxu0 0
        %3586 = vmatpush1.bf16.msra.mxu0 %v3562
        %3587 = vmatprep.subr.bf16.mxu0 0
        %3588 = vmatpush1.bf16.msra.mxu0 %v3564
        %3589 = vmatprep.subr.bf16.mxu0 0
        %3590 = vmatpush1.bf16.msra.mxu0 %v3566
        %3591 = vmatprep.subr.bf16.mxu0 0
        %3592 = vmatpush1.bf16.msra.mxu0 %v3568
        %3593 = vmatprep.subr.bf16.mxu0 0
        %3594 = vmatpush1.bf16.msra.mxu0 %v3570
        %3595 = vmatprep.subr.bf16.mxu0 0
        %3596 = vmatpush1.bf16.msra.mxu0 %v3572
        %3597 = vmatprep.subr.bf16.mxu0 0
        %3598 = vmatpush1.bf16.msra.mxu0 0
        %3599 = vmatprep.subr.bf16.mxu0 0
        %3600 = vmatpush1.bf16.msra.mxu0 0
        %3601 = vmatprep.subr.bf16.mxu0 0
        %3602 = vmatpush1.bf16.msra.mxu0 0
        %3603 = vmatprep.subr.bf16.mxu0 0
        %3604 = vmatpush1.bf16.msra.mxu0 0
        %3605 = vmatprep.subr.bf16.mxu0 0
        %3606 = vmatpush1.bf16.msra.mxu0 0
        %3607 = vmatprep.subr.bf16.mxu0 0
        %3608 = vmatpush1.bf16.msra.mxu0 0
        %3609 = vmatprep.subr.bf16.mxu0 0
        %3610 = vmatpush1.bf16.msra.mxu0 0
        %3611 = vmatprep.subr.bf16.mxu0 0
        %3612 = vmatpush1.bf16.msra.mxu0 0
        %3613 = vmatprep.mubr.bf16.mxu0 0
        %3614 = vmatmul.mubr.bf16.gmra.mrb[0].mxu0 %v3556
        %v3615 = vpop.f32.mrb[0].mxu0
        %v3616 = vadd.f32 0.0, %v3615
        %v3617 = vpop.f32.mrb[0].mxu0
        %v3618 = vpop.f32.mrb[0].mxu0
        %v3619 = vpop.f32.mrb[0].mxu0
        %3620 = vdwg.mxu0
        %3622 = vrot.lane.b32.xlu0 %v3298, 8
        %v3623 = vpop.permute.xlu0 %3622
        %3626 = vrot.lane.b32.xlu0 %v3457, 16
        %v3627 = vpop.permute.xlu0 %3626
        %3630 = vrot.lane.b32.xlu0 %v3616, 24
        %v3631 = vpop.permute.xlu0 %3630
        %v3633 = vsel %vm788, %v3131, %v3623
        %v3634 = vsel %vm1241, %v3633, %v3627
        %v3635 = vsel %vm1243, %v3634, %v3631
        %v3636 = vpack.c.bf16 %v3635, %v2979
        %v3637 = vlaneseq
        %v3638 = vshrl.u32 %v3637, 7
        %v3639 = vsub.s32 7, %v3638
        %v3640 = vrot.slane %v681, %v3639
        %v3645 = vunpack.c.l.b16 %v2320
        %v3646 = vunpack.c.l.b16 %v2321
        %v3647 = vunpack.c.l.b16 %v2322
        %v3648 = vunpack.c.l.b16 %v2323
        %v3649 = vpack.c.b16 %v3646, %v3645
        %v3650 = vpack.c.b16 %v3648, %v3647
        %v3654 = vsel %vm705, %v3636, 0
        %3656 = vmatprep.subr.bf16.mxu0 0
        %3657 = vmatpush1.bf16.msra.mxu0 %v3649
        %3658 = vmatprep.subr.bf16.mxu0 0
        %3659 = vmatpush1.bf16.msra.mxu0 %v3650
        %3660 = vmatprep.subr.bf16.mxu0 0
        %3661 = vmatpush1.bf16.msra.mxu0 0
        %3662 = vmatprep.subr.bf16.mxu0 0
        %3663 = vmatpush1.bf16.msra.mxu0 0
        %3664 = vmatprep.subr.bf16.mxu0 0
        %3665 = vmatpush1.bf16.msra.mxu0 0
        %3666 = vmatprep.subr.bf16.mxu0 0
        %3667 = vmatpush1.bf16.msra.mxu0 0
        %3668 = vmatprep.subr.bf16.mxu0 0
        %3669 = vmatpush1.bf16.msra.mxu0 0
        %3670 = vmatprep.subr.bf16.mxu0 0
        %3671 = vmatpush1.bf16.msra.mxu0 0
        %3672 = vmatprep.subr.bf16.mxu0 0
        %3673 = vmatpush1.bf16.msra.mxu0 0
        %3674 = vmatprep.subr.bf16.mxu0 0
        %3675 = vmatpush1.bf16.msra.mxu0 0
        %3676 = vmatprep.subr.bf16.mxu0 0
        %3677 = vmatpush1.bf16.msra.mxu0 0
        %3678 = vmatprep.subr.bf16.mxu0 0
        %3679 = vmatpush1.bf16.msra.mxu0 0
        %3680 = vmatprep.subr.bf16.mxu0 0
        %3681 = vmatpush1.bf16.msra.mxu0 0
        %3682 = vmatprep.subr.bf16.mxu0 0
        %3683 = vmatpush1.bf16.msra.mxu0 0
        %3684 = vmatprep.subr.bf16.mxu0 0
        %3685 = vmatpush1.bf16.msra.mxu0 0
        %3686 = vmatprep.subr.bf16.mxu0 0
        %3687 = vmatpush1.bf16.msra.mxu0 0
        %3688 = vmatprep.mubr.bf16.mxu0 0
        %3689 = vmatmul.mubr.bf16.gmra.mrb[0].mxu0 %v3654
        %v3690 = vpop.f32.mrb[0].mxu0
        %v3691 = vadd.f32 %v3640, %v3690
        %v3692 = vpop.f32.mrb[0].mxu0
        %v3693 = vpop.f32.mrb[0].mxu0
        %v3694 = vadd.f32 %v3640, %v3693
        %v3695 = vpop.f32.mrb[0].mxu0
        %3696 = vdwg.mxu0
        %v3697 = vadd.f32 %v1801, %v3691
        %v3698 = vadd.f32 %v1802, %v3694
        %v3699 = vsel %vm705, %v3697, 0.0
        %3700 = vadd.xlane.f32.xlu0 %v3699
        %v3701 = vpop.xlane.xlu0 %3700
        %v3702 = vsel %vm705, %v3698, 0.0
        %3703 = vadd.xlane.f32.xlu0 %v3702
        %v3704 = vpop.xlane.xlu0 %3703
        %v3705 = vmul.f32 %v3701, %v1770
        %v3706 = vmul.f32 %v3704, %v1770
        %v3707 = vsub.f32 %v3697, %v3705
        %v3708 = vsub.f32 %v3698, %v3706
        %v3709 = vmul.f32 %v3707, %v3707
        %v3710 = vmul.f32 %v3708, %v3708
        %v3711 = vsel %vm705, %v3709, 0.0
        %3712 = vadd.xlane.f32.xlu0 %v3711
        %v3713 = vpop.xlane.xlu0 %3712
        %v3714 = vsel %vm705, %v3710, 0.0
        %3715 = vadd.xlane.f32.xlu0 %v3714
        %v3716 = vpop.xlane.xlu0 %3715
        %v3717 = vmul.f32 %v3713, %v1770
        %v3718 = vmul.f32 %v3716, %v1770
        %v3719 = vadd.f32 %v3717, 1e-05
        %v3720 = vadd.f32 %v3718, 1e-05
        %v3721 = vrsqrt.pop %v3719
        %v3722 = vrsqrt.pop %v3720
        %v3723 = vmul.f32 %v3707, %v3721
        %v3724 = vmul.f32 %v3708, %v3722
        %v3725 = vlaneseq
        %v3726 = vshrl.u32 %v3725, 7
        %v3727 = vsub.s32 3, %v3726
        %v3728 = vrot.slane %v682, %v3727
        %v3729 = vmul.f32 %v3723, %v3728
        %v3730 = vmul.f32 %v3724, %v3728
        %v3731 = vlaneseq
        %v3732 = vshrl.u32 %v3731, 7
        %v3733 = vsub.s32 4, %v3732
        %v3734 = vrot.slane %v682, %v3733
        %v3735 = vadd.f32 %v3729, %v3734
        %v3736 = vadd.f32 %v3730, %v3734
        %v3737 = vpack.c.bf16 %v3736, %v3735
        %s3738 = smul.addr %s686, 4
        %s3739 = scalar_lea.vmem [#allocation17], %s3738
        %v3740 = vld [vmem:[%s3739] sm:$0xf]
        %v3741 = vld [vmem:[%s3739 + $0x4] sm:$0xf]
        %v3742 = vld [vmem:[%s3739 + $0x8] sm:$0xf]
        %v3743 = vld [vmem:[%s3739 + $0xc] sm:$0xf]
        %s3744 = scalar_lea.vmem [#allocation21], %s41
        %v3745 = vld [vmem:[%s3744] sm:$0x1]
        %v3747 = vlaneseq
        %v3748 = vshrl.u32 %v3747, 7
        %v3749 = vsub.s32 0, %v3748
        %v3750 = vrot.slane %v3745, %v3749
        %v3756 = vunpack.c.l.b16 %v3740
        %v3757 = vunpack.c.l.b16 %v3741
        %v3758 = vunpack.c.l.b16 %v3742
        %v3759 = vunpack.c.l.b16 %v3743
        %v3760 = vpack.c.b16 %v3757, %v3756
        %v3761 = vpack.c.b16 %v3759, %v3758
        %v3765 = vsel %vm705, %v3737, 0
        %3767 = vmatprep.subr.bf16.mxu0 0
        %3768 = vmatpush1.bf16.msra.mxu0 %v3760
        %3769 = vmatprep.subr.bf16.mxu0 0
        %3770 = vmatpush1.bf16.msra.mxu0 %v3761
        %3771 = vmatprep.subr.bf16.mxu0 0
        %3772 = vmatpush1.bf16.msra.mxu0 0
        %3773 = vmatprep.subr.bf16.mxu0 0
        %3774 = vmatpush1.bf16.msra.mxu0 0
        %3775 = vmatprep.subr.bf16.mxu0 0
        %3776 = vmatpush1.bf16.msra.mxu0 0
        %3777 = vmatprep.subr.bf16.mxu0 0
        %3778 = vmatpush1.bf16.msra.mxu0 0
        %3779 = vmatprep.subr.bf16.mxu0 0
        %3780 = vmatpush1.bf16.msra.mxu0 0
        %3781 = vmatprep.subr.bf16.mxu0 0
        %3782 = vmatpush1.bf16.msra.mxu0 0
        %3783 = vmatprep.subr.bf16.mxu0 0
        %3784 = vmatpush1.bf16.msra.mxu0 0
        %3785 = vmatprep.subr.bf16.mxu0 0
        %3786 = vmatpush1.bf16.msra.mxu0 0
        %3787 = vmatprep.subr.bf16.mxu0 0
        %3788 = vmatpush1.bf16.msra.mxu0 0
        %3789 = vmatprep.subr.bf16.mxu0 0
        %3790 = vmatpush1.bf16.msra.mxu0 0
        %3791 = vmatprep.subr.bf16.mxu0 0
        %3792 = vmatpush1.bf16.msra.mxu0 0
        %3793 = vmatprep.subr.bf16.mxu0 0
        %3794 = vmatpush1.bf16.msra.mxu0 0
        %3795 = vmatprep.subr.bf16.mxu0 0
        %3796 = vmatpush1.bf16.msra.mxu0 0
        %3797 = vmatprep.subr.bf16.mxu0 0
        %3798 = vmatpush1.bf16.msra.mxu0 0
        %3799 = vmatprep.mubr.bf16.mxu0 0
        %3800 = vmatmul.mubr.bf16.gmra.mrb[0].mxu0 %v3765
        %v3801 = vpop.f32.mrb[0].mxu0
        %v3802 = vadd.f32 %v3750, %v3801
        %v3803 = vpop.f32.mrb[0].mxu0
        %v3804 = vpop.f32.mrb[0].mxu0
        %v3805 = vadd.f32 %v3750, %v3804
        %v3806 = vpop.f32.mrb[0].mxu0
        %3807 = vdwg.mxu0
        %v3808 = vmax.f32 %v3802, 0.0
        %v3809 = vmax.f32 %v3805, 0.0
        %v3810 = vpack.c.bf16 %v3809, %v3808
        %s3811 = smul.addr %s679, 4
        %s3812 = scalar_lea.vmem [#allocation18], %s3811
        %v3813 = vld [vmem:[%s3812] sm:$0xf]
        %v3814 = vld [vmem:[%s3812 + $0x4] sm:$0xf]
        %v3815 = vld [vmem:[%s3812 + $0x8] sm:$0xf]
        %v3816 = vld [vmem:[%s3812 + $0xc] sm:$0xf]
        %v3817 = vld [vmem:[%s3812 + $0x10] sm:$0xf]
        %v3818 = vld [vmem:[%s3812 + $0x14] sm:$0xf]
        %v3819 = vld [vmem:[%s3812 + $0x18] sm:$0xf]
        %v3820 = vld [vmem:[%s3812 + $0x1c] sm:$0xf]
        %v3821 = vld [vmem:[%s3812 + $0x20] sm:$0xf]
        %v3822 = vld [vmem:[%s3812 + $0x24] sm:$0xf]
        %v3823 = vld [vmem:[%s3812 + $0x28] sm:$0xf]
        %v3824 = vld [vmem:[%s3812 + $0x2c] sm:$0xf]
        %v3825 = vld [vmem:[%s3812 + $0x30] sm:$0xf]
        %v3826 = vld [vmem:[%s3812 + $0x34] sm:$0xf]
        %v3827 = vld [vmem:[%s3812 + $0x38] sm:$0xf]
        %v3828 = vld [vmem:[%s3812 + $0x3c] sm:$0xf]
        %v3829 = vlaneseq
        %v3830 = vshrl.u32 %v3829, 7
        %v3831 = vsub.s32 0, %v3830
        %v3832 = vrot.slane %v682, %v3831
        %v3849 = vunpack.c.l.b16 %v3813
        %v3850 = vunpack.c.l.b16 %v3814
        %v3851 = vunpack.c.l.b16 %v3815
        %v3852 = vunpack.c.l.b16 %v3816
        %v3853 = vunpack.c.l.b16 %v3817
        %v3854 = vunpack.c.l.b16 %v3818
        %v3855 = vunpack.c.l.b16 %v3819
        %v3856 = vunpack.c.l.b16 %v3820
        %v3857 = vunpack.c.l.b16 %v3821
        %v3858 = vunpack.c.l.b16 %v3822
        %v3859 = vunpack.c.l.b16 %v3823
        %v3860 = vunpack.c.l.b16 %v3824
        %v3861 = vunpack.c.l.b16 %v3825
        %v3862 = vunpack.c.l.b16 %v3826
        %v3863 = vunpack.c.l.b16 %v3827
        %v3864 = vunpack.c.l.b16 %v3828
        %v3865 = vpack.c.b16 %v3850, %v3849
        %v3866 = vpack.c.b16 %v3852, %v3851
        %v3867 = vpack.c.b16 %v3854, %v3853
        %v3868 = vpack.c.b16 %v3856, %v3855
        %v3869 = vpack.c.b16 %v3858, %v3857
        %v3870 = vpack.c.b16 %v3860, %v3859
        %v3871 = vpack.c.b16 %v3862, %v3861
        %v3872 = vpack.c.b16 %v3864, %v3863
        %3881 = vmatprep.subr.bf16.mxu0 0
        %3882 = vmatpush1.bf16.msra.mxu0 %v3865
        %3883 = vmatprep.subr.bf16.mxu0 0
        %3884 = vmatpush1.bf16.msra.mxu0 %v3866
        %3885 = vmatprep.subr.bf16.mxu0 0
        %3886 = vmatpush1.bf16.msra.mxu0 %v3867
        %3887 = vmatprep.subr.bf16.mxu0 0
        %3888 = vmatpush1.bf16.msra.mxu0 %v3868
        %3889 = vmatprep.subr.bf16.mxu0 0
        %3890 = vmatpush1.bf16.msra.mxu0 %v3869
        %3891 = vmatprep.subr.bf16.mxu0 0
        %3892 = vmatpush1.bf16.msra.mxu0 %v3870
        %3893 = vmatprep.subr.bf16.mxu0 0
        %3894 = vmatpush1.bf16.msra.mxu0 %v3871
        %3895 = vmatprep.subr.bf16.mxu0 0
        %3896 = vmatpush1.bf16.msra.mxu0 %v3872
        %3897 = vmatprep.subr.bf16.mxu0 0
        %3898 = vmatpush1.bf16.msra.mxu0 0
        %3899 = vmatprep.subr.bf16.mxu0 0
        %3900 = vmatpush1.bf16.msra.mxu0 0
        %3901 = vmatprep.subr.bf16.mxu0 0
        %3902 = vmatpush1.bf16.msra.mxu0 0
        %3903 = vmatprep.subr.bf16.mxu0 0
        %3904 = vmatpush1.bf16.msra.mxu0 0
        %3905 = vmatprep.subr.bf16.mxu0 0
        %3906 = vmatpush1.bf16.msra.mxu0 0
        %3907 = vmatprep.subr.bf16.mxu0 0
        %3908 = vmatpush1.bf16.msra.mxu0 0
        %3909 = vmatprep.subr.bf16.mxu0 0
        %3910 = vmatpush1.bf16.msra.mxu0 0
        %3911 = vmatprep.subr.bf16.mxu0 0
        %3912 = vmatpush1.bf16.msra.mxu0 0
        %3913 = vmatprep.mubr.bf16.mxu0 0
        %3914 = vmatmul.mubr.bf16.gmra.mrb[0].mxu0 %v3810
        %v3915 = vpop.f32.mrb[0].mxu0
        %v3916 = vadd.f32 %v3832, %v3915
        %v3917 = vpop.f32.mrb[0].mxu0
        %v3918 = vpop.f32.mrb[0].mxu0
        %v3919 = vadd.f32 %v3832, %v3918
        %v3920 = vpop.f32.mrb[0].mxu0
        %3921 = vdwg.mxu0
        %v3922 = vadd.f32 %v3735, %v3916
        %v3923 = vadd.f32 %v3736, %v3919
        %v3924 = vsel %vm705, %v3922, 0.0
        %3925 = vadd.xlane.f32.xlu0 %v3924
        %v3926 = vpop.xlane.xlu0 %3925
        %v3927 = vsel %vm705, %v3923, 0.0
        %3928 = vadd.xlane.f32.xlu0 %v3927
        %v3929 = vpop.xlane.xlu0 %3928
        %v3930 = vmul.f32 %v3926, %v1770
        %v3931 = vmul.f32 %v3929, %v1770
        %v3932 = vsub.f32 %v3922, %v3930
        %v3933 = vsub.f32 %v3923, %v3931
        %v3934 = vmul.f32 %v3932, %v3932
        %v3935 = vmul.f32 %v3933, %v3933
        %v3936 = vsel %vm705, %v3934, 0.0
        %3937 = vadd.xlane.f32.xlu0 %v3936
        %v3938 = vpop.xlane.xlu0 %3937
        %v3939 = vsel %vm705, %v3935, 0.0
        %3940 = vadd.xlane.f32.xlu0 %v3939
        %v3941 = vpop.xlane.xlu0 %3940
        %v3942 = vmul.f32 %v3938, %v1770
        %v3943 = vmul.f32 %v3941, %v1770
        %v3944 = vadd.f32 %v3942, 1e-05
        %v3945 = vadd.f32 %v3943, 1e-05
        %v3946 = vrsqrt.pop %v3944
        %v3947 = vrsqrt.pop %v3945
        %v3948 = vmul.f32 %v3932, %v3946
        %v3949 = vmul.f32 %v3933, %v3947
        %v3950 = vlaneseq
        %v3951 = vshrl.u32 %v3950, 7
        %v3952 = vsub.s32 5, %v3951
        %v3953 = vrot.slane %v682, %v3952
        %v3954 = vmul.f32 %v3948, %v3953
        %v3955 = vmul.f32 %v3949, %v3953
        %v3956 = vlaneseq
        %v3957 = vshrl.u32 %v3956, 7
        %v3958 = vsub.s32 6, %v3957
        %v3959 = vrot.slane %v682, %v3958
        %v3960 = vadd.f32 %v3954, %v3959
        %v3961 = vadd.f32 %v3955, %v3959
        %3962 = vst.msk [vmem:[#allocation2] sm:$0xff] %vm705, %v3960
        %3963 = vst.msk [vmem:[#allocation2 + $0x8] sm:$0xff] %vm705, %v3961
        %p3964 = scmp.eq.s32.totalorder %s41, 1
        // Predicated region
        $region129: #{stacked_decoder_pallas.1} parent=71 // pred_check
          %p3965 = pneg %p3964
        $region130: #{stacked_decoder_pallas.1} parent=71 // pred_check_branch
          %3967 = sbr.rel (%p3965) target = $region132
        $region131: #{stacked_decoder_pallas.1} parent=71 // pred_region
          %v3968 = vld [vmem:[#allocation23] sm:$0x3]
          %v3969 = vsel %vm705, %v3960, 0.0
          %3970 = vadd.xlane.f32.xlu0 %v3969
          %v3971 = vpop.xlane.xlu0 %3970
          %v3972 = vsel %vm705, %v3961, 0.0
          %3973 = vadd.xlane.f32.xlu0 %v3972
          %v3974 = vpop.xlane.xlu0 %3973
          %v3975 = vmul.f32 %v3971, %v1770
          %v3976 = vmul.f32 %v3974, %v1770
          %v3977 = vsub.f32 %v3960, %v3975
          %v3978 = vsub.f32 %v3961, %v3976
          %v3979 = vmul.f32 %v3977, %v3977
          %v3980 = vmul.f32 %v3978, %v3978
          %v3981 = vsel %vm705, %v3979, 0.0
          %3982 = vadd.xlane.f32.xlu0 %v3981
          %v3983 = vpop.xlane.xlu0 %3982
          %v3984 = vsel %vm705, %v3980, 0.0
          %3985 = vadd.xlane.f32.xlu0 %v3984
          %v3986 = vpop.xlane.xlu0 %3985
          %v3987 = vmul.f32 %v3983, %v1770
          %v3988 = vmul.f32 %v3986, %v1770
          %v3989 = vadd.f32 %v3987, 1e-05
          %v3990 = vadd.f32 %v3988, 1e-05
          %v3991 = vrsqrt.pop %v3989
          %v3992 = vrsqrt.pop %v3990
          %v3993 = vmul.f32 %v3977, %v3991
          %v3994 = vmul.f32 %v3978, %v3992
          %v3995 = vlaneseq
          %v3996 = vshrl.u32 %v3995, 7
          %v3997 = vsub.s32 0, %v3996
          %v3998 = vrot.slane %v3968, %v3997
          %v3999 = vmul.f32 %v3993, %v3998
          %v4000 = vmul.f32 %v3994, %v3998
          %v4001 = vlaneseq
          %v4002 = vshrl.u32 %v4001, 7
          %v4003 = vsub.s32 1, %v4002
          %v4004 = vrot.slane %v3968, %v4003
          %v4005 = vadd.f32 %v3999, %v4004
          %v4006 = vadd.f32 %v4000, %v4004
          %4007 = vst.msk [vmem:[%s664] sm:$0xff] %vm705, %v4005
          %4008 = vst.msk [vmem:[%s664 + $0x8] sm:$0xff] %vm705, %v4006
        $region132: #{stacked_decoder_pallas.1} parent=71 // pred_fallthru
          _
        %s4009 = sand.u32 %s339, 1
        %s4010 = scalar_lea.sflag [#allocation5], %s4009
        %s4011 = sand.u32 %s339, 1
        %s4012 = smul.addr %s4011, 16
        %s4013 = scalar_lea.vmem [#allocation24], %s4012
        // Predicated region
        $region133: #{stacked_decoder_pallas.1} parent=71 // pred_check
          %p4014 = pneg %p349
        $region134: #{stacked_decoder_pallas.1} parent=71 // pred_check_branch
          %4016 = sbr.rel (%p4014) target = $region136
        $region135: #{stacked_decoder_pallas.1} parent=71 // pred_region
          %s4017 = smul.u32 2, %s40
          %s4019 = ssub.s32 256, 256
          %4020 = vsyncadd %s4010, %s4019
          %s4021 = smul.addr %s4017, 128
          %s4022 = scalar_lea.hbm %s13, %s4021
          %s4023 = sshll.u32 %s4013, 4
          %s4024 = int_to_ptr.vmem [resolvable:$true] %s4023
          %4029 = dma.vmem_to_hbm [thread:$0]  %s4024, 256, %s4022, %s4010, 128, 128, 8
        $region136: #{stacked_decoder_pallas.1} parent=71 // pred_fallthru
          _
      $region72: #{stacked_decoder_pallas.1} parent=5 // pred_fallthru
        _
      %p4030 = scmp.le.s32.totalorder 2, %s31
      // Predicated region
      $region137: #{stacked_decoder_pallas.1} parent=5 // pred_check
        %p4031 = pneg %p4030
      $region138: #{stacked_decoder_pallas.1} parent=5 // pred_check_branch
        %4033 = sbr.rel (%p4031) target = $region140
      $region139: #{stacked_decoder_pallas.1} parent=5 // pred_region
        %s4034 = ssub.s32 %s31, 2
        // Predicated region
        $region141: #{stacked_decoder_pallas.1} parent=139 // pred_check
          %p4035 = pneg %p355
        $region142: #{stacked_decoder_pallas.1} parent=139 // pred_check_branch
          %4037 = sbr.rel (%p4035) target = $region144
        $region143: #{stacked_decoder_pallas.1} parent=139 // pred_region
          %s4038 = sand.u32 %s340, 1
          %s4039 = scalar_lea.sflag [#allocation5], %s4038
          %s4040 = sand.u32 %s340, 1
          %s4041 = smul.addr %s4040, 16
          %s4042 = scalar_lea.vmem [#allocation24], %s4041
          %4043 = dma.done %s4039, 256
        $region144: #{stacked_decoder_pallas.1} parent=139 // pred_fallthru
          _
      $region140: #{stacked_decoder_pallas.1} parent=5 // pred_fallthru
        _
    $region6: #{stacked_decoder_pallas.1} parent=1 // loop_footer
      %s35 = sadd.s32 1, %s31
    $region7: #{stacked_decoder_pallas.1} parent=1 // loop_footer_branch
      %30 = sbr.rel target = $region3
    $region8: #{stacked_decoder_pallas.1} parent=1 // loop_exit
      _
    %4044 = vsyncpa [#allocation4], 1
    %s4045 = scalar_lea.sflag [#allocation4], 1
    %4046 = vsyncpa %s4045, 1
    %4047 = vsyncpa [#allocation7], 1
    %s4048 = scalar_lea.sflag [#allocation7], 1
    %4049 = vsyncpa %s4048, 1
    %4050 = vsyncpa [#allocation10], 1
    %4051 = vsyncpa [#allocation13], 1
    %4052 = vsyncpa [#allocation16], 1
    %4053 = vsyncpa [#allocation19], 1
    %4054 = vsyncpa [#allocation22], 1
    %4055 = vsyncpa [#allocation5], 1
    %s4056 = scalar_lea.sflag [#allocation5], 1
    %4057 = vsyncpa %s4056, 1

</llo_original>
